<compile_context>
chip_gen: v7x
topology: tpu7x:2x2x1
jax: 0.10.0
libtpu: 0.0.40
codegen_flags: <defaults>
</compile_context>

<pallas_src>
import math
from functools import partial

import jax
import jax.numpy as jnp
from jax import lax
from jax.experimental import pallas as pl
from jax.experimental.pallas import tpu as pltpu

D_MODEL = 64
N_HEAD = 2
HEAD_DIM = D_MODEL // N_HEAD
DIM_FF = 2048          # nn.TransformerEncoderLayer default dim_feedforward
NUM_LAYERS = 2
LN_EPS = 1e-5
PAD_CLASSES = 128      # lane-dense logits slab; sliced to num_classes in the wrapper
# TODO(synk): dropout (p=0.1, train mode) has no deterministic equivalent; identity (eval semantics).


# ----------------------------- in-kernel helpers ----------------------------------------
def _mm(x, w):
    """Lane-dense (in, out) matmul: bf16 inputs, f32 accumulation on the MXU."""
    return lax.dot_general(x.astype(jnp.bfloat16), w.astype(jnp.bfloat16),
                           (((1,), (0,)), ((), ())),
                           preferred_element_type=jnp.float32)


def _layernorm(x, w, b):
    # single-pass statistics: mean and mean-of-squares are independent reductions
    mu = jnp.mean(x, axis=-1, keepdims=True)
    ms = jnp.mean(x * x, axis=-1, keepdims=True)
    var = jnp.maximum(ms - mu * mu, 0.0)          # biased var (PyTorch LayerNorm)
    return (x - mu) * lax.rsqrt(var + LN_EPS) * w + b


# ----------------------------- fused full-forward kernel --------------------------------
def _fused_forward_kernel(x_ref, emb_w_ref, emb_b_ref,
                          wqkv_ref, bqkv_ref, wo_ref,
                          ff1_w_ref, ff2_w_ref, ffvecs_ref, vecs_ref,
                          fc_w_ref, fc_b_ref, o_ref):
    # ----- embedding: (B, input_dim) -> (B, 64) -----
    h = _mm(x_ref[...], emb_w_ref[...]) + emb_b_ref[...]

    # Dequantize the lane-packed ff2 slab ONCE (reused by both layers).  int8 -> f32 is exact.
    w2_all = ff2_w_ref[...].astype(jnp.float32).astype(jnp.bfloat16)    # (2048, 128)
    wo_all = wo_ref[...]                                                # (64, 128) bf16

    for li in range(NUM_LAYERS):                        # static, unrolled layer loop
        wqkv = wqkv_ref[li]                             # (64, 192)  bf16 (q cols pre-scaled)
        bqkv = bqkv_ref[li:li + 1, :]                   # (1, 192)   f32  (q part pre-scaled)
        w1 = ff1_w_ref[li].astype(jnp.float32).astype(jnp.bfloat16)     # (64, 2048)
        b1 = ffvecs_ref[2 * li:2 * li + 1, :]           # (1, 2048) ff1 bias
        s1 = ffvecs_ref[2 * li + 1:2 * li + 2, :]       # (1, 2048) ff1 per-col dequant scale
        vl = vecs_ref[li]                               # (7, 64)    f32
        bo, ln1w, ln1b = vl[0:1], vl[1:2], vl[2:3]
        b2, ln2w, ln2b, s2 = vl[3:4], vl[4:5], vl[5:6], vl[6:7]

        # ----- self-attention over the B rows (seq_len = B, batch = 1) -----
        qkv = _mm(h, wqkv) + bqkv                       # (B, 192) f32
        q = qkv[:, 0:D_MODEL]
        k = qkv[:, D_MODEL:2 * D_MODEL]
        v = qkv[:, 2 * D_MODEL:3 * D_MODEL]
        head_outs = []
        for hh in range(N_HEAD):                        # static 2-head loop
            lo, hi = hh * HEAD_DIM, (hh + 1) * HEAD_DIM
            s = lax.dot_general(q[:, lo:hi], k[:, lo:hi], (((1,), (1,)), ((), ())),
                                preferred_element_type=jnp.float32)     # (B, B)
            s = s - jnp.max(s, axis=-1, keepdims=True)
            p = jnp.exp(s)
            p = p / jnp.sum(p, axis=-1, keepdims=True)                  # exact softmax
            head_outs.append(
                lax.dot_general(p, v[:, lo:hi], (((1,), (0,)), ((), ())),
                                preferred_element_type=jnp.float32))    # (B, HEAD_DIM)
        attn_cat = jnp.concatenate(head_outs, axis=-1)                  # (B, 64)
        attn_full = _mm(attn_cat, wo_all)                               # (B, 128), both layers
        attn = attn_full[:, li * D_MODEL:(li + 1) * D_MODEL] + bo

        # ----- post-norm residual blocks (norm_first=False default) -----
        y = _layernorm(h + attn, ln1w, ln1b)
        h1 = jnp.maximum(_mm(y, w1) * s1 + b1, 0.0)     # (B, 2048) relu, int8-dequant scale
        h2_full = _mm(h1, w2_all)                       # (B, 128), both layers' columns
        h2 = h2_full[:, li * D_MODEL:(li + 1) * D_MODEL] * s2 + b2
        h = _layernorm(y + h2, ln2w, ln2b)

    # ----- final classifier into a lane-dense (B, 128) slab -----
    o_ref[...] = (_mm(h, fc_w_ref[...]) + fc_b_ref[...]).astype(o_ref.dtype)


# ----------------------------- parameter init (PyTorch layout) & packing ----------------
def init_params(key, input_dim, model_dim, num_classes):
    def nrm(k, shape, scale=0.02):
        return scale * jax.random.normal(k, shape, dtype=jnp.float32)

    keys = jax.random.split(key, 2 + NUM_LAYERS)
    params = {
        "emb_w": nrm(keys[0], (model_dim, input_dim)),
        "emb_b": jnp.zeros((model_dim,), jnp.float32),
        "fc_w": nrm(keys[1], (num_classes, model_dim)),
        "fc_b": jnp.zeros((num_classes,), jnp.float32),
        "layers": [],
    }
    for li in range(NUM_LAYERS):
        lk = jax.random.split(keys[2 + li], 4)
        params["layers"].append({
            "in_proj_w": nrm(lk[0], (3 * model_dim, model_dim)),
            "in_proj_b": jnp.zeros((3 * model_dim,), jnp.float32),
            "out_proj_w": nrm(lk[1], (model_dim, model_dim)),
            "out_proj_b": jnp.zeros((model_dim,), jnp.float32),
            "ln1_w": jnp.ones((model_dim,), jnp.float32),
            "ln1_b": jnp.zeros((model_dim,), jnp.float32),
            "ff1_w": nrm(lk[2], (DIM_FF, model_dim)),
            "ff1_b": jnp.zeros((DIM_FF,), jnp.float32),
            "ff2_w": nrm(lk[3], (model_dim, DIM_FF)),
            "ff2_b": jnp.zeros((model_dim,), jnp.float32),
            "ln2_w": jnp.ones((model_dim,), jnp.float32),
            "ln2_b": jnp.zeros((model_dim,), jnp.float32),
        })
    return params


def _quantize_per_col(w):
    """Symmetric int8 quantization of a lane-dense (in, out) weight, per output column."""
    amax = jnp.max(jnp.abs(w), axis=0, keepdims=True)           # (1, out)
    scale = jnp.maximum(amax, 1e-12) / 127.0
    q = jnp.clip(jnp.round(w / scale), -127, 127).astype(jnp.int8)
    return q, scale.astype(jnp.float32)


def pack_params(p):
    """One-time: transpose to lane-dense (in, out), fold attention scale into q, quantize FFN
    weights to int8, and pack small vectors to avoid (8,128) tile padding in HBM."""
    layers = p["layers"]
    attn_scale = 1.0 / (HEAD_DIM ** 0.5)
    qkv_scale = jnp.concatenate([jnp.full((D_MODEL,), attn_scale, jnp.float32),
                                 jnp.ones((2 * D_MODEL,), jnp.float32)])

    wqkv = jnp.stack([jnp.asarray(l["in_proj_w"].T * qkv_scale[None, :], jnp.bfloat16)
                      for l in layers])                                          # (L, 64, 192)
    bqkv = jnp.stack([l["in_proj_b"] * qkv_scale for l in layers])               # (L, 192) f32
    wo_both = jnp.asarray(
        jnp.concatenate([l["out_proj_w"].T for l in layers], axis=1), jnp.bfloat16)  # (64, 128)

    ff1_q, ffvecs_rows, ff2_cols, ff2_scales = [], [], [], []
    for l in layers:
        q1, s1 = _quantize_per_col(l["ff1_w"].T)          # (64, 2048), (1, 2048)
        q2, s2 = _quantize_per_col(l["ff2_w"].T)          # (2048, 64), (1, 64)
        ff1_q.append(q1)
        ffvecs_rows.append(l["ff1_b"])                    # ff1 bias
        ffvecs_rows.append(s1[0])                         # ff1 dequant scale
        ff2_cols.append(q2)
        ff2_scales.append(s2[0])
    ff1_w = jnp.stack(ff1_q)                              # (L, 64, 2048) int8, no padding
    ff2_w = jnp.concatenate(ff2_cols, axis=1)             # (2048, L*64) int8, lane-packed
    ffvecs = jnp.stack(ffvecs_rows).astype(jnp.float32)   # (2L, 2048) f32

    vecs = jnp.stack([jnp.stack([l["out_proj_b"], l["ln1_w"], l["ln1_b"],
                                 l["ff2_b"], l["ln2_w"], l["ln2_b"],
                                 ff2_scales[li]])
                      for li, l in enumerate(layers)])    # (L, 7, 64) f32

    nc = p["fc_w"].shape[0]
    fc_w = jnp.zeros((D_MODEL, PAD_CLASSES), jnp.float32).at[:, :nc].set(p["fc_w"].T)
    fc_b = jnp.zeros((1, PAD_CLASSES), jnp.float32).at[0, :nc].set(p["fc_b"])
    return {
        "emb_w": jnp.asarray(p["emb_w"].T, jnp.bfloat16),                # (in, 64) bf16
        "emb_b": p["emb_b"].reshape(1, -1).astype(jnp.float32),          # (1, 64)
        "wqkv": wqkv, "bqkv": bqkv, "wo": wo_both,
        "ff1_w": ff1_w, "ff2_w": ff2_w, "ffvecs": ffvecs, "vecs": vecs,
        "fc_w": fc_w.astype(jnp.bfloat16),                               # (64, 128) bf16
        "fc_b": fc_b,                                                    # (1, 128)
    }


# ----------------------------- wrapper ---------------------------------------------------
def _cost_estimate(batch, input_dim, args, out_bytes):
    B, D, F, H, hd = batch, D_MODEL, DIM_FF, N_HEAD, HEAD_DIM
    flops = 2 * B * input_dim * D
    flops += NUM_LAYERS * (2 * B * D * 3 * D                     # qkv proj
                           + H * 4 * B * B * hd                  # scores + p@v
                           + 2 * B * D * 2 * D                   # out proj (double width)
                           + 2 * B * D * F                       # ff1
                           + 2 * B * F * 2 * D)                  # ff2 (double width)
    flops += 2 * B * D * PAD_CLASSES
    transcendentals = NUM_LAYERS * (H * B * B + 2 * B)           # exp + rsqrt
    bytes_accessed = out_bytes + sum(
        math.prod(a.shape) * a.dtype.itemsize for a in args)
    return pl.CostEstimate(flops=flops, transcendentals=transcendentals,
                           bytes_accessed=bytes_accessed)


@partial(jax.jit, static_argnums=(2,))
def forward(packed, x, num_classes):
    B = x.shape[0]
    args = (x, packed["emb_w"], packed["emb_b"],
            packed["wqkv"], packed["bqkv"], packed["wo"],
            packed["ff1_w"], packed["ff2_w"], packed["ffvecs"], packed["vecs"],
            packed["fc_w"], packed["fc_b"])
    out_padded = pl.pallas_call(
        _fused_forward_kernel,
        out_shape=jax.ShapeDtypeStruct((B, PAD_CLASSES), jnp.float32),
        in_specs=[pl.BlockSpec(memory_space=pltpu.MemorySpace.VMEM)] * len(args),
        out_specs=pl.BlockSpec(memory_space=pltpu.MemorySpace.VMEM),
        compiler_params=pltpu.CompilerParams(vmem_limit_bytes=32 * 1024 * 1024),
        cost_estimate=_cost_estimate(B, x.shape[1], args, B * PAD_CLASSES * 4),
    )(*args)
    # x.mean(dim=1): the unsqueeze(1) seq axis has length 1 -> identity.
    return out_padded[:, :num_classes]


if __name__ == "__main__":
    batch, input_dim, num_classes = 8, 16, 4
    key = jax.random.PRNGKey(0)
    pkey, xkey = jax.random.split(key)
    params = init_params(pkey, input_dim, D_MODEL, num_classes)
    packed = pack_params(params)
    x = jax.random.normal(xkey, (batch, input_dim), dtype=jnp.float32)

    out = forward(packed, x, num_classes)
    out = jax.block_until_ready(out)
    assert out.shape == (batch, num_classes) and out.dtype == jnp.float32
    assert bool(jnp.all(jnp.isfinite(out)))
    print("KERNEL_OK")
</pallas_src>

<mosaic_0001>
module attributes {stable_mosaic.version = 11 : i64} {
  func.func @_fused_forward_kernel(%arg0: memref<8x16xf32, #tpu.memory_space<vmem>>, %arg1: memref<16x64xbf16, #tpu.memory_space<vmem>>, %arg2: memref<1x64xf32, #tpu.memory_space<vmem>>, %arg3: memref<2x64x192xbf16, #tpu.memory_space<vmem>>, %arg4: memref<2x192xf32, #tpu.memory_space<vmem>>, %arg5: memref<64x128xbf16, #tpu.memory_space<vmem>>, %arg6: memref<2x64x2048xi8, #tpu.memory_space<vmem>>, %arg7: memref<2048x128xi8, #tpu.memory_space<vmem>>, %arg8: memref<4x2048xf32, #tpu.memory_space<vmem>>, %arg9: memref<2x7x64xf32, #tpu.memory_space<vmem>>, %arg10: memref<64x128xbf16, #tpu.memory_space<vmem>>, %arg11: memref<1x128xf32, #tpu.memory_space<vmem>>, %arg12: memref<8x128xf32, #tpu.memory_space<vmem>>) attributes {dimension_semantics = [], scalar_prefetch = 0 : i64, scratch_operands = 0 : i64, tpu.core_type = #tpu.core_type<tc>} {
    %c0 = arith.constant 0 : index
    %c0_0 = arith.constant 0 : index
    %0 = vector.load %arg0[%c0, %c0_0] : memref<8x16xf32, #tpu.memory_space<vmem>>, vector<8x16xf32>
    %c0_1 = arith.constant 0 : index
    %c0_2 = arith.constant 0 : index
    %1 = vector.load %arg1[%c0_1, %c0_2] : memref<16x64xbf16, #tpu.memory_space<vmem>>, vector<16x64xbf16>
    %2 = arith.truncf %0 : vector<8x16xf32> to vector<8x16xbf16>
    %cst = arith.constant dense<0.000000e+00> : vector<8x64xf32>
    %3 = tpu.matmul %2, %1, %cst {dimension_numbers = #tpu.dot_dimension_numbers<[1], [0], [0], [1], [0, 0, 1, 1], [], []>} : vector<8x16xbf16>, vector<16x64xbf16>, vector<8x64xf32> -> vector<8x64xf32>
    %c0_3 = arith.constant 0 : index
    %c0_4 = arith.constant 0 : index
    %4 = vector.load %arg2[%c0_3, %c0_4] : memref<1x64xf32, #tpu.memory_space<vmem>>, vector<1x64xf32>
    %5 = vector.broadcast %4 : vector<1x64xf32> to vector<8x64xf32>
    %6 = arith.addf %3, %5 : vector<8x64xf32>
    %c0_5 = arith.constant 0 : index
    %c0_6 = arith.constant 0 : index
    %7 = vector.load %arg7[%c0_5, %c0_6] : memref<2048x128xi8, #tpu.memory_space<vmem>>, vector<2048x128xi8>
    %8 = arith.sitofp %7 : vector<2048x128xi8> to vector<2048x128xf32>
    %9 = arith.truncf %8 : vector<2048x128xf32> to vector<2048x128xbf16>
    %c0_7 = arith.constant 0 : index
    %c0_8 = arith.constant 0 : index
    %10 = vector.load %arg5[%c0_7, %c0_8] : memref<64x128xbf16, #tpu.memory_space<vmem>>, vector<64x128xbf16>
    %c0_9 = arith.constant 0 : index
    %c0_10 = arith.constant 0 : index
    %c0_11 = arith.constant 0 : index
    %11 = vector.load %arg3[%c0_9, %c0_10, %c0_11] : memref<2x64x192xbf16, #tpu.memory_space<vmem>>, vector<1x64x192xbf16>
    %12 = vector.shape_cast %11 : vector<1x64x192xbf16> to vector<64x192xbf16>
    %c0_12 = arith.constant 0 : index
    %c0_13 = arith.constant 0 : index
    %13 = vector.load %arg4[%c0_12, %c0_13] : memref<2x192xf32, #tpu.memory_space<vmem>>, vector<1x192xf32>
    %c0_14 = arith.constant 0 : index
    %c0_15 = arith.constant 0 : index
    %c0_16 = arith.constant 0 : index
    %14 = vector.load %arg6[%c0_14, %c0_15, %c0_16] : memref<2x64x2048xi8, #tpu.memory_space<vmem>>, vector<1x64x2048xi8>
    %15 = vector.shape_cast %14 : vector<1x64x2048xi8> to vector<64x2048xi8>
    %16 = arith.sitofp %15 : vector<64x2048xi8> to vector<64x2048xf32>
    %17 = arith.truncf %16 : vector<64x2048xf32> to vector<64x2048xbf16>
    %c0_17 = arith.constant 0 : index
    %c0_18 = arith.constant 0 : index
    %18 = vector.load %arg8[%c0_17, %c0_18] : memref<4x2048xf32, #tpu.memory_space<vmem>>, vector<1x2048xf32>
    %c1 = arith.constant 1 : index
    %c0_19 = arith.constant 0 : index
    %19 = vector.load %arg8[%c1, %c0_19] : memref<4x2048xf32, #tpu.memory_space<vmem>>, vector<1x2048xf32>
    %c0_20 = arith.constant 0 : index
    %c0_21 = arith.constant 0 : index
    %c0_22 = arith.constant 0 : index
    %20 = vector.load %arg9[%c0_20, %c0_21, %c0_22] : memref<2x7x64xf32, #tpu.memory_space<vmem>>, vector<1x7x64xf32>
    %21 = vector.shape_cast %20 : vector<1x7x64xf32> to vector<7x64xf32>
    %22 = vector.extract_strided_slice %21 {offsets = [0, 0], sizes = [1, 64], strides = [1, 1]} : vector<7x64xf32> to vector<1x64xf32>
    %23 = vector.extract_strided_slice %21 {offsets = [1, 0], sizes = [1, 64], strides = [1, 1]} : vector<7x64xf32> to vector<1x64xf32>
    %24 = vector.extract_strided_slice %21 {offsets = [2, 0], sizes = [1, 64], strides = [1, 1]} : vector<7x64xf32> to vector<1x64xf32>
    %25 = vector.extract_strided_slice %21 {offsets = [3, 0], sizes = [1, 64], strides = [1, 1]} : vector<7x64xf32> to vector<1x64xf32>
    %26 = vector.extract_strided_slice %21 {offsets = [4, 0], sizes = [1, 64], strides = [1, 1]} : vector<7x64xf32> to vector<1x64xf32>
    %27 = vector.extract_strided_slice %21 {offsets = [5, 0], sizes = [1, 64], strides = [1, 1]} : vector<7x64xf32> to vector<1x64xf32>
    %28 = vector.extract_strided_slice %21 {offsets = [6, 0], sizes = [1, 64], strides = [1, 1]} : vector<7x64xf32> to vector<1x64xf32>
    %29 = arith.truncf %6 : vector<8x64xf32> to vector<8x64xbf16>
    %cst_23 = arith.constant dense<0.000000e+00> : vector<8x192xf32>
    %30 = tpu.matmul %29, %12, %cst_23 {dimension_numbers = #tpu.dot_dimension_numbers<[1], [0], [0], [1], [0, 0, 1, 1], [], []>} : vector<8x64xbf16>, vector<64x192xbf16>, vector<8x192xf32> -> vector<8x192xf32>
    %31 = vector.broadcast %13 : vector<1x192xf32> to vector<8x192xf32>
    %32 = arith.addf %30, %31 : vector<8x192xf32>
    %33 = vector.extract_strided_slice %32 {offsets = [0, 0], sizes = [8, 64], strides = [1, 1]} : vector<8x192xf32> to vector<8x64xf32>
    %34 = vector.extract_strided_slice %32 {offsets = [0, 64], sizes = [8, 64], strides = [1, 1]} : vector<8x192xf32> to vector<8x64xf32>
    %35 = vector.extract_strided_slice %32 {offsets = [0, 128], sizes = [8, 64], strides = [1, 1]} : vector<8x192xf32> to vector<8x64xf32>
    %36 = vector.extract_strided_slice %33 {offsets = [0, 0], sizes = [8, 32], strides = [1, 1]} : vector<8x64xf32> to vector<8x32xf32>
    %37 = vector.extract_strided_slice %34 {offsets = [0, 0], sizes = [8, 32], strides = [1, 1]} : vector<8x64xf32> to vector<8x32xf32>
    %cst_24 = arith.constant dense<0.000000e+00> : vector<8x8xf32>
    %38 = tpu.matmul %36, %37, %cst_24 {dimension_numbers = #tpu.dot_dimension_numbers<[1], [1], [0], [0], [0, 0, 1, 0], [], []>} : vector<8x32xf32>, vector<8x32xf32>, vector<8x8xf32> -> vector<8x8xf32>
    %cst_25 = arith.constant dense<0xFF800000> : vector<8xf32>
    %39 = vector.multi_reduction <maximumf>, %38, %cst_25 [1] : vector<8x8xf32> to vector<8xf32>
    %40 = vector.shape_cast %39 : vector<8xf32> to vector<8x1xf32>
    %41 = vector.broadcast %40 : vector<8x1xf32> to vector<8x8xf32>
    %42 = arith.subf %38, %41 : vector<8x8xf32>
    %43 = math.exp %42 : vector<8x8xf32>
    %cst_26 = arith.constant dense<0.000000e+00> : vector<8xf32>
    %44 = vector.multi_reduction <add>, %43, %cst_26 [1] : vector<8x8xf32> to vector<8xf32>
    %45 = vector.shape_cast %44 : vector<8xf32> to vector<8x1xf32>
    %46 = vector.broadcast %45 : vector<8x1xf32> to vector<8x8xf32>
    %47 = arith.divf %43, %46 : vector<8x8xf32>
    %48 = vector.extract_strided_slice %35 {offsets = [0, 0], sizes = [8, 32], strides = [1, 1]} : vector<8x64xf32> to vector<8x32xf32>
    %cst_27 = arith.constant dense<0.000000e+00> : vector<8x32xf32>
    %49 = tpu.matmul %47, %48, %cst_27 {dimension_numbers = #tpu.dot_dimension_numbers<[1], [0], [0], [1], [0, 0, 1, 1], [], []>} : vector<8x8xf32>, vector<8x32xf32>, vector<8x32xf32> -> vector<8x32xf32>
    %50 = vector.extract_strided_slice %33 {offsets = [0, 32], sizes = [8, 32], strides = [1, 1]} : vector<8x64xf32> to vector<8x32xf32>
    %51 = vector.extract_strided_slice %34 {offsets = [0, 32], sizes = [8, 32], strides = [1, 1]} : vector<8x64xf32> to vector<8x32xf32>
    %cst_28 = arith.constant dense<0.000000e+00> : vector<8x8xf32>
    %52 = tpu.matmul %50, %51, %cst_28 {dimension_numbers = #tpu.dot_dimension_numbers<[1], [1], [0], [0], [0, 0, 1, 0], [], []>} : vector<8x32xf32>, vector<8x32xf32>, vector<8x8xf32> -> vector<8x8xf32>
    %cst_29 = arith.constant dense<0xFF800000> : vector<8xf32>
    %53 = vector.multi_reduction <maximumf>, %52, %cst_29 [1] : vector<8x8xf32> to vector<8xf32>
    %54 = vector.shape_cast %53 : vector<8xf32> to vector<8x1xf32>
    %55 = vector.broadcast %54 : vector<8x1xf32> to vector<8x8xf32>
    %56 = arith.subf %52, %55 : vector<8x8xf32>
    %57 = math.exp %56 : vector<8x8xf32>
    %cst_30 = arith.constant dense<0.000000e+00> : vector<8xf32>
    %58 = vector.multi_reduction <add>, %57, %cst_30 [1] : vector<8x8xf32> to vector<8xf32>
    %59 = vector.shape_cast %58 : vector<8xf32> to vector<8x1xf32>
    %60 = vector.broadcast %59 : vector<8x1xf32> to vector<8x8xf32>
    %61 = arith.divf %57, %60 : vector<8x8xf32>
    %62 = vector.extract_strided_slice %35 {offsets = [0, 32], sizes = [8, 32], strides = [1, 1]} : vector<8x64xf32> to vector<8x32xf32>
    %cst_31 = arith.constant dense<0.000000e+00> : vector<8x32xf32>
    %63 = tpu.matmul %61, %62, %cst_31 {dimension_numbers = #tpu.dot_dimension_numbers<[1], [0], [0], [1], [0, 0, 1, 1], [], []>} : vector<8x8xf32>, vector<8x32xf32>, vector<8x32xf32> -> vector<8x32xf32>
    %64 = tpu.concatenate %49, %63 in 1 : vector<8x32xf32>, vector<8x32xf32> -> vector<8x64xf32>
    %65 = arith.truncf %64 : vector<8x64xf32> to vector<8x64xbf16>
    %cst_32 = arith.constant dense<0.000000e+00> : vector<8x128xf32>
    %66 = tpu.matmul %65, %10, %cst_32 {dimension_numbers = #tpu.dot_dimension_numbers<[1], [0], [0], [1], [0, 0, 1, 1], [], []>} : vector<8x64xbf16>, vector<64x128xbf16>, vector<8x128xf32> -> vector<8x128xf32>
    %67 = vector.extract_strided_slice %66 {offsets = [0, 0], sizes = [8, 64], strides = [1, 1]} : vector<8x128xf32> to vector<8x64xf32>
    %68 = vector.broadcast %22 : vector<1x64xf32> to vector<8x64xf32>
    %69 = arith.addf %67, %68 : vector<8x64xf32>
    %70 = arith.addf %6, %69 : vector<8x64xf32>
    %cst_33 = arith.constant dense<0.000000e+00> : vector<8xf32>
    %71 = vector.multi_reduction <add>, %70, %cst_33 [1] : vector<8x64xf32> to vector<8xf32>
    %72 = vector.shape_cast %71 : vector<8xf32> to vector<8x1xf32>
    %cst_34 = arith.constant 6.400000e+01 : f32
    %73 = vector.broadcast %cst_34 : f32 to vector<8x1xf32>
    %74 = arith.divf %72, %73 : vector<8x1xf32>
    %75 = arith.mulf %70, %70 : vector<8x64xf32>
    %cst_35 = arith.constant dense<0.000000e+00> : vector<8xf32>
    %76 = vector.multi_reduction <add>, %75, %cst_35 [1] : vector<8x64xf32> to vector<8xf32>
    %77 = vector.shape_cast %76 : vector<8xf32> to vector<8x1xf32>
    %cst_36 = arith.constant 6.400000e+01 : f32
    %78 = vector.broadcast %cst_36 : f32 to vector<8x1xf32>
    %79 = arith.divf %77, %78 : vector<8x1xf32>
    %80 = arith.mulf %74, %74 : vector<8x1xf32>
    %81 = arith.subf %79, %80 : vector<8x1xf32>
    %cst_37 = arith.constant 0.000000e+00 : f32
    %82 = vector.broadcast %cst_37 : f32 to vector<8x1xf32>
    %83 = arith.maximumf %81, %82 : vector<8x1xf32>
    %84 = vector.broadcast %74 : vector<8x1xf32> to vector<8x64xf32>
    %85 = arith.subf %70, %84 : vector<8x64xf32>
    %cst_38 = arith.constant 9.99999974E-6 : f32
    %86 = vector.broadcast %cst_38 : f32 to vector<8x1xf32>
    %87 = arith.addf %83, %86 : vector<8x1xf32>
    %88 = math.rsqrt %87 : vector<8x1xf32>
    %89 = vector.broadcast %88 : vector<8x1xf32> to vector<8x64xf32>
    %90 = arith.mulf %85, %89 : vector<8x64xf32>
    %91 = vector.broadcast %23 : vector<1x64xf32> to vector<8x64xf32>
    %92 = arith.mulf %90, %91 : vector<8x64xf32>
    %93 = vector.broadcast %24 : vector<1x64xf32> to vector<8x64xf32>
    %94 = arith.addf %92, %93 : vector<8x64xf32>
    %95 = arith.truncf %94 : vector<8x64xf32> to vector<8x64xbf16>
    %cst_39 = arith.constant dense<0.000000e+00> : vector<8x2048xf32>
    %96 = tpu.matmul %95, %17, %cst_39 {dimension_numbers = #tpu.dot_dimension_numbers<[1], [0], [0], [1], [0, 0, 1, 1], [], []>} : vector<8x64xbf16>, vector<64x2048xbf16>, vector<8x2048xf32> -> vector<8x2048xf32>
    %97 = vector.broadcast %19 : vector<1x2048xf32> to vector<8x2048xf32>
    %98 = arith.mulf %96, %97 : vector<8x2048xf32>
    %99 = vector.broadcast %18 : vector<1x2048xf32> to vector<8x2048xf32>
    %100 = arith.addf %98, %99 : vector<8x2048xf32>
    %cst_40 = arith.constant 0.000000e+00 : f32
    %101 = vector.broadcast %cst_40 : f32 to vector<8x2048xf32>
    %102 = arith.maximumf %100, %101 : vector<8x2048xf32>
    %103 = arith.truncf %102 : vector<8x2048xf32> to vector<8x2048xbf16>
    %cst_41 = arith.constant dense<0.000000e+00> : vector<8x128xf32>
    %104 = tpu.matmul %103, %9, %cst_41 {dimension_numbers = #tpu.dot_dimension_numbers<[1], [0], [0], [1], [0, 0, 1, 1], [], []>} : vector<8x2048xbf16>, vector<2048x128xbf16>, vector<8x128xf32> -> vector<8x128xf32>
    %105 = vector.extract_strided_slice %104 {offsets = [0, 0], sizes = [8, 64], strides = [1, 1]} : vector<8x128xf32> to vector<8x64xf32>
    %106 = vector.broadcast %28 : vector<1x64xf32> to vector<8x64xf32>
    %107 = arith.mulf %105, %106 : vector<8x64xf32>
    %108 = vector.broadcast %25 : vector<1x64xf32> to vector<8x64xf32>
    %109 = arith.addf %107, %108 : vector<8x64xf32>
    %110 = arith.addf %94, %109 : vector<8x64xf32>
    %cst_42 = arith.constant dense<0.000000e+00> : vector<8xf32>
    %111 = vector.multi_reduction <add>, %110, %cst_42 [1] : vector<8x64xf32> to vector<8xf32>
    %112 = vector.shape_cast %111 : vector<8xf32> to vector<8x1xf32>
    %cst_43 = arith.constant 6.400000e+01 : f32
    %113 = vector.broadcast %cst_43 : f32 to vector<8x1xf32>
    %114 = arith.divf %112, %113 : vector<8x1xf32>
    %115 = arith.mulf %110, %110 : vector<8x64xf32>
    %cst_44 = arith.constant dense<0.000000e+00> : vector<8xf32>
    %116 = vector.multi_reduction <add>, %115, %cst_44 [1] : vector<8x64xf32> to vector<8xf32>
    %117 = vector.shape_cast %116 : vector<8xf32> to vector<8x1xf32>
    %cst_45 = arith.constant 6.400000e+01 : f32
    %118 = vector.broadcast %cst_45 : f32 to vector<8x1xf32>
    %119 = arith.divf %117, %118 : vector<8x1xf32>
    %120 = arith.mulf %114, %114 : vector<8x1xf32>
    %121 = arith.subf %119, %120 : vector<8x1xf32>
    %cst_46 = arith.constant 0.000000e+00 : f32
    %122 = vector.broadcast %cst_46 : f32 to vector<8x1xf32>
    %123 = arith.maximumf %121, %122 : vector<8x1xf32>
    %124 = vector.broadcast %114 : vector<8x1xf32> to vector<8x64xf32>
    %125 = arith.subf %110, %124 : vector<8x64xf32>
    %cst_47 = arith.constant 9.99999974E-6 : f32
    %126 = vector.broadcast %cst_47 : f32 to vector<8x1xf32>
    %127 = arith.addf %123, %126 : vector<8x1xf32>
    %128 = math.rsqrt %127 : vector<8x1xf32>
    %129 = vector.broadcast %128 : vector<8x1xf32> to vector<8x64xf32>
    %130 = arith.mulf %125, %129 : vector<8x64xf32>
    %131 = vector.broadcast %26 : vector<1x64xf32> to vector<8x64xf32>
    %132 = arith.mulf %130, %131 : vector<8x64xf32>
    %133 = vector.broadcast %27 : vector<1x64xf32> to vector<8x64xf32>
    %134 = arith.addf %132, %133 : vector<8x64xf32>
    %c1_48 = arith.constant 1 : index
    %c0_49 = arith.constant 0 : index
    %c0_50 = arith.constant 0 : index
    %135 = vector.load %arg3[%c1_48, %c0_49, %c0_50] : memref<2x64x192xbf16, #tpu.memory_space<vmem>>, vector<1x64x192xbf16>
    %136 = vector.shape_cast %135 : vector<1x64x192xbf16> to vector<64x192xbf16>
    %c1_51 = arith.constant 1 : index
    %c0_52 = arith.constant 0 : index
    %137 = vector.load %arg4[%c1_51, %c0_52] : memref<2x192xf32, #tpu.memory_space<vmem>>, vector<1x192xf32>
    %c1_53 = arith.constant 1 : index
    %c0_54 = arith.constant 0 : index
    %c0_55 = arith.constant 0 : index
    %138 = vector.load %arg6[%c1_53, %c0_54, %c0_55] : memref<2x64x2048xi8, #tpu.memory_space<vmem>>, vector<1x64x2048xi8>
    %139 = vector.shape_cast %138 : vector<1x64x2048xi8> to vector<64x2048xi8>
    %140 = arith.sitofp %139 : vector<64x2048xi8> to vector<64x2048xf32>
    %141 = arith.truncf %140 : vector<64x2048xf32> to vector<64x2048xbf16>
    %c2 = arith.constant 2 : index
    %c0_56 = arith.constant 0 : index
    %142 = vector.load %arg8[%c2, %c0_56] : memref<4x2048xf32, #tpu.memory_space<vmem>>, vector<1x2048xf32>
    %c3 = arith.constant 3 : index
    %c0_57 = arith.constant 0 : index
    %143 = vector.load %arg8[%c3, %c0_57] : memref<4x2048xf32, #tpu.memory_space<vmem>>, vector<1x2048xf32>
    %c1_58 = arith.constant 1 : index
    %c0_59 = arith.constant 0 : index
    %c0_60 = arith.constant 0 : index
    %144 = vector.load %arg9[%c1_58, %c0_59, %c0_60] : memref<2x7x64xf32, #tpu.memory_space<vmem>>, vector<1x7x64xf32>
    %145 = vector.shape_cast %144 : vector<1x7x64xf32> to vector<7x64xf32>
    %146 = vector.extract_strided_slice %145 {offsets = [0, 0], sizes = [1, 64], strides = [1, 1]} : vector<7x64xf32> to vector<1x64xf32>
    %147 = vector.extract_strided_slice %145 {offsets = [1, 0], sizes = [1, 64], strides = [1, 1]} : vector<7x64xf32> to vector<1x64xf32>
    %148 = vector.extract_strided_slice %145 {offsets = [2, 0], sizes = [1, 64], strides = [1, 1]} : vector<7x64xf32> to vector<1x64xf32>
    %149 = vector.extract_strided_slice %145 {offsets = [3, 0], sizes = [1, 64], strides = [1, 1]} : vector<7x64xf32> to vector<1x64xf32>
    %150 = vector.extract_strided_slice %145 {offsets = [4, 0], sizes = [1, 64], strides = [1, 1]} : vector<7x64xf32> to vector<1x64xf32>
    %151 = vector.extract_strided_slice %145 {offsets = [5, 0], sizes = [1, 64], strides = [1, 1]} : vector<7x64xf32> to vector<1x64xf32>
    %152 = vector.extract_strided_slice %145 {offsets = [6, 0], sizes = [1, 64], strides = [1, 1]} : vector<7x64xf32> to vector<1x64xf32>
    %153 = arith.truncf %134 : vector<8x64xf32> to vector<8x64xbf16>
    %cst_61 = arith.constant dense<0.000000e+00> : vector<8x192xf32>
    %154 = tpu.matmul %153, %136, %cst_61 {dimension_numbers = #tpu.dot_dimension_numbers<[1], [0], [0], [1], [0, 0, 1, 1], [], []>} : vector<8x64xbf16>, vector<64x192xbf16>, vector<8x192xf32> -> vector<8x192xf32>
    %155 = vector.broadcast %137 : vector<1x192xf32> to vector<8x192xf32>
    %156 = arith.addf %154, %155 : vector<8x192xf32>
    %157 = vector.extract_strided_slice %156 {offsets = [0, 0], sizes = [8, 64], strides = [1, 1]} : vector<8x192xf32> to vector<8x64xf32>
    %158 = vector.extract_strided_slice %156 {offsets = [0, 64], sizes = [8, 64], strides = [1, 1]} : vector<8x192xf32> to vector<8x64xf32>
    %159 = vector.extract_strided_slice %156 {offsets = [0, 128], sizes = [8, 64], strides = [1, 1]} : vector<8x192xf32> to vector<8x64xf32>
    %160 = vector.extract_strided_slice %157 {offsets = [0, 0], sizes = [8, 32], strides = [1, 1]} : vector<8x64xf32> to vector<8x32xf32>
    %161 = vector.extract_strided_slice %158 {offsets = [0, 0], sizes = [8, 32], strides = [1, 1]} : vector<8x64xf32> to vector<8x32xf32>
    %cst_62 = arith.constant dense<0.000000e+00> : vector<8x8xf32>
    %162 = tpu.matmul %160, %161, %cst_62 {dimension_numbers = #tpu.dot_dimension_numbers<[1], [1], [0], [0], [0, 0, 1, 0], [], []>} : vector<8x32xf32>, vector<8x32xf32>, vector<8x8xf32> -> vector<8x8xf32>
    %cst_63 = arith.constant dense<0xFF800000> : vector<8xf32>
    %163 = vector.multi_reduction <maximumf>, %162, %cst_63 [1] : vector<8x8xf32> to vector<8xf32>
    %164 = vector.shape_cast %163 : vector<8xf32> to vector<8x1xf32>
    %165 = vector.broadcast %164 : vector<8x1xf32> to vector<8x8xf32>
    %166 = arith.subf %162, %165 : vector<8x8xf32>
    %167 = math.exp %166 : vector<8x8xf32>
    %cst_64 = arith.constant dense<0.000000e+00> : vector<8xf32>
    %168 = vector.multi_reduction <add>, %167, %cst_64 [1] : vector<8x8xf32> to vector<8xf32>
    %169 = vector.shape_cast %168 : vector<8xf32> to vector<8x1xf32>
    %170 = vector.broadcast %169 : vector<8x1xf32> to vector<8x8xf32>
    %171 = arith.divf %167, %170 : vector<8x8xf32>
    %172 = vector.extract_strided_slice %159 {offsets = [0, 0], sizes = [8, 32], strides = [1, 1]} : vector<8x64xf32> to vector<8x32xf32>
    %cst_65 = arith.constant dense<0.000000e+00> : vector<8x32xf32>
    %173 = tpu.matmul %171, %172, %cst_65 {dimension_numbers = #tpu.dot_dimension_numbers<[1], [0], [0], [1], [0, 0, 1, 1], [], []>} : vector<8x8xf32>, vector<8x32xf32>, vector<8x32xf32> -> vector<8x32xf32>
    %174 = vector.extract_strided_slice %157 {offsets = [0, 32], sizes = [8, 32], strides = [1, 1]} : vector<8x64xf32> to vector<8x32xf32>
    %175 = vector.extract_strided_slice %158 {offsets = [0, 32], sizes = [8, 32], strides = [1, 1]} : vector<8x64xf32> to vector<8x32xf32>
    %cst_66 = arith.constant dense<0.000000e+00> : vector<8x8xf32>
    %176 = tpu.matmul %174, %175, %cst_66 {dimension_numbers = #tpu.dot_dimension_numbers<[1], [1], [0], [0], [0, 0, 1, 0], [], []>} : vector<8x32xf32>, vector<8x32xf32>, vector<8x8xf32> -> vector<8x8xf32>
    %cst_67 = arith.constant dense<0xFF800000> : vector<8xf32>
    %177 = vector.multi_reduction <maximumf>, %176, %cst_67 [1] : vector<8x8xf32> to vector<8xf32>
    %178 = vector.shape_cast %177 : vector<8xf32> to vector<8x1xf32>
    %179 = vector.broadcast %178 : vector<8x1xf32> to vector<8x8xf32>
    %180 = arith.subf %176, %179 : vector<8x8xf32>
    %181 = math.exp %180 : vector<8x8xf32>
    %cst_68 = arith.constant dense<0.000000e+00> : vector<8xf32>
    %182 = vector.multi_reduction <add>, %181, %cst_68 [1] : vector<8x8xf32> to vector<8xf32>
    %183 = vector.shape_cast %182 : vector<8xf32> to vector<8x1xf32>
    %184 = vector.broadcast %183 : vector<8x1xf32> to vector<8x8xf32>
    %185 = arith.divf %181, %184 : vector<8x8xf32>
    %186 = vector.extract_strided_slice %159 {offsets = [0, 32], sizes = [8, 32], strides = [1, 1]} : vector<8x64xf32> to vector<8x32xf32>
    %cst_69 = arith.constant dense<0.000000e+00> : vector<8x32xf32>
    %187 = tpu.matmul %185, %186, %cst_69 {dimension_numbers = #tpu.dot_dimension_numbers<[1], [0], [0], [1], [0, 0, 1, 1], [], []>} : vector<8x8xf32>, vector<8x32xf32>, vector<8x32xf32> -> vector<8x32xf32>
    %188 = tpu.concatenate %173, %187 in 1 : vector<8x32xf32>, vector<8x32xf32> -> vector<8x64xf32>
    %189 = arith.truncf %188 : vector<8x64xf32> to vector<8x64xbf16>
    %cst_70 = arith.constant dense<0.000000e+00> : vector<8x128xf32>
    %190 = tpu.matmul %189, %10, %cst_70 {dimension_numbers = #tpu.dot_dimension_numbers<[1], [0], [0], [1], [0, 0, 1, 1], [], []>} : vector<8x64xbf16>, vector<64x128xbf16>, vector<8x128xf32> -> vector<8x128xf32>
    %191 = vector.extract_strided_slice %190 {offsets = [0, 64], sizes = [8, 64], strides = [1, 1]} : vector<8x128xf32> to vector<8x64xf32>
    %192 = vector.broadcast %146 : vector<1x64xf32> to vector<8x64xf32>
    %193 = arith.addf %191, %192 : vector<8x64xf32>
    %194 = arith.addf %134, %193 : vector<8x64xf32>
    %cst_71 = arith.constant dense<0.000000e+00> : vector<8xf32>
    %195 = vector.multi_reduction <add>, %194, %cst_71 [1] : vector<8x64xf32> to vector<8xf32>
    %196 = vector.shape_cast %195 : vector<8xf32> to vector<8x1xf32>
    %cst_72 = arith.constant 6.400000e+01 : f32
    %197 = vector.broadcast %cst_72 : f32 to vector<8x1xf32>
    %198 = arith.divf %196, %197 : vector<8x1xf32>
    %199 = arith.mulf %194, %194 : vector<8x64xf32>
    %cst_73 = arith.constant dense<0.000000e+00> : vector<8xf32>
    %200 = vector.multi_reduction <add>, %199, %cst_73 [1] : vector<8x64xf32> to vector<8xf32>
    %201 = vector.shape_cast %200 : vector<8xf32> to vector<8x1xf32>
    %cst_74 = arith.constant 6.400000e+01 : f32
    %202 = vector.broadcast %cst_74 : f32 to vector<8x1xf32>
    %203 = arith.divf %201, %202 : vector<8x1xf32>
    %204 = arith.mulf %198, %198 : vector<8x1xf32>
    %205 = arith.subf %203, %204 : vector<8x1xf32>
    %cst_75 = arith.constant 0.000000e+00 : f32
    %206 = vector.broadcast %cst_75 : f32 to vector<8x1xf32>
    %207 = arith.maximumf %205, %206 : vector<8x1xf32>
    %208 = vector.broadcast %198 : vector<8x1xf32> to vector<8x64xf32>
    %209 = arith.subf %194, %208 : vector<8x64xf32>
    %cst_76 = arith.constant 9.99999974E-6 : f32
    %210 = vector.broadcast %cst_76 : f32 to vector<8x1xf32>
    %211 = arith.addf %207, %210 : vector<8x1xf32>
    %212 = math.rsqrt %211 : vector<8x1xf32>
    %213 = vector.broadcast %212 : vector<8x1xf32> to vector<8x64xf32>
    %214 = arith.mulf %209, %213 : vector<8x64xf32>
    %215 = vector.broadcast %147 : vector<1x64xf32> to vector<8x64xf32>
    %216 = arith.mulf %214, %215 : vector<8x64xf32>
    %217 = vector.broadcast %148 : vector<1x64xf32> to vector<8x64xf32>
    %218 = arith.addf %216, %217 : vector<8x64xf32>
    %219 = arith.truncf %218 : vector<8x64xf32> to vector<8x64xbf16>
    %cst_77 = arith.constant dense<0.000000e+00> : vector<8x2048xf32>
    %220 = tpu.matmul %219, %141, %cst_77 {dimension_numbers = #tpu.dot_dimension_numbers<[1], [0], [0], [1], [0, 0, 1, 1], [], []>} : vector<8x64xbf16>, vector<64x2048xbf16>, vector<8x2048xf32> -> vector<8x2048xf32>
    %221 = vector.broadcast %143 : vector<1x2048xf32> to vector<8x2048xf32>
    %222 = arith.mulf %220, %221 : vector<8x2048xf32>
    %223 = vector.broadcast %142 : vector<1x2048xf32> to vector<8x2048xf32>
    %224 = arith.addf %222, %223 : vector<8x2048xf32>
    %cst_78 = arith.constant 0.000000e+00 : f32
    %225 = vector.broadcast %cst_78 : f32 to vector<8x2048xf32>
    %226 = arith.maximumf %224, %225 : vector<8x2048xf32>
    %227 = arith.truncf %226 : vector<8x2048xf32> to vector<8x2048xbf16>
    %cst_79 = arith.constant dense<0.000000e+00> : vector<8x128xf32>
    %228 = tpu.matmul %227, %9, %cst_79 {dimension_numbers = #tpu.dot_dimension_numbers<[1], [0], [0], [1], [0, 0, 1, 1], [], []>} : vector<8x2048xbf16>, vector<2048x128xbf16>, vector<8x128xf32> -> vector<8x128xf32>
    %229 = vector.extract_strided_slice %228 {offsets = [0, 64], sizes = [8, 64], strides = [1, 1]} : vector<8x128xf32> to vector<8x64xf32>
    %230 = vector.broadcast %152 : vector<1x64xf32> to vector<8x64xf32>
    %231 = arith.mulf %229, %230 : vector<8x64xf32>
    %232 = vector.broadcast %149 : vector<1x64xf32> to vector<8x64xf32>
    %233 = arith.addf %231, %232 : vector<8x64xf32>
    %234 = arith.addf %218, %233 : vector<8x64xf32>
    %cst_80 = arith.constant dense<0.000000e+00> : vector<8xf32>
    %235 = vector.multi_reduction <add>, %234, %cst_80 [1] : vector<8x64xf32> to vector<8xf32>
    %236 = vector.shape_cast %235 : vector<8xf32> to vector<8x1xf32>
    %cst_81 = arith.constant 6.400000e+01 : f32
    %237 = vector.broadcast %cst_81 : f32 to vector<8x1xf32>
    %238 = arith.divf %236, %237 : vector<8x1xf32>
    %239 = arith.mulf %234, %234 : vector<8x64xf32>
    %cst_82 = arith.constant dense<0.000000e+00> : vector<8xf32>
    %240 = vector.multi_reduction <add>, %239, %cst_82 [1] : vector<8x64xf32> to vector<8xf32>
    %241 = vector.shape_cast %240 : vector<8xf32> to vector<8x1xf32>
    %cst_83 = arith.constant 6.400000e+01 : f32
    %242 = vector.broadcast %cst_83 : f32 to vector<8x1xf32>
    %243 = arith.divf %241, %242 : vector<8x1xf32>
    %244 = arith.mulf %238, %238 : vector<8x1xf32>
    %245 = arith.subf %243, %244 : vector<8x1xf32>
    %cst_84 = arith.constant 0.000000e+00 : f32
    %246 = vector.broadcast %cst_84 : f32 to vector<8x1xf32>
    %247 = arith.maximumf %245, %246 : vector<8x1xf32>
    %248 = vector.broadcast %238 : vector<8x1xf32> to vector<8x64xf32>
    %249 = arith.subf %234, %248 : vector<8x64xf32>
    %cst_85 = arith.constant 9.99999974E-6 : f32
    %250 = vector.broadcast %cst_85 : f32 to vector<8x1xf32>
    %251 = arith.addf %247, %250 : vector<8x1xf32>
    %252 = math.rsqrt %251 : vector<8x1xf32>
    %253 = vector.broadcast %252 : vector<8x1xf32> to vector<8x64xf32>
    %254 = arith.mulf %249, %253 : vector<8x64xf32>
    %255 = vector.broadcast %150 : vector<1x64xf32> to vector<8x64xf32>
    %256 = arith.mulf %254, %255 : vector<8x64xf32>
    %257 = vector.broadcast %151 : vector<1x64xf32> to vector<8x64xf32>
    %258 = arith.addf %256, %257 : vector<8x64xf32>
    %c0_86 = arith.constant 0 : index
    %c0_87 = arith.constant 0 : index
    %259 = vector.load %arg10[%c0_86, %c0_87] : memref<64x128xbf16, #tpu.memory_space<vmem>>, vector<64x128xbf16>
    %260 = arith.truncf %258 : vector<8x64xf32> to vector<8x64xbf16>
    %cst_88 = arith.constant dense<0.000000e+00> : vector<8x128xf32>
    %261 = tpu.matmul %260, %259, %cst_88 {dimension_numbers = #tpu.dot_dimension_numbers<[1], [0], [0], [1], [0, 0, 1, 1], [], []>} : vector<8x64xbf16>, vector<64x128xbf16>, vector<8x128xf32> -> vector<8x128xf32>
    %c0_89 = arith.constant 0 : index
    %c0_90 = arith.constant 0 : index
    %262 = vector.load %arg11[%c0_89, %c0_90] : memref<1x128xf32, #tpu.memory_space<vmem>>, vector<1x128xf32>
    %263 = vector.broadcast %262 : vector<1x128xf32> to vector<8x128xf32>
    %264 = arith.addf %261, %263 : vector<8x128xf32>
    %c0_91 = arith.constant 0 : index
    %c0_92 = arith.constant 0 : index
    %265 = vector.load %arg12[%c0_91, %c0_92] : memref<8x128xf32, #tpu.memory_space<vmem>>, vector<8x128xf32>
    tpu.vector_store %arg12[%c0_91, %c0_92], %264 {strides = array<i32>} : memref<8x128xf32, #tpu.memory_space<vmem>>, vector<8x128xf32>,
    return
  }
}

</mosaic_0001>

<llo_original>
// kernel: forward.1
$region0: #{forward.1}
  #allocation0 [shape = 'u32[]', space=smem, size = 0x4, offset = 0x4, fixed_abs, tag = 'smem constant byte address 0x4 - core index']
  #allocation1 [shape = 'u32[144,128]{1,0:T(1,128)}', space=vmem, size = 0x12000, scoped, tag = 'internal scratch']
  %s0 = inlined_call_operand.hbm [shape: f32[8,16], index: 0, kind: input, shape index: {}]
  %s1 = inlined_call_operand.hbm [shape: bf16[16,64], index: 1, kind: input, shape index: {}]
  %s2 = inlined_call_operand.hbm [shape: f32[1,64], index: 2, kind: input, shape index: {}]
  %s3 = inlined_call_operand.hbm [shape: bf16[2,64,192], index: 3, kind: input, shape index: {}]
  %s4 = inlined_call_operand.hbm [shape: f32[2,192], index: 4, kind: input, shape index: {}]
  %s5 = inlined_call_operand.vmem [shape: bf16[64,128], index: 5, kind: input, shape index: {}]
  %s6 = inlined_call_operand.hbm [shape: s8[2,64,2048], index: 6, kind: input, shape index: {}]
  %s7 = inlined_call_operand.hbm [shape: s8[2048,128], index: 7, kind: input, shape index: {}]
  %s8 = inlined_call_operand.hbm [shape: f32[4,2048], index: 8, kind: input, shape index: {}]
  %s9 = inlined_call_operand.vmem [shape: f32[2,7,64], index: 9, kind: input, shape index: {}]
  %s10 = inlined_call_operand.vmem [shape: bf16[64,128], index: 10, kind: input, shape index: {}]
  %s11 = inlined_call_operand.hbm [shape: f32[1,128], index: 11, kind: input, shape index: {}]
  %s12 = inlined_call_operand.vmem [shape: f32[8,128], index: 12, kind: output, shape index: {}]
  %s13 = sld [smem:[#allocation0]]
  $region94: #{forward.1} parent=0
    _
  %s15 = ssub.s32 1, %s13
  %s16 = scalar_select 0, %s15, %s13
  $region1: #{forward.1} parent=0
    #allocation2 [shape = 'u8[4096]{0}', space=vmem, size = 0x1000, scoped, tag = 'input window, operand 0, single buffered']
    #allocation3 [shape = 's32[1]{0}', space=sflag, size = 0x4, scoped, tag = 'scoped memory for forward.1']
    #allocation4 [shape = 'u8[4096]{0}', space=vmem, size = 0x1000, scoped, tag = 'input window, operand 1, single buffered']
    #allocation5 [shape = 's32[1]{0}', space=sflag, size = 0x4, scoped, tag = 'scoped memory for forward.1']
    #allocation6 [shape = 'u8[512]{0}', space=vmem, size = 0x400, scoped, tag = 'input window, operand 2, single buffered']
    #allocation7 [shape = 'u8[65536]{0}', space=vmem, size = 0x10000, scoped, tag = 'input window, operand 3, single buffered']
    #allocation8 [shape = 's32[1]{0}', space=sflag, size = 0x4, scoped, tag = 'scoped memory for forward.1']
    #allocation9 [shape = 'u8[2048]{0}', space=vmem, size = 0x800, scoped, tag = 'input window, operand 4, single buffered']
    #allocation10 [shape = 'u8[262144]{0}', space=vmem, size = 0x40000, scoped, tag = 'input window, operand 6, single buffered']
    #allocation11 [shape = 's32[1]{0}', space=sflag, size = 0x4, scoped, tag = 'scoped memory for forward.1']
    #allocation12 [shape = 'u8[262144]{0}', space=vmem, size = 0x40000, scoped, tag = 'input window, operand 7, single buffered']
    #allocation13 [shape = 'u8[32768]{0}', space=vmem, size = 0x8000, scoped, tag = 'input window, operand 8, single buffered']
    #allocation14 [shape = 's32[1]{0}', space=sflag, size = 0x4, scoped, tag = 'scoped memory for forward.1']
    #allocation15 [shape = 'u8[512]{0}', space=vmem, size = 0x400, scoped, tag = 'input window, operand 11, single buffered']
    %17 = vsyncpa [#allocation3], 0
    %18 = vsyncpa [#allocation5], 0
    %19 = vsyncpa [#allocation8], 0
    %20 = vsyncpa [#allocation11], 0
    %21 = vsyncpa [#allocation14], 0
    // Predicated region
    $region2: #{forward.1} parent=1 // pred_check
      _
    $region3: #{forward.1} parent=1 // pred_check_branch
      %23 = sbr.rel (0) target = $region5
    $region4: #{forward.1} parent=1 // pred_region
      %s25 = ssub.s32 128, 128
      %26 = vsyncadd [#allocation3], %s25
      %s28 = sshll.u32 [#allocation2], 4
      %s29 = int_to_ptr.vmem [resolvable:$true] %s28
      %31 = dma.hbm_to_vmem [thread:$0]  %s0, 128, %s29, [#allocation3]
    $region5: #{forward.1} parent=1 // pred_fallthru
      _
    // Predicated region
    $region6: #{forward.1} parent=1 // pred_check
      _
    $region7: #{forward.1} parent=1 // pred_check_branch
      %33 = sbr.rel (0) target = $region9
    $region8: #{forward.1} parent=1 // pred_region
      %s35 = ssub.s32 128, 128
      %36 = vsyncadd [#allocation5], %s35
      %s37 = sshll.u32 [#allocation4], 4
      %s38 = int_to_ptr.vmem [resolvable:$true] %s37
      %43 = dma.hbm_to_vmem [thread:$0]  %s1, 128, %s38, [#allocation5], 64, 64, 4
    $region9: #{forward.1} parent=1 // pred_fallthru
      _
    // Predicated region
    $region10: #{forward.1} parent=1 // pred_check
      _
    $region11: #{forward.1} parent=1 // pred_check_branch
      %45 = sbr.rel (0) target = $region13
    $region12: #{forward.1} parent=1 // pred_region
      %s47 = ssub.s32 16, 16
      %48 = vsyncadd [#allocation5], %s47
      %s50 = sshll.u32 [#allocation6], 4
      %s51 = int_to_ptr.vmem [resolvable:$true] %s50
      %53 = dma.hbm_to_vmem [thread:$0]  %s2, 16, %s51, [#allocation5]
    $region13: #{forward.1} parent=1 // pred_fallthru
      _
    // Predicated region
    $region14: #{forward.1} parent=1 // pred_check
      _
    $region15: #{forward.1} parent=1 // pred_check_branch
      %55 = sbr.rel (0) target = $region17
    $region16: #{forward.1} parent=1 // pred_region
      %s57 = ssub.s32 2048, 2048
      %58 = vsyncadd [#allocation8], %s57
      %s59 = sshll.u32 [#allocation7], 4
      %s60 = int_to_ptr.vmem [resolvable:$true] %s59
      %65 = dma.hbm_to_vmem [thread:$0]  %s3, 2048, %s60, [#allocation8], 128, 128, 8
    $region17: #{forward.1} parent=1 // pred_fallthru
      _
    // Predicated region
    $region18: #{forward.1} parent=1 // pred_check
      _
    $region19: #{forward.1} parent=1 // pred_check_branch
      %67 = sbr.rel (0) target = $region21
    $region20: #{forward.1} parent=1 // pred_region
      %s69 = ssub.s32 64, 64
      %70 = vsyncadd [#allocation8], %s69
      %s72 = sshll.u32 [#allocation9], 4
      %s73 = int_to_ptr.vmem [resolvable:$true] %s72
      %75 = dma.hbm_to_vmem [thread:$0]  %s4, 64, %s73, [#allocation8]
    $region21: #{forward.1} parent=1 // pred_fallthru
      _
    // Predicated region
    $region22: #{forward.1} parent=1 // pred_check
      _
    $region23: #{forward.1} parent=1 // pred_check_branch
      %77 = sbr.rel (0) target = $region25
    $region24: #{forward.1} parent=1 // pred_region
      _
    $region25: #{forward.1} parent=1 // pred_fallthru
      _
    // Predicated region
    $region26: #{forward.1} parent=1 // pred_check
      _
    $region27: #{forward.1} parent=1 // pred_check_branch
      %79 = sbr.rel (0) target = $region29
    $region28: #{forward.1} parent=1 // pred_region
      %s81 = ssub.s32 8192, 8192
      %82 = vsyncadd [#allocation11], %s81
      %s83 = sshll.u32 [#allocation10], 4
      %s84 = int_to_ptr.vmem [resolvable:$true] %s83
      %89 = dma.hbm_to_vmem [thread:$0]  %s6, 8192, %s84, [#allocation11], 2048, 2048, 128
    $region29: #{forward.1} parent=1 // pred_fallthru
      _
    // Predicated region
    $region30: #{forward.1} parent=1 // pred_check
      _
    $region31: #{forward.1} parent=1 // pred_check_branch
      %91 = sbr.rel (0) target = $region33
    $region32: #{forward.1} parent=1 // pred_region
      %s93 = ssub.s32 8192, 8192
      %94 = vsyncadd [#allocation11], %s93
      %s95 = sshll.u32 [#allocation12], 4
      %s96 = int_to_ptr.vmem [resolvable:$true] %s95
      %101 = dma.hbm_to_vmem [thread:$0]  %s7, 8192, %s96, [#allocation11], 128, 128, 8
    $region33: #{forward.1} parent=1 // pred_fallthru
      _
    // Predicated region
    $region34: #{forward.1} parent=1 // pred_check
      _
    $region35: #{forward.1} parent=1 // pred_check_branch
      %103 = sbr.rel (0) target = $region37
    $region36: #{forward.1} parent=1 // pred_region
      %s105 = ssub.s32 1024, 1024
      %106 = vsyncadd [#allocation14], %s105
      %s108 = sshll.u32 [#allocation13], 4
      %s109 = int_to_ptr.vmem [resolvable:$true] %s108
      %111 = dma.hbm_to_vmem [thread:$0]  %s8, 1024, %s109, [#allocation14]
    $region37: #{forward.1} parent=1 // pred_fallthru
      _
    // Predicated region
    $region38: #{forward.1} parent=1 // pred_check
      _
    $region39: #{forward.1} parent=1 // pred_check_branch
      %113 = sbr.rel (0) target = $region41
    $region40: #{forward.1} parent=1 // pred_region
      _
    $region41: #{forward.1} parent=1 // pred_fallthru
      _
    // Predicated region
    $region42: #{forward.1} parent=1 // pred_check
      _
    $region43: #{forward.1} parent=1 // pred_check_branch
      %115 = sbr.rel (0) target = $region45
    $region44: #{forward.1} parent=1 // pred_region
      _
    $region45: #{forward.1} parent=1 // pred_fallthru
      _
    // Predicated region
    $region46: #{forward.1} parent=1 // pred_check
      _
    $region47: #{forward.1} parent=1 // pred_check_branch
      %117 = sbr.rel (0) target = $region49
    $region48: #{forward.1} parent=1 // pred_region
      %s119 = ssub.s32 16, 16
      %120 = vsyncadd [#allocation14], %s119
      %s122 = sshll.u32 [#allocation15], 4
      %s123 = int_to_ptr.vmem [resolvable:$true] %s122
      %125 = dma.hbm_to_vmem [thread:$0]  %s11, 16, %s123, [#allocation14]
    $region49: #{forward.1} parent=1 // pred_fallthru
      _
    // Predicated region
    $region50: #{forward.1} parent=1 // pred_check
      _
    $region51: #{forward.1} parent=1 // pred_check_branch
      %127 = sbr.rel (0) target = $region53
    $region52: #{forward.1} parent=1 // pred_region
      %128 = dma.done [#allocation3], 128
    $region53: #{forward.1} parent=1 // pred_fallthru
      _
    // Predicated region
    $region54: #{forward.1} parent=1 // pred_check
      _
    $region55: #{forward.1} parent=1 // pred_check_branch
      %130 = sbr.rel (0) target = $region57
    $region56: #{forward.1} parent=1 // pred_region
      %131 = dma.done [#allocation5], 128
    $region57: #{forward.1} parent=1 // pred_fallthru
      _
    // Predicated region
    $region58: #{forward.1} parent=1 // pred_check
      _
    $region59: #{forward.1} parent=1 // pred_check_branch
      %133 = sbr.rel (0) target = $region61
    $region60: #{forward.1} parent=1 // pred_region
      %134 = dma.done [#allocation5], 16
    $region61: #{forward.1} parent=1 // pred_fallthru
      _
    // Predicated region
    $region62: #{forward.1} parent=1 // pred_check
      _
    $region63: #{forward.1} parent=1 // pred_check_branch
      %136 = sbr.rel (0) target = $region65
    $region64: #{forward.1} parent=1 // pred_region
      %137 = dma.done [#allocation8], 2048
    $region65: #{forward.1} parent=1 // pred_fallthru
      _
    // Predicated region
    $region66: #{forward.1} parent=1 // pred_check
      _
    $region67: #{forward.1} parent=1 // pred_check_branch
      %139 = sbr.rel (0) target = $region69
    $region68: #{forward.1} parent=1 // pred_region
      %140 = dma.done [#allocation8], 64
    $region69: #{forward.1} parent=1 // pred_fallthru
      _
    // Predicated region
    $region70: #{forward.1} parent=1 // pred_check
      _
    $region71: #{forward.1} parent=1 // pred_check_branch
      %142 = sbr.rel (0) target = $region73
    $region72: #{forward.1} parent=1 // pred_region
      %143 = dma.done [#allocation11], 8192
    $region73: #{forward.1} parent=1 // pred_fallthru
      _
    // Predicated region
    $region74: #{forward.1} parent=1 // pred_check
      _
    $region75: #{forward.1} parent=1 // pred_check_branch
      %145 = sbr.rel (0) target = $region77
    $region76: #{forward.1} parent=1 // pred_region
      %146 = dma.done [#allocation11], 8192
    $region77: #{forward.1} parent=1 // pred_fallthru
      _
    // Predicated region
    $region78: #{forward.1} parent=1 // pred_check
      _
    $region79: #{forward.1} parent=1 // pred_check_branch
      %148 = sbr.rel (0) target = $region81
    $region80: #{forward.1} parent=1 // pred_region
      %149 = dma.done [#allocation14], 1024
    $region81: #{forward.1} parent=1 // pred_fallthru
      _
    // Predicated region
    $region82: #{forward.1} parent=1 // pred_check
      _
    $region83: #{forward.1} parent=1 // pred_check_branch
      %151 = sbr.rel (0) target = $region85
    $region84: #{forward.1} parent=1 // pred_region
      %152 = dma.done [#allocation14], 16
    $region85: #{forward.1} parent=1 // pred_fallthru
      _
    %v154 = vld [vmem:[#allocation2] sm:$0xff]
    %v155 = vld [vmem:[#allocation4] sm:$0xf]
    %v156 = vld [vmem:[#allocation4 + $0x4] sm:$0xf]
    %v157 = vpack.c.bf16 %v154, %v154
    %v158 = vld [vmem:[#allocation6] sm:$0x1]
    %v160 = vlaneseq
    %v161 = vshrl.u32 %v160, 7
    %v162 = vsub.s32 0, %v161
    %v163 = vrot.slane %v158, %v162
    %v167 = vunpack.c.l.b16 %v155
    %v168 = vunpack.c.l.b16 %v156
    %v169 = vpack.c.b16 %v168, %v167
    %vm171 = vcmask 130048
    %v173 = vsel %vm171, %v157, 0
    %175 = vmatprep.subr.bf16.mxu0 0
    %176 = vmatpush1.bf16.msra.mxu0 %v169
    %177 = vmatprep.subr.bf16.mxu0 0
    %178 = vmatpush1.bf16.msra.mxu0 0
    %179 = vmatprep.subr.bf16.mxu0 0
    %180 = vmatpush1.bf16.msra.mxu0 0
    %181 = vmatprep.subr.bf16.mxu0 0
    %182 = vmatpush1.bf16.msra.mxu0 0
    %183 = vmatprep.subr.bf16.mxu0 0
    %184 = vmatpush1.bf16.msra.mxu0 0
    %185 = vmatprep.subr.bf16.mxu0 0
    %186 = vmatpush1.bf16.msra.mxu0 0
    %187 = vmatprep.subr.bf16.mxu0 0
    %188 = vmatpush1.bf16.msra.mxu0 0
    %189 = vmatprep.subr.bf16.mxu0 0
    %190 = vmatpush1.bf16.msra.mxu0 0
    %191 = vmatprep.subr.bf16.mxu0 0
    %192 = vmatpush1.bf16.msra.mxu0 0
    %193 = vmatprep.subr.bf16.mxu0 0
    %194 = vmatpush1.bf16.msra.mxu0 0
    %195 = vmatprep.subr.bf16.mxu0 0
    %196 = vmatpush1.bf16.msra.mxu0 0
    %197 = vmatprep.subr.bf16.mxu0 0
    %198 = vmatpush1.bf16.msra.mxu0 0
    %199 = vmatprep.subr.bf16.mxu0 0
    %200 = vmatpush1.bf16.msra.mxu0 0
    %201 = vmatprep.subr.bf16.mxu0 0
    %202 = vmatpush1.bf16.msra.mxu0 0
    %203 = vmatprep.subr.bf16.mxu0 0
    %204 = vmatpush1.bf16.msra.mxu0 0
    %205 = vmatprep.subr.bf16.mxu0 0
    %206 = vmatpush1.bf16.msra.mxu0 0
    %207 = vmatprep.mubr.bf16.mxu0 0
    %208 = vmatmul.mubr.bf16.gmra.mrb[0].mxu0 %v173
    %v209 = vpop.f32.mrb[0].mxu0
    %v210 = vadd.f32 %v163, %v209
    %v211 = vpop.f32.mrb[0].mxu0
    %v212 = vpop.f32.mrb[0].mxu0
    %v213 = vpop.f32.mrb[0].mxu0
    %214 = vdwg.mxu0
    %v215 = vld [vmem:[#allocation12] sm:$0xff]
    %v216 = vld [vmem:[#allocation12 + $0x8] sm:$0xff]
    %v217 = vld [vmem:[#allocation12 + $0x10] sm:$0xff]
    %v218 = vld [vmem:[#allocation12 + $0x18] sm:$0xff]
    %v219 = vld [vmem:[#allocation12 + $0x20] sm:$0xff]
    %v220 = vld [vmem:[#allocation12 + $0x28] sm:$0xff]
    %v221 = vld [vmem:[#allocation12 + $0x30] sm:$0xff]
    %v222 = vld [vmem:[#allocation12 + $0x38] sm:$0xff]
    %v223 = vld [vmem:[#allocation12 + $0x40] sm:$0xff]
    %v224 = vld [vmem:[#allocation12 + $0x48] sm:$0xff]
    %v225 = vld [vmem:[#allocation12 + $0x50] sm:$0xff]
    %v226 = vld [vmem:[#allocation12 + $0x58] sm:$0xff]
    %v227 = vld [vmem:[#allocation12 + $0x60] sm:$0xff]
    %v228 = vld [vmem:[#allocation12 + $0x68] sm:$0xff]
    %v229 = vld [vmem:[#allocation12 + $0x70] sm:$0xff]
    %v230 = vld [vmem:[#allocation12 + $0x78] sm:$0xff]
    %v231 = vld [vmem:[#allocation12 + $0x80] sm:$0xff]
    %v232 = vld [vmem:[#allocation12 + $0x88] sm:$0xff]
    %v233 = vld [vmem:[#allocation12 + $0x90] sm:$0xff]
    %v234 = vld [vmem:[#allocation12 + $0x98] sm:$0xff]
    %v235 = vld [vmem:[#allocation12 + $0xa0] sm:$0xff]
    %v236 = vld [vmem:[#allocation12 + $0xa8] sm:$0xff]
    %v237 = vld [vmem:[#allocation12 + $0xb0] sm:$0xff]
    %v238 = vld [vmem:[#allocation12 + $0xb8] sm:$0xff]
    %v239 = vld [vmem:[#allocation12 + $0xc0] sm:$0xff]
    %v240 = vld [vmem:[#allocation12 + $0xc8] sm:$0xff]
    %v241 = vld [vmem:[#allocation12 + $0xd0] sm:$0xff]
    %v242 = vld [vmem:[#allocation12 + $0xd8] sm:$0xff]
    %v243 = vld [vmem:[#allocation12 + $0xe0] sm:$0xff]
    %v244 = vld [vmem:[#allocation12 + $0xe8] sm:$0xff]
    %v245 = vld [vmem:[#allocation12 + $0xf0] sm:$0xff]
    %v246 = vld [vmem:[#allocation12 + $0xf8] sm:$0xff]
    %v247 = vld [vmem:[#allocation12 + $0x100] sm:$0xff]
    %v248 = vld [vmem:[#allocation12 + $0x108] sm:$0xff]
    %v249 = vld [vmem:[#allocation12 + $0x110] sm:$0xff]
    %v250 = vld [vmem:[#allocation12 + $0x118] sm:$0xff]
    %v251 = vld [vmem:[#allocation12 + $0x120] sm:$0xff]
    %v252 = vld [vmem:[#allocation12 + $0x128] sm:$0xff]
    %v253 = vld [vmem:[#allocation12 + $0x130] sm:$0xff]
    %v254 = vld [vmem:[#allocation12 + $0x138] sm:$0xff]
    %v255 = vld [vmem:[#allocation12 + $0x140] sm:$0xff]
    %v256 = vld [vmem:[#allocation12 + $0x148] sm:$0xff]
    %v257 = vld [vmem:[#allocation12 + $0x150] sm:$0xff]
    %v258 = vld [vmem:[#allocation12 + $0x158] sm:$0xff]
    %v259 = vld [vmem:[#allocation12 + $0x160] sm:$0xff]
    %v260 = vld [vmem:[#allocation12 + $0x168] sm:$0xff]
    %v261 = vld [vmem:[#allocation12 + $0x170] sm:$0xff]
    %v262 = vld [vmem:[#allocation12 + $0x178] sm:$0xff]
    %v263 = vld [vmem:[#allocation12 + $0x180] sm:$0xff]
    %v264 = vld [vmem:[#allocation12 + $0x188] sm:$0xff]
    %v265 = vld [vmem:[#allocation12 + $0x190] sm:$0xff]
    %v266 = vld [vmem:[#allocation12 + $0x198] sm:$0xff]
    %v267 = vld [vmem:[#allocation12 + $0x1a0] sm:$0xff]
    %v268 = vld [vmem:[#allocation12 + $0x1a8] sm:$0xff]
    %v269 = vld [vmem:[#allocation12 + $0x1b0] sm:$0xff]
    %v270 = vld [vmem:[#allocation12 + $0x1b8] sm:$0xff]
    %v271 = vld [vmem:[#allocation12 + $0x1c0] sm:$0xff]
    %v272 = vld [vmem:[#allocation12 + $0x1c8] sm:$0xff]
    %v273 = vld [vmem:[#allocation12 + $0x1d0] sm:$0xff]
    %v274 = vld [vmem:[#allocation12 + $0x1d8] sm:$0xff]
    %v275 = vld [vmem:[#allocation12 + $0x1e0] sm:$0xff]
    %v276 = vld [vmem:[#allocation12 + $0x1e8] sm:$0xff]
    %v277 = vld [vmem:[#allocation12 + $0x1f0] sm:$0xff]
    %v278 = vld [vmem:[#allocation12 + $0x1f8] sm:$0xff]
    %v279 = vunpack.c.l.s8.bf16 %v215
    %v280 = vunpack.c.h.s8.bf16 %v215
    %v281 = vunpack.c.l.s8.bf16 %v216
    %v282 = vunpack.c.h.s8.bf16 %v216
    %v283 = vunpack.c.l.s8.bf16 %v217
    %v284 = vunpack.c.h.s8.bf16 %v217
    %v285 = vunpack.c.l.s8.bf16 %v218
    %v286 = vunpack.c.h.s8.bf16 %v218
    %v287 = vunpack.c.l.s8.bf16 %v219
    %v288 = vunpack.c.h.s8.bf16 %v219
    %v289 = vunpack.c.l.s8.bf16 %v220
    %v290 = vunpack.c.h.s8.bf16 %v220
    %v291 = vunpack.c.l.s8.bf16 %v221
    %v292 = vunpack.c.h.s8.bf16 %v221
    %v293 = vunpack.c.l.s8.bf16 %v222
    %v294 = vunpack.c.h.s8.bf16 %v222
    %v295 = vunpack.c.l.s8.bf16 %v223
    %v296 = vunpack.c.h.s8.bf16 %v223
    %v297 = vunpack.c.l.s8.bf16 %v224
    %v298 = vunpack.c.h.s8.bf16 %v224
    %v299 = vunpack.c.l.s8.bf16 %v225
    %v300 = vunpack.c.h.s8.bf16 %v225
    %v301 = vunpack.c.l.s8.bf16 %v226
    %v302 = vunpack.c.h.s8.bf16 %v226
    %v303 = vunpack.c.l.s8.bf16 %v227
    %v304 = vunpack.c.h.s8.bf16 %v227
    %v305 = vunpack.c.l.s8.bf16 %v228
    %v306 = vunpack.c.h.s8.bf16 %v228
    %v307 = vunpack.c.l.s8.bf16 %v229
    %v308 = vunpack.c.h.s8.bf16 %v229
    %v309 = vunpack.c.l.s8.bf16 %v230
    %v310 = vunpack.c.h.s8.bf16 %v230
    %v311 = vunpack.c.l.s8.bf16 %v231
    %v312 = vunpack.c.h.s8.bf16 %v231
    %v313 = vunpack.c.l.s8.bf16 %v232
    %v314 = vunpack.c.h.s8.bf16 %v232
    %v315 = vunpack.c.l.s8.bf16 %v233
    %v316 = vunpack.c.h.s8.bf16 %v233
    %v317 = vunpack.c.l.s8.bf16 %v234
    %v318 = vunpack.c.h.s8.bf16 %v234
    %v319 = vunpack.c.l.s8.bf16 %v235
    %v320 = vunpack.c.h.s8.bf16 %v235
    %v321 = vunpack.c.l.s8.bf16 %v236
    %v322 = vunpack.c.h.s8.bf16 %v236
    %v323 = vunpack.c.l.s8.bf16 %v237
    %v324 = vunpack.c.h.s8.bf16 %v237
    %v325 = vunpack.c.l.s8.bf16 %v238
    %v326 = vunpack.c.h.s8.bf16 %v238
    %v327 = vunpack.c.l.s8.bf16 %v239
    %v328 = vunpack.c.h.s8.bf16 %v239
    %v329 = vunpack.c.l.s8.bf16 %v240
    %v330 = vunpack.c.h.s8.bf16 %v240
    %v331 = vunpack.c.l.s8.bf16 %v241
    %v332 = vunpack.c.h.s8.bf16 %v241
    %v333 = vunpack.c.l.s8.bf16 %v242
    %v334 = vunpack.c.h.s8.bf16 %v242
    %v335 = vunpack.c.l.s8.bf16 %v243
    %v336 = vunpack.c.h.s8.bf16 %v243
    %v337 = vunpack.c.l.s8.bf16 %v244
    %v338 = vunpack.c.h.s8.bf16 %v244
    %v339 = vunpack.c.l.s8.bf16 %v245
    %v340 = vunpack.c.h.s8.bf16 %v245
    %v341 = vunpack.c.l.s8.bf16 %v246
    %v342 = vunpack.c.h.s8.bf16 %v246
    %v343 = vunpack.c.l.s8.bf16 %v247
    %v344 = vunpack.c.h.s8.bf16 %v247
    %v345 = vunpack.c.l.s8.bf16 %v248
    %v346 = vunpack.c.h.s8.bf16 %v248
    %v347 = vunpack.c.l.s8.bf16 %v249
    %v348 = vunpack.c.h.s8.bf16 %v249
    %v349 = vunpack.c.l.s8.bf16 %v250
    %v350 = vunpack.c.h.s8.bf16 %v250
    %v351 = vunpack.c.l.s8.bf16 %v251
    %v352 = vunpack.c.h.s8.bf16 %v251
    %v353 = vunpack.c.l.s8.bf16 %v252
    %v354 = vunpack.c.h.s8.bf16 %v252
    %v355 = vunpack.c.l.s8.bf16 %v253
    %v356 = vunpack.c.h.s8.bf16 %v253
    %v357 = vunpack.c.l.s8.bf16 %v254
    %v358 = vunpack.c.h.s8.bf16 %v254
    %v359 = vunpack.c.l.s8.bf16 %v255
    %v360 = vunpack.c.h.s8.bf16 %v255
    %v361 = vunpack.c.l.s8.bf16 %v256
    %v362 = vunpack.c.h.s8.bf16 %v256
    %v363 = vunpack.c.l.s8.bf16 %v257
    %v364 = vunpack.c.h.s8.bf16 %v257
    %v365 = vunpack.c.l.s8.bf16 %v258
    %v366 = vunpack.c.h.s8.bf16 %v258
    %v367 = vunpack.c.l.s8.bf16 %v259
    %v368 = vunpack.c.h.s8.bf16 %v259
    %v369 = vunpack.c.l.s8.bf16 %v260
    %v370 = vunpack.c.h.s8.bf16 %v260
    %v371 = vunpack.c.l.s8.bf16 %v261
    %v372 = vunpack.c.h.s8.bf16 %v261
    %v373 = vunpack.c.l.s8.bf16 %v262
    %v374 = vunpack.c.h.s8.bf16 %v262
    %v375 = vunpack.c.l.s8.bf16 %v263
    %v376 = vunpack.c.h.s8.bf16 %v263
    %v377 = vunpack.c.l.s8.bf16 %v264
    %v378 = vunpack.c.h.s8.bf16 %v264
    %v379 = vunpack.c.l.s8.bf16 %v265
    %v380 = vunpack.c.h.s8.bf16 %v265
    %v381 = vunpack.c.l.s8.bf16 %v266
    %v382 = vunpack.c.h.s8.bf16 %v266
    %v383 = vunpack.c.l.s8.bf16 %v267
    %v384 = vunpack.c.h.s8.bf16 %v267
    %v385 = vunpack.c.l.s8.bf16 %v268
    %v386 = vunpack.c.h.s8.bf16 %v268
    %v387 = vunpack.c.l.s8.bf16 %v269
    %v388 = vunpack.c.h.s8.bf16 %v269
    %v389 = vunpack.c.l.s8.bf16 %v270
    %v390 = vunpack.c.h.s8.bf16 %v270
    %v391 = vunpack.c.l.s8.bf16 %v271
    %v392 = vunpack.c.h.s8.bf16 %v271
    %v393 = vunpack.c.l.s8.bf16 %v272
    %v394 = vunpack.c.h.s8.bf16 %v272
    %v395 = vunpack.c.l.s8.bf16 %v273
    %v396 = vunpack.c.h.s8.bf16 %v273
    %v397 = vunpack.c.l.s8.bf16 %v274
    %v398 = vunpack.c.h.s8.bf16 %v274
    %v399 = vunpack.c.l.s8.bf16 %v275
    %v400 = vunpack.c.h.s8.bf16 %v275
    %v401 = vunpack.c.l.s8.bf16 %v276
    %v402 = vunpack.c.h.s8.bf16 %v276
    %v403 = vunpack.c.l.s8.bf16 %v277
    %v404 = vunpack.c.h.s8.bf16 %v277
    %v405 = vunpack.c.l.s8.bf16 %v278
    %v406 = vunpack.c.h.s8.bf16 %v278
    %v407 = vld [vmem:[%s5] sm:$0xf]
    %v408 = vld [vmem:[%s5 + $0x4] sm:$0xf]
    %v409 = vld [vmem:[%s5 + $0x8] sm:$0xf]
    %v410 = vld [vmem:[%s5 + $0xc] sm:$0xf]
    %v411 = vld [vmem:[%s5 + $0x10] sm:$0xf]
    %v412 = vld [vmem:[%s5 + $0x14] sm:$0xf]
    %v413 = vld [vmem:[%s5 + $0x18] sm:$0xf]
    %v414 = vld [vmem:[%s5 + $0x1c] sm:$0xf]
    %v415 = vld [vmem:[#allocation7] sm:$0xff]
    %v416 = vld [vmem:[#allocation7 + $0x8] sm:$0xff]
    %v417 = vld [vmem:[#allocation7 + $0x10] sm:$0xff]
    %v418 = vld [vmem:[#allocation7 + $0x18] sm:$0xff]
    %v419 = vld [vmem:[#allocation7 + $0x20] sm:$0xff]
    %v420 = vld [vmem:[#allocation7 + $0x28] sm:$0xff]
    %v421 = vld [vmem:[#allocation7 + $0x30] sm:$0xff]
    %v422 = vld [vmem:[#allocation7 + $0x38] sm:$0xff]
    %v423 = vld [vmem:[#allocation9] ss:$2 sm:$0x3]
    %v424 = vld [vmem:[#allocation10] sm:$0xff]
    %v425 = vld [vmem:[#allocation10 + $0x8] sm:$0xff]
    %v426 = vld [vmem:[#allocation10 + $0x10] sm:$0xff]
    %v427 = vld [vmem:[#allocation10 + $0x18] sm:$0xff]
    %v428 = vld [vmem:[#allocation10 + $0x20] sm:$0xff]
    %v429 = vld [vmem:[#allocation10 + $0x28] sm:$0xff]
    %v430 = vld [vmem:[#allocation10 + $0x30] sm:$0xff]
    %v431 = vld [vmem:[#allocation10 + $0x38] sm:$0xff]
    %v432 = vld [vmem:[#allocation10 + $0x40] sm:$0xff]
    %v433 = vld [vmem:[#allocation10 + $0x48] sm:$0xff]
    %v434 = vld [vmem:[#allocation10 + $0x50] sm:$0xff]
    %v435 = vld [vmem:[#allocation10 + $0x58] sm:$0xff]
    %v436 = vld [vmem:[#allocation10 + $0x60] sm:$0xff]
    %v437 = vld [vmem:[#allocation10 + $0x68] sm:$0xff]
    %v438 = vld [vmem:[#allocation10 + $0x70] sm:$0xff]
    %v439 = vld [vmem:[#allocation10 + $0x78] sm:$0xff]
    %v440 = vld [vmem:[#allocation10 + $0x80] sm:$0xff]
    %v441 = vld [vmem:[#allocation10 + $0x88] sm:$0xff]
    %v442 = vld [vmem:[#allocation10 + $0x90] sm:$0xff]
    %v443 = vld [vmem:[#allocation10 + $0x98] sm:$0xff]
    %v444 = vld [vmem:[#allocation10 + $0xa0] sm:$0xff]
    %v445 = vld [vmem:[#allocation10 + $0xa8] sm:$0xff]
    %v446 = vld [vmem:[#allocation10 + $0xb0] sm:$0xff]
    %v447 = vld [vmem:[#allocation10 + $0xb8] sm:$0xff]
    %v448 = vld [vmem:[#allocation10 + $0xc0] sm:$0xff]
    %v449 = vld [vmem:[#allocation10 + $0xc8] sm:$0xff]
    %v450 = vld [vmem:[#allocation10 + $0xd0] sm:$0xff]
    %v451 = vld [vmem:[#allocation10 + $0xd8] sm:$0xff]
    %v452 = vld [vmem:[#allocation10 + $0xe0] sm:$0xff]
    %v453 = vld [vmem:[#allocation10 + $0xe8] sm:$0xff]
    %v454 = vld [vmem:[#allocation10 + $0xf0] sm:$0xff]
    %v455 = vld [vmem:[#allocation10 + $0xf8] sm:$0xff]
    %v456 = vunpack.c.l.s8.bf16 %v424
    %v457 = vunpack.c.l.s8.bf16 %v425
    %v458 = vunpack.c.l.s8.bf16 %v426
    %v459 = vunpack.c.l.s8.bf16 %v427
    %v460 = vunpack.c.l.s8.bf16 %v428
    %v461 = vunpack.c.l.s8.bf16 %v429
    %v462 = vunpack.c.l.s8.bf16 %v430
    %v463 = vunpack.c.l.s8.bf16 %v431
    %v464 = vunpack.c.l.s8.bf16 %v432
    %v465 = vunpack.c.l.s8.bf16 %v433
    %v466 = vunpack.c.l.s8.bf16 %v434
    %v467 = vunpack.c.l.s8.bf16 %v435
    %v468 = vunpack.c.l.s8.bf16 %v436
    %v469 = vunpack.c.l.s8.bf16 %v437
    %v470 = vunpack.c.l.s8.bf16 %v438
    %v471 = vunpack.c.l.s8.bf16 %v439
    %v472 = vunpack.c.h.s8.bf16 %v424
    %v473 = vunpack.c.h.s8.bf16 %v425
    %v474 = vunpack.c.h.s8.bf16 %v426
    %v475 = vunpack.c.h.s8.bf16 %v427
    %v476 = vunpack.c.h.s8.bf16 %v428
    %v477 = vunpack.c.h.s8.bf16 %v429
    %v478 = vunpack.c.h.s8.bf16 %v430
    %v479 = vunpack.c.h.s8.bf16 %v431
    %v480 = vunpack.c.h.s8.bf16 %v432
    %v481 = vunpack.c.h.s8.bf16 %v433
    %v482 = vunpack.c.h.s8.bf16 %v434
    %v483 = vunpack.c.h.s8.bf16 %v435
    %v484 = vunpack.c.h.s8.bf16 %v436
    %v485 = vunpack.c.h.s8.bf16 %v437
    %v486 = vunpack.c.h.s8.bf16 %v438
    %v487 = vunpack.c.h.s8.bf16 %v439
    %v488 = vunpack.c.l.s8.bf16 %v440
    %v489 = vunpack.c.l.s8.bf16 %v441
    %v490 = vunpack.c.l.s8.bf16 %v442
    %v491 = vunpack.c.l.s8.bf16 %v443
    %v492 = vunpack.c.l.s8.bf16 %v444
    %v493 = vunpack.c.l.s8.bf16 %v445
    %v494 = vunpack.c.l.s8.bf16 %v446
    %v495 = vunpack.c.l.s8.bf16 %v447
    %v496 = vunpack.c.l.s8.bf16 %v448
    %v497 = vunpack.c.l.s8.bf16 %v449
    %v498 = vunpack.c.l.s8.bf16 %v450
    %v499 = vunpack.c.l.s8.bf16 %v451
    %v500 = vunpack.c.l.s8.bf16 %v452
    %v501 = vunpack.c.l.s8.bf16 %v453
    %v502 = vunpack.c.l.s8.bf16 %v454
    %v503 = vunpack.c.l.s8.bf16 %v455
    %v504 = vunpack.c.h.s8.bf16 %v440
    %v505 = vunpack.c.h.s8.bf16 %v441
    %v506 = vunpack.c.h.s8.bf16 %v442
    %v507 = vunpack.c.h.s8.bf16 %v443
    %v508 = vunpack.c.h.s8.bf16 %v444
    %v509 = vunpack.c.h.s8.bf16 %v445
    %v510 = vunpack.c.h.s8.bf16 %v446
    %v511 = vunpack.c.h.s8.bf16 %v447
    %v512 = vunpack.c.h.s8.bf16 %v448
    %v513 = vunpack.c.h.s8.bf16 %v449
    %v514 = vunpack.c.h.s8.bf16 %v450
    %v515 = vunpack.c.h.s8.bf16 %v451
    %v516 = vunpack.c.h.s8.bf16 %v452
    %v517 = vunpack.c.h.s8.bf16 %v453
    %v518 = vunpack.c.h.s8.bf16 %v454
    %v519 = vunpack.c.h.s8.bf16 %v455
    %v520 = vld [vmem:[#allocation13] ss:$4 sm:$0xff]
    %s521 = scalar_lea.vmem [#allocation13], 32
    %v522 = vld [vmem:[%s521] ss:$4 sm:$0xff]
    %s523 = scalar_lea.vmem [#allocation13], 1
    %v524 = vld [vmem:[%s523] ss:$4 sm:$0xff]
    %s525 = scalar_lea.vmem [#allocation13], 33
    %v526 = vld [vmem:[%s525] ss:$4 sm:$0xff]
    %v527 = vld [vmem:[%s9] sm:$0x7f]
    %v528 = vpack.c.bf16 %v210, %v210
    %v530 = vlaneseq
    %v531 = vshrl.u32 %v530, 7
    %v532 = vsub.s32 0, %v531
    %v533 = vrot.slane %v423, %v532
    %v534 = vlaneseq
    %v535 = vshrl.u32 %v534, 7
    %v536 = vsub.s32 1, %v535
    %v537 = vrot.slane %v423, %v536
    %v548 = vunpack.c.l.b16 %v415
    %v549 = vunpack.c.h.b16 %v415
    %v550 = vunpack.c.l.b16 %v416
    %v551 = vunpack.c.h.b16 %v416
    %v552 = vunpack.c.l.b16 %v417
    %v553 = vunpack.c.h.b16 %v417
    %v554 = vunpack.c.l.b16 %v418
    %v555 = vunpack.c.h.b16 %v418
    %v556 = vunpack.c.l.b16 %v419
    %v557 = vunpack.c.h.b16 %v419
    %v558 = vunpack.c.l.b16 %v420
    %v559 = vunpack.c.h.b16 %v420
    %v560 = vunpack.c.l.b16 %v421
    %v561 = vunpack.c.h.b16 %v421
    %v562 = vunpack.c.l.b16 %v422
    %v563 = vunpack.c.h.b16 %v422
    %v564 = vpack.c.b16 %v550, %v548
    %v565 = vpack.c.b16 %v551, %v549
    %v566 = vpack.c.b16 %v554, %v552
    %v567 = vpack.c.b16 %v555, %v553
    %v568 = vpack.c.b16 %v558, %v556
    %v569 = vpack.c.b16 %v559, %v557
    %v570 = vpack.c.b16 %v562, %v560
    %v571 = vpack.c.b16 %v563, %v561
    %vm580 = vcmask 523264
    %v582 = vsel %vm580, %v528, 0
    %584 = vmatprep.subr.bf16.mxu0 %v565
    %585 = vmatpush1.bf16.msra.mxu0 %v564
    %586 = vmatprep.subr.bf16.mxu0 %v567
    %587 = vmatpush1.bf16.msra.mxu0 %v566
    %588 = vmatprep.subr.bf16.mxu0 %v569
    %589 = vmatpush1.bf16.msra.mxu0 %v568
    %590 = vmatprep.subr.bf16.mxu0 %v571
    %591 = vmatpush1.bf16.msra.mxu0 %v570
    %592 = vmatprep.subr.bf16.mxu0 0
    %593 = vmatpush1.bf16.msra.mxu0 0
    %594 = vmatprep.subr.bf16.mxu0 0
    %595 = vmatpush1.bf16.msra.mxu0 0
    %596 = vmatprep.subr.bf16.mxu0 0
    %597 = vmatpush1.bf16.msra.mxu0 0
    %598 = vmatprep.subr.bf16.mxu0 0
    %599 = vmatpush1.bf16.msra.mxu0 0
    %600 = vmatprep.subr.bf16.mxu0 0
    %601 = vmatpush1.bf16.msra.mxu0 0
    %602 = vmatprep.subr.bf16.mxu0 0
    %603 = vmatpush1.bf16.msra.mxu0 0
    %604 = vmatprep.subr.bf16.mxu0 0
    %605 = vmatpush1.bf16.msra.mxu0 0
    %606 = vmatprep.subr.bf16.mxu0 0
    %607 = vmatpush1.bf16.msra.mxu0 0
    %608 = vmatprep.subr.bf16.mxu0 0
    %609 = vmatpush1.bf16.msra.mxu0 0
    %610 = vmatprep.subr.bf16.mxu0 0
    %611 = vmatpush1.bf16.msra.mxu0 0
    %612 = vmatprep.subr.bf16.mxu0 0
    %613 = vmatpush1.bf16.msra.mxu0 0
    %614 = vmatprep.subr.bf16.mxu0 0
    %615 = vmatpush1.bf16.msra.mxu0 0
    %616 = vmatprep.mubr.bf16.mxu0 0
    %617 = vmatmul.mubr.bf16.gmra.mrb[0].mxu0 %v582
    %v618 = vpop.f32.mrb[0].mxu0
    %v619 = vadd.f32 %v533, %v618
    %v620 = vpop.f32.mrb[0].mxu0
    %v621 = vadd.f32 %v537, %v620
    %v622 = vpop.f32.mrb[0].mxu0
    %v623 = vpop.f32.mrb[0].mxu0
    %624 = vdwg.mxu0
    %626 = vrot.lane.b32.xlu0 %v619, 64
    %v627 = vpop.permute.xlu0 %626
    %vm628 = vcmask 261120
    %v629 = vsel %vm628, %v619, 0
    %v631 = vsel %vm628, %v627, 0
    %633 = vmatprep.subr.mxu0 0.0
    %634 = vmatpush1.xpose.msra.mxu0 %v631
    %635 = vmatprep.subr.mxu0 0.0
    %636 = vmatpush1.xpose.msra.mxu0 0.0
    %637 = vmatprep.subr.mxu0 0.0
    %638 = vmatpush1.xpose.msra.mxu0 0.0
    %639 = vmatprep.subr.mxu0 0.0
    %640 = vmatpush1.xpose.msra.mxu0 0.0
    %641 = vmatprep.subr.mxu0 0.0
    %642 = vmatpush1.xpose.msra.mxu0 0.0
    %643 = vmatprep.subr.mxu0 0.0
    %644 = vmatpush1.xpose.msra.mxu0 0.0
    %645 = vmatprep.subr.mxu0 0.0
    %646 = vmatpush1.xpose.msra.mxu0 0.0
    %647 = vmatprep.subr.mxu0 0.0
    %648 = vmatpush1.xpose.msra.mxu0 0.0
    %649 = vmatprep.subr.mxu0 0.0
    %650 = vmatpush1.xpose.msra.mxu0 0.0
    %651 = vmatprep.subr.mxu0 0.0
    %652 = vmatpush1.xpose.msra.mxu0 0.0
    %653 = vmatprep.subr.mxu0 0.0
    %654 = vmatpush1.xpose.msra.mxu0 0.0
    %655 = vmatprep.subr.mxu0 0.0
    %656 = vmatpush1.xpose.msra.mxu0 0.0
    %657 = vmatprep.subr.mxu0 0.0
    %658 = vmatpush1.xpose.msra.mxu0 0.0
    %659 = vmatprep.subr.mxu0 0.0
    %660 = vmatpush1.xpose.msra.mxu0 0.0
    %661 = vmatprep.subr.mxu0 0.0
    %662 = vmatpush1.xpose.msra.mxu0 0.0
    %663 = vmatprep.subr.mxu0 0.0
    %664 = vmatpush1.xpose.msra.mxu0 0.0
    %665 = vmatprep.subr.mxu0 0.0
    %666 = vmatpush1.xpose.msra.mxu0 0.0
    %667 = vmatprep.subr.mxu0 0.0
    %668 = vmatpush1.xpose.msra.mxu0 0.0
    %669 = vmatprep.subr.mxu0 0.0
    %670 = vmatpush1.xpose.msra.mxu0 0.0
    %671 = vmatprep.subr.mxu0 0.0
    %672 = vmatpush1.xpose.msra.mxu0 0.0
    %673 = vmatprep.subr.mxu0 0.0
    %674 = vmatpush1.xpose.msra.mxu0 0.0
    %675 = vmatprep.subr.mxu0 0.0
    %676 = vmatpush1.xpose.msra.mxu0 0.0
    %677 = vmatprep.subr.mxu0 0.0
    %678 = vmatpush1.xpose.msra.mxu0 0.0
    %679 = vmatprep.subr.mxu0 0.0
    %680 = vmatpush1.xpose.msra.mxu0 0.0
    %681 = vmatprep.subr.mxu0 0.0
    %682 = vmatpush1.xpose.msra.mxu0 0.0
    %683 = vmatprep.subr.mxu0 0.0
    %684 = vmatpush1.xpose.msra.mxu0 0.0
    %685 = vmatprep.subr.mxu0 0.0
    %686 = vmatpush1.xpose.msra.mxu0 0.0
    %687 = vmatprep.subr.mxu0 0.0
    %688 = vmatpush1.xpose.msra.mxu0 0.0
    %689 = vmatprep.subr.mxu0 0.0
    %690 = vmatpush1.xpose.msra.mxu0 0.0
    %691 = vmatprep.subr.mxu0 0.0
    %692 = vmatpush1.xpose.msra.mxu0 0.0
    %693 = vmatprep.subr.mxu0 0.0
    %694 = vmatpush1.xpose.msra.mxu0 0.0
    %695 = vmatprep.subr.mxu0 0.0
    %696 = vmatpush1.xpose.msra.mxu0 0.0
    %697 = vmatprep.mubr.f32.mxu0 0.0
    %698 = vmatmul.mubr.f32.gmra.mrb[0].mxu0 %v629
    %v699 = vpop.f32.mrb[0].mxu0
    %v700 = vadd.f32 0.0, %v699
    %v701 = vpop.f32.mrb[0].mxu0
    %702 = vdwg.mxu0
    %vm703 = vcmask 64512
    %v704 = vsel %vm703, %v700, -inf
    %705 = vmax.xlane.f32.xlu0 %v704
    %v706 = vpop.xlane.xlu0 %705
    %v707 = vsub.f32 %v700, %v706
    %v708 = vmul.f32 %v707, 1.442695
    %v709 = vpow.pop %v708
    %v710 = vsel %vm703, %v709, 0.0
    %711 = vadd.xlane.f32.xlu0 %v710
    %v712 = vpop.xlane.xlu0 %711
    %v713 = vrcp.pop %v712
    %v714 = vmul.f32 %v709, %v713
    %v716 = vsel %vm703, %v714, 0
    %718 = vmatprep.subr.mxu0 0.0
    %719 = vmatpush1.msra.mxu0 %v621
    %720 = vmatprep.subr.mxu0 0.0
    %721 = vmatpush1.msra.mxu0 0.0
    %722 = vmatprep.subr.mxu0 0.0
    %723 = vmatpush1.msra.mxu0 0.0
    %724 = vmatprep.subr.mxu0 0.0
    %725 = vmatpush1.msra.mxu0 0.0
    %726 = vmatprep.subr.mxu0 0.0
    %727 = vmatpush1.msra.mxu0 0.0
    %728 = vmatprep.subr.mxu0 0.0
    %729 = vmatpush1.msra.mxu0 0.0
    %730 = vmatprep.subr.mxu0 0.0
    %731 = vmatpush1.msra.mxu0 0.0
    %732 = vmatprep.subr.mxu0 0.0
    %733 = vmatpush1.msra.mxu0 0.0
    %734 = vmatprep.subr.mxu0 0.0
    %735 = vmatpush1.msra.mxu0 0.0
    %736 = vmatprep.subr.mxu0 0.0
    %737 = vmatpush1.msra.mxu0 0.0
    %738 = vmatprep.subr.mxu0 0.0
    %739 = vmatpush1.msra.mxu0 0.0
    %740 = vmatprep.subr.mxu0 0.0
    %741 = vmatpush1.msra.mxu0 0.0
    %742 = vmatprep.subr.mxu0 0.0
    %743 = vmatpush1.msra.mxu0 0.0
    %744 = vmatprep.subr.mxu0 0.0
    %745 = vmatpush1.msra.mxu0 0.0
    %746 = vmatprep.subr.mxu0 0.0
    %747 = vmatpush1.msra.mxu0 0.0
    %748 = vmatprep.subr.mxu0 0.0
    %749 = vmatpush1.msra.mxu0 0.0
    %750 = vmatprep.subr.mxu0 0.0
    %751 = vmatpush1.msra.mxu0 0.0
    %752 = vmatprep.subr.mxu0 0.0
    %753 = vmatpush1.msra.mxu0 0.0
    %754 = vmatprep.subr.mxu0 0.0
    %755 = vmatpush1.msra.mxu0 0.0
    %756 = vmatprep.subr.mxu0 0.0
    %757 = vmatpush1.msra.mxu0 0.0
    %758 = vmatprep.subr.mxu0 0.0
    %759 = vmatpush1.msra.mxu0 0.0
    %760 = vmatprep.subr.mxu0 0.0
    %761 = vmatpush1.msra.mxu0 0.0
    %762 = vmatprep.subr.mxu0 0.0
    %763 = vmatpush1.msra.mxu0 0.0
    %764 = vmatprep.subr.mxu0 0.0
    %765 = vmatpush1.msra.mxu0 0.0
    %766 = vmatprep.subr.mxu0 0.0
    %767 = vmatpush1.msra.mxu0 0.0
    %768 = vmatprep.subr.mxu0 0.0
    %769 = vmatpush1.msra.mxu0 0.0
    %770 = vmatprep.subr.mxu0 0.0
    %771 = vmatpush1.msra.mxu0 0.0
    %772 = vmatprep.subr.mxu0 0.0
    %773 = vmatpush1.msra.mxu0 0.0
    %774 = vmatprep.subr.mxu0 0.0
    %775 = vmatpush1.msra.mxu0 0.0
    %776 = vmatprep.subr.mxu0 0.0
    %777 = vmatpush1.msra.mxu0 0.0
    %778 = vmatprep.subr.mxu0 0.0
    %779 = vmatpush1.msra.mxu0 0.0
    %780 = vmatprep.subr.mxu0 0.0
    %781 = vmatpush1.msra.mxu0 0.0
    %782 = vmatprep.mubr.f32.mxu0 0.0
    %783 = vmatmul.mubr.f32.gmra.mrb[0].mxu0 %v716
    %v784 = vpop.f32.mrb[0].mxu0
    %v785 = vadd.f32 0.0, %v784
    %v786 = vpop.f32.mrb[0].mxu0
    %787 = vdwg.mxu0
    %788 = vrot.lane.b32.xlu0 %v619, 96
    %v789 = vpop.permute.xlu0 %788
    %790 = vrot.lane.b32.xlu0 %v619, 32
    %v791 = vpop.permute.xlu0 %790
    %v792 = vsel %vm628, %v789, 0
    %v794 = vsel %vm628, %v791, 0
    %796 = vmatprep.subr.mxu0 0.0
    %797 = vmatpush1.xpose.msra.mxu0 %v794
    %798 = vmatprep.subr.mxu0 0.0
    %799 = vmatpush1.xpose.msra.mxu0 0.0
    %800 = vmatprep.subr.mxu0 0.0
    %801 = vmatpush1.xpose.msra.mxu0 0.0
    %802 = vmatprep.subr.mxu0 0.0
    %803 = vmatpush1.xpose.msra.mxu0 0.0
    %804 = vmatprep.subr.mxu0 0.0
    %805 = vmatpush1.xpose.msra.mxu0 0.0
    %806 = vmatprep.subr.mxu0 0.0
    %807 = vmatpush1.xpose.msra.mxu0 0.0
    %808 = vmatprep.subr.mxu0 0.0
    %809 = vmatpush1.xpose.msra.mxu0 0.0
    %810 = vmatprep.subr.mxu0 0.0
    %811 = vmatpush1.xpose.msra.mxu0 0.0
    %812 = vmatprep.subr.mxu0 0.0
    %813 = vmatpush1.xpose.msra.mxu0 0.0
    %814 = vmatprep.subr.mxu0 0.0
    %815 = vmatpush1.xpose.msra.mxu0 0.0
    %816 = vmatprep.subr.mxu0 0.0
    %817 = vmatpush1.xpose.msra.mxu0 0.0
    %818 = vmatprep.subr.mxu0 0.0
    %819 = vmatpush1.xpose.msra.mxu0 0.0
    %820 = vmatprep.subr.mxu0 0.0
    %821 = vmatpush1.xpose.msra.mxu0 0.0
    %822 = vmatprep.subr.mxu0 0.0
    %823 = vmatpush1.xpose.msra.mxu0 0.0
    %824 = vmatprep.subr.mxu0 0.0
    %825 = vmatpush1.xpose.msra.mxu0 0.0
    %826 = vmatprep.subr.mxu0 0.0
    %827 = vmatpush1.xpose.msra.mxu0 0.0
    %828 = vmatprep.subr.mxu0 0.0
    %829 = vmatpush1.xpose.msra.mxu0 0.0
    %830 = vmatprep.subr.mxu0 0.0
    %831 = vmatpush1.xpose.msra.mxu0 0.0
    %832 = vmatprep.subr.mxu0 0.0
    %833 = vmatpush1.xpose.msra.mxu0 0.0
    %834 = vmatprep.subr.mxu0 0.0
    %835 = vmatpush1.xpose.msra.mxu0 0.0
    %836 = vmatprep.subr.mxu0 0.0
    %837 = vmatpush1.xpose.msra.mxu0 0.0
    %838 = vmatprep.subr.mxu0 0.0
    %839 = vmatpush1.xpose.msra.mxu0 0.0
    %840 = vmatprep.subr.mxu0 0.0
    %841 = vmatpush1.xpose.msra.mxu0 0.0
    %842 = vmatprep.subr.mxu0 0.0
    %843 = vmatpush1.xpose.msra.mxu0 0.0
    %844 = vmatprep.subr.mxu0 0.0
    %845 = vmatpush1.xpose.msra.mxu0 0.0
    %846 = vmatprep.subr.mxu0 0.0
    %847 = vmatpush1.xpose.msra.mxu0 0.0
    %848 = vmatprep.subr.mxu0 0.0
    %849 = vmatpush1.xpose.msra.mxu0 0.0
    %850 = vmatprep.subr.mxu0 0.0
    %851 = vmatpush1.xpose.msra.mxu0 0.0
    %852 = vmatprep.subr.mxu0 0.0
    %853 = vmatpush1.xpose.msra.mxu0 0.0
    %854 = vmatprep.subr.mxu0 0.0
    %855 = vmatpush1.xpose.msra.mxu0 0.0
    %856 = vmatprep.subr.mxu0 0.0
    %857 = vmatpush1.xpose.msra.mxu0 0.0
    %858 = vmatprep.subr.mxu0 0.0
    %859 = vmatpush1.xpose.msra.mxu0 0.0
    %860 = vmatprep.mubr.f32.mxu0 0.0
    %861 = vmatmul.mubr.f32.gmra.mrb[0].mxu0 %v792
    %v862 = vpop.f32.mrb[0].mxu0
    %v863 = vadd.f32 0.0, %v862
    %v864 = vpop.f32.mrb[0].mxu0
    %865 = vdwg.mxu0
    %v866 = vsel %vm703, %v863, -inf
    %867 = vmax.xlane.f32.xlu0 %v866
    %v868 = vpop.xlane.xlu0 %867
    %v869 = vsub.f32 %v863, %v868
    %v870 = vmul.f32 %v869, 1.442695
    %v871 = vpow.pop %v870
    %v872 = vsel %vm703, %v871, 0.0
    %873 = vadd.xlane.f32.xlu0 %v872
    %v874 = vpop.xlane.xlu0 %873
    %v875 = vrcp.pop %v874
    %v876 = vmul.f32 %v871, %v875
    %878 = vrot.lane.b32.xlu0 %v621, 96
    %v879 = vpop.permute.xlu0 %878
    %v882 = vsel %vm703, %v876, 0
    %884 = vmatprep.subr.mxu0 0.0
    %885 = vmatpush1.msra.mxu0 %v879
    %886 = vmatprep.subr.mxu0 0.0
    %887 = vmatpush1.msra.mxu0 0.0
    %888 = vmatprep.subr.mxu0 0.0
    %889 = vmatpush1.msra.mxu0 0.0
    %890 = vmatprep.subr.mxu0 0.0
    %891 = vmatpush1.msra.mxu0 0.0
    %892 = vmatprep.subr.mxu0 0.0
    %893 = vmatpush1.msra.mxu0 0.0
    %894 = vmatprep.subr.mxu0 0.0
    %895 = vmatpush1.msra.mxu0 0.0
    %896 = vmatprep.subr.mxu0 0.0
    %897 = vmatpush1.msra.mxu0 0.0
    %898 = vmatprep.subr.mxu0 0.0
    %899 = vmatpush1.msra.mxu0 0.0
    %900 = vmatprep.subr.mxu0 0.0
    %901 = vmatpush1.msra.mxu0 0.0
    %902 = vmatprep.subr.mxu0 0.0
    %903 = vmatpush1.msra.mxu0 0.0
    %904 = vmatprep.subr.mxu0 0.0
    %905 = vmatpush1.msra.mxu0 0.0
    %906 = vmatprep.subr.mxu0 0.0
    %907 = vmatpush1.msra.mxu0 0.0
    %908 = vmatprep.subr.mxu0 0.0
    %909 = vmatpush1.msra.mxu0 0.0
    %910 = vmatprep.subr.mxu0 0.0
    %911 = vmatpush1.msra.mxu0 0.0
    %912 = vmatprep.subr.mxu0 0.0
    %913 = vmatpush1.msra.mxu0 0.0
    %914 = vmatprep.subr.mxu0 0.0
    %915 = vmatpush1.msra.mxu0 0.0
    %916 = vmatprep.subr.mxu0 0.0
    %917 = vmatpush1.msra.mxu0 0.0
    %918 = vmatprep.subr.mxu0 0.0
    %919 = vmatpush1.msra.mxu0 0.0
    %920 = vmatprep.subr.mxu0 0.0
    %921 = vmatpush1.msra.mxu0 0.0
    %922 = vmatprep.subr.mxu0 0.0
    %923 = vmatpush1.msra.mxu0 0.0
    %924 = vmatprep.subr.mxu0 0.0
    %925 = vmatpush1.msra.mxu0 0.0
    %926 = vmatprep.subr.mxu0 0.0
    %927 = vmatpush1.msra.mxu0 0.0
    %928 = vmatprep.subr.mxu0 0.0
    %929 = vmatpush1.msra.mxu0 0.0
    %930 = vmatprep.subr.mxu0 0.0
    %931 = vmatpush1.msra.mxu0 0.0
    %932 = vmatprep.subr.mxu0 0.0
    %933 = vmatpush1.msra.mxu0 0.0
    %934 = vmatprep.subr.mxu0 0.0
    %935 = vmatpush1.msra.mxu0 0.0
    %936 = vmatprep.subr.mxu0 0.0
    %937 = vmatpush1.msra.mxu0 0.0
    %938 = vmatprep.subr.mxu0 0.0
    %939 = vmatpush1.msra.mxu0 0.0
    %940 = vmatprep.subr.mxu0 0.0
    %941 = vmatpush1.msra.mxu0 0.0
    %942 = vmatprep.subr.mxu0 0.0
    %943 = vmatpush1.msra.mxu0 0.0
    %944 = vmatprep.subr.mxu0 0.0
    %945 = vmatpush1.msra.mxu0 0.0
    %946 = vmatprep.subr.mxu0 0.0
    %947 = vmatpush1.msra.mxu0 0.0
    %948 = vmatprep.mubr.f32.mxu0 0.0
    %949 = vmatmul.mubr.f32.gmra.mrb[0].mxu0 %v882
    %v950 = vpop.f32.mrb[0].mxu0
    %v951 = vadd.f32 0.0, %v950
    %v952 = vpop.f32.mrb[0].mxu0
    %953 = vdwg.mxu0
    %955 = vrot.lane.b32.xlu0 %v951, 32
    %v956 = vpop.permute.xlu0 %955
    %v958 = vsel %vm628, %v785, %v956
    %v959 = vpack.c.bf16 %v958, %v958
    %v968 = vunpack.c.l.b16 %v407
    %v969 = vunpack.c.l.b16 %v408
    %v970 = vunpack.c.l.b16 %v409
    %v971 = vunpack.c.l.b16 %v410
    %v972 = vunpack.c.l.b16 %v411
    %v973 = vunpack.c.l.b16 %v412
    %v974 = vunpack.c.l.b16 %v413
    %v975 = vunpack.c.l.b16 %v414
    %v976 = vpack.c.b16 %v969, %v968
    %v977 = vpack.c.b16 %v971, %v970
    %v978 = vpack.c.b16 %v973, %v972
    %v979 = vpack.c.b16 %v975, %v974
    %v985 = vsel %vm580, %v959, 0
    %987 = vmatprep.subr.bf16.mxu0 0
    %988 = vmatpush1.bf16.msra.mxu0 %v976
    %989 = vmatprep.subr.bf16.mxu0 0
    %990 = vmatpush1.bf16.msra.mxu0 %v977
    %991 = vmatprep.subr.bf16.mxu0 0
    %992 = vmatpush1.bf16.msra.mxu0 %v978
    %993 = vmatprep.subr.bf16.mxu0 0
    %994 = vmatpush1.bf16.msra.mxu0 %v979
    %995 = vmatprep.subr.bf16.mxu0 0
    %996 = vmatpush1.bf16.msra.mxu0 0
    %997 = vmatprep.subr.bf16.mxu0 0
    %998 = vmatpush1.bf16.msra.mxu0 0
    %999 = vmatprep.subr.bf16.mxu0 0
    %1000 = vmatpush1.bf16.msra.mxu0 0
    %1001 = vmatprep.subr.bf16.mxu0 0
    %1002 = vmatpush1.bf16.msra.mxu0 0
    %1003 = vmatprep.subr.bf16.mxu0 0
    %1004 = vmatpush1.bf16.msra.mxu0 0
    %1005 = vmatprep.subr.bf16.mxu0 0
    %1006 = vmatpush1.bf16.msra.mxu0 0
    %1007 = vmatprep.subr.bf16.mxu0 0
    %1008 = vmatpush1.bf16.msra.mxu0 0
    %1009 = vmatprep.subr.bf16.mxu0 0
    %1010 = vmatpush1.bf16.msra.mxu0 0
    %1011 = vmatprep.subr.bf16.mxu0 0
    %1012 = vmatpush1.bf16.msra.mxu0 0
    %1013 = vmatprep.subr.bf16.mxu0 0
    %1014 = vmatpush1.bf16.msra.mxu0 0
    %1015 = vmatprep.subr.bf16.mxu0 0
    %1016 = vmatpush1.bf16.msra.mxu0 0
    %1017 = vmatprep.subr.bf16.mxu0 0
    %1018 = vmatpush1.bf16.msra.mxu0 0
    %1019 = vmatprep.mubr.bf16.mxu0 0
    %1020 = vmatmul.mubr.bf16.gmra.mrb[0].mxu0 %v985
    %v1021 = vpop.f32.mrb[0].mxu0
    %v1022 = vadd.f32 0.0, %v1021
    %v1023 = vpop.f32.mrb[0].mxu0
    %v1024 = vpop.f32.mrb[0].mxu0
    %v1025 = vpop.f32.mrb[0].mxu0
    %1026 = vdwg.mxu0
    %v1027 = vlaneseq
    %v1028 = vshrl.u32 %v1027, 7
    %v1029 = vsub.s32 0, %v1028
    %v1030 = vrot.slane %v527, %v1029
    %v1031 = vadd.f32 %v1022, %v1030
    %v1032 = vadd.f32 %v210, %v1031
    %v1033 = vsel %vm580, %v1032, 0.0
    %1034 = vadd.xlane.f32.xlu0 %v1033
    %v1035 = vpop.xlane.xlu0 %1034
    %v1036 = vrcp.pop 64.0
    %v1037 = vmul.f32 %v1035, %v1036
    %v1038 = vmul.f32 %v1032, %v1032
    %v1039 = vsel %vm580, %v1038, 0.0
    %1040 = vadd.xlane.f32.xlu0 %v1039
    %v1041 = vpop.xlane.xlu0 %1040
    %v1042 = vmul.f32 %v1041, %v1036
    %v1043 = vmul.f32 %v1037, %v1037
    %v1044 = vsub.f32 %v1042, %v1043
    %v1045 = vmax.f32 %v1044, 0.0
    %v1046 = vsub.f32 %v1032, %v1037
    %v1047 = vadd.f32 %v1045, 1e-05
    %v1048 = vrsqrt.pop %v1047
    %v1049 = vmul.f32 %v1046, %v1048
    %v1050 = vlaneseq
    %v1051 = vshrl.u32 %v1050, 7
    %v1052 = vsub.s32 1, %v1051
    %v1053 = vrot.slane %v527, %v1052
    %v1054 = vmul.f32 %v1049, %v1053
    %v1055 = vlaneseq
    %v1056 = vshrl.u32 %v1055, 7
    %v1057 = vsub.s32 2, %v1056
    %v1058 = vrot.slane %v527, %v1057
    %v1059 = vadd.f32 %v1054, %v1058
    %v1060 = vpack.c.bf16 %v1059, %v1059
    %v1062 = vsel %vm580, %v1060, 0
    %1064 = vmatprep.subr.bf16.mxu0 %v457
    %1065 = vmatpush1.bf16.msra.mxu0 %v456
    %1066 = vmatprep.subr.bf16.mxu0 %v473
    %1067 = vmatpush1.bf16.msra.mxu0 %v472
    %1068 = vmatprep.subr.bf16.mxu0 %v489
    %1069 = vmatpush1.bf16.msra.mxu0 %v488
    %1070 = vmatprep.subr.bf16.mxu0 %v505
    %1071 = vmatpush1.bf16.msra.mxu0 %v504
    %1072 = vmatprep.subr.bf16.mxu0 0
    %1073 = vmatpush1.bf16.msra.mxu0 0
    %1074 = vmatprep.subr.bf16.mxu0 0
    %1075 = vmatpush1.bf16.msra.mxu0 0
    %1076 = vmatprep.subr.bf16.mxu0 0
    %1077 = vmatpush1.bf16.msra.mxu0 0
    %1078 = vmatprep.subr.bf16.mxu0 0
    %1079 = vmatpush1.bf16.msra.mxu0 0
    %1080 = vmatprep.subr.bf16.mxu0 0
    %1081 = vmatpush1.bf16.msra.mxu0 0
    %1082 = vmatprep.subr.bf16.mxu0 0
    %1083 = vmatpush1.bf16.msra.mxu0 0
    %1084 = vmatprep.subr.bf16.mxu0 0
    %1085 = vmatpush1.bf16.msra.mxu0 0
    %1086 = vmatprep.subr.bf16.mxu0 0
    %1087 = vmatpush1.bf16.msra.mxu0 0
    %1088 = vmatprep.subr.bf16.mxu0 0
    %1089 = vmatpush1.bf16.msra.mxu0 0
    %1090 = vmatprep.subr.bf16.mxu0 0
    %1091 = vmatpush1.bf16.msra.mxu0 0
    %1092 = vmatprep.subr.bf16.mxu0 0
    %1093 = vmatpush1.bf16.msra.mxu0 0
    %1094 = vmatprep.subr.bf16.mxu0 0
    %1095 = vmatpush1.bf16.msra.mxu0 0
    %1096 = vmatprep.mubr.bf16.mxu0 0
    %1097 = vmatmul.mubr.bf16.gmra.mrb[0].mxu0 %v1062
    %v1098 = vpop.f32.mrb[0].mxu0
    %v1099 = vadd.f32 0.0, %v1098
    %v1100 = vpop.f32.mrb[0].mxu0
    %v1101 = vadd.f32 0.0, %v1100
    %v1102 = vpop.f32.mrb[0].mxu0
    %v1103 = vpop.f32.mrb[0].mxu0
    %1104 = vdwg.mxu0
    %1105 = vmatprep.subr.bf16.mxu0 %v459
    %1106 = vmatpush1.bf16.msra.mxu0 %v458
    %1107 = vmatprep.subr.bf16.mxu0 %v475
    %1108 = vmatpush1.bf16.msra.mxu0 %v474
    %1109 = vmatprep.subr.bf16.mxu0 %v491
    %1110 = vmatpush1.bf16.msra.mxu0 %v490
    %1111 = vmatprep.subr.bf16.mxu0 %v507
    %1112 = vmatpush1.bf16.msra.mxu0 %v506
    %1113 = vmatprep.subr.bf16.mxu0 0
    %1114 = vmatpush1.bf16.msra.mxu0 0
    %1115 = vmatprep.subr.bf16.mxu0 0
    %1116 = vmatpush1.bf16.msra.mxu0 0
    %1117 = vmatprep.subr.bf16.mxu0 0
    %1118 = vmatpush1.bf16.msra.mxu0 0
    %1119 = vmatprep.subr.bf16.mxu0 0
    %1120 = vmatpush1.bf16.msra.mxu0 0
    %1121 = vmatprep.subr.bf16.mxu0 0
    %1122 = vmatpush1.bf16.msra.mxu0 0
    %1123 = vmatprep.subr.bf16.mxu0 0
    %1124 = vmatpush1.bf16.msra.mxu0 0
    %1125 = vmatprep.subr.bf16.mxu0 0
    %1126 = vmatpush1.bf16.msra.mxu0 0
    %1127 = vmatprep.subr.bf16.mxu0 0
    %1128 = vmatpush1.bf16.msra.mxu0 0
    %1129 = vmatprep.subr.bf16.mxu0 0
    %1130 = vmatpush1.bf16.msra.mxu0 0
    %1131 = vmatprep.subr.bf16.mxu0 0
    %1132 = vmatpush1.bf16.msra.mxu0 0
    %1133 = vmatprep.subr.bf16.mxu0 0
    %1134 = vmatpush1.bf16.msra.mxu0 0
    %1135 = vmatprep.subr.bf16.mxu0 0
    %1136 = vmatpush1.bf16.msra.mxu0 0
    %1137 = vmatprep.mubr.bf16.mxu0 0
    %1138 = vmatmul.mubr.bf16.gmra.mrb[0].mxu0 %v1062
    %v1139 = vpop.f32.mrb[0].mxu0
    %v1140 = vadd.f32 0.0, %v1139
    %v1141 = vpop.f32.mrb[0].mxu0
    %v1142 = vadd.f32 0.0, %v1141
    %v1143 = vpop.f32.mrb[0].mxu0
    %v1144 = vpop.f32.mrb[0].mxu0
    %1145 = vdwg.mxu0
    %1146 = vmatprep.subr.bf16.mxu0 %v461
    %1147 = vmatpush1.bf16.msra.mxu0 %v460
    %1148 = vmatprep.subr.bf16.mxu0 %v477
    %1149 = vmatpush1.bf16.msra.mxu0 %v476
    %1150 = vmatprep.subr.bf16.mxu0 %v493
    %1151 = vmatpush1.bf16.msra.mxu0 %v492
    %1152 = vmatprep.subr.bf16.mxu0 %v509
    %1153 = vmatpush1.bf16.msra.mxu0 %v508
    %1154 = vmatprep.subr.bf16.mxu0 0
    %1155 = vmatpush1.bf16.msra.mxu0 0
    %1156 = vmatprep.subr.bf16.mxu0 0
    %1157 = vmatpush1.bf16.msra.mxu0 0
    %1158 = vmatprep.subr.bf16.mxu0 0
    %1159 = vmatpush1.bf16.msra.mxu0 0
    %1160 = vmatprep.subr.bf16.mxu0 0
    %1161 = vmatpush1.bf16.msra.mxu0 0
    %1162 = vmatprep.subr.bf16.mxu0 0
    %1163 = vmatpush1.bf16.msra.mxu0 0
    %1164 = vmatprep.subr.bf16.mxu0 0
    %1165 = vmatpush1.bf16.msra.mxu0 0
    %1166 = vmatprep.subr.bf16.mxu0 0
    %1167 = vmatpush1.bf16.msra.mxu0 0
    %1168 = vmatprep.subr.bf16.mxu0 0
    %1169 = vmatpush1.bf16.msra.mxu0 0
    %1170 = vmatprep.subr.bf16.mxu0 0
    %1171 = vmatpush1.bf16.msra.mxu0 0
    %1172 = vmatprep.subr.bf16.mxu0 0
    %1173 = vmatpush1.bf16.msra.mxu0 0
    %1174 = vmatprep.subr.bf16.mxu0 0
    %1175 = vmatpush1.bf16.msra.mxu0 0
    %1176 = vmatprep.subr.bf16.mxu0 0
    %1177 = vmatpush1.bf16.msra.mxu0 0
    %1178 = vmatprep.mubr.bf16.mxu0 0
    %1179 = vmatmul.mubr.bf16.gmra.mrb[0].mxu0 %v1062
    %v1180 = vpop.f32.mrb[0].mxu0
    %v1181 = vadd.f32 0.0, %v1180
    %v1182 = vpop.f32.mrb[0].mxu0
    %v1183 = vadd.f32 0.0, %v1182
    %v1184 = vpop.f32.mrb[0].mxu0
    %v1185 = vpop.f32.mrb[0].mxu0
    %1186 = vdwg.mxu0
    %1187 = vmatprep.subr.bf16.mxu0 %v463
    %1188 = vmatpush1.bf16.msra.mxu0 %v462
    %1189 = vmatprep.subr.bf16.mxu0 %v479
    %1190 = vmatpush1.bf16.msra.mxu0 %v478
    %1191 = vmatprep.subr.bf16.mxu0 %v495
    %1192 = vmatpush1.bf16.msra.mxu0 %v494
    %1193 = vmatprep.subr.bf16.mxu0 %v511
    %1194 = vmatpush1.bf16.msra.mxu0 %v510
    %1195 = vmatprep.subr.bf16.mxu0 0
    %1196 = vmatpush1.bf16.msra.mxu0 0
    %1197 = vmatprep.subr.bf16.mxu0 0
    %1198 = vmatpush1.bf16.msra.mxu0 0
    %1199 = vmatprep.subr.bf16.mxu0 0
    %1200 = vmatpush1.bf16.msra.mxu0 0
    %1201 = vmatprep.subr.bf16.mxu0 0
    %1202 = vmatpush1.bf16.msra.mxu0 0
    %1203 = vmatprep.subr.bf16.mxu0 0
    %1204 = vmatpush1.bf16.msra.mxu0 0
    %1205 = vmatprep.subr.bf16.mxu0 0
    %1206 = vmatpush1.bf16.msra.mxu0 0
    %1207 = vmatprep.subr.bf16.mxu0 0
    %1208 = vmatpush1.bf16.msra.mxu0 0
    %1209 = vmatprep.subr.bf16.mxu0 0
    %1210 = vmatpush1.bf16.msra.mxu0 0
    %1211 = vmatprep.subr.bf16.mxu0 0
    %1212 = vmatpush1.bf16.msra.mxu0 0
    %1213 = vmatprep.subr.bf16.mxu0 0
    %1214 = vmatpush1.bf16.msra.mxu0 0
    %1215 = vmatprep.subr.bf16.mxu0 0
    %1216 = vmatpush1.bf16.msra.mxu0 0
    %1217 = vmatprep.subr.bf16.mxu0 0
    %1218 = vmatpush1.bf16.msra.mxu0 0
    %1219 = vmatprep.mubr.bf16.mxu0 0
    %1220 = vmatmul.mubr.bf16.gmra.mrb[0].mxu0 %v1062
    %v1221 = vpop.f32.mrb[0].mxu0
    %v1222 = vadd.f32 0.0, %v1221
    %v1223 = vpop.f32.mrb[0].mxu0
    %v1224 = vadd.f32 0.0, %v1223
    %v1225 = vpop.f32.mrb[0].mxu0
    %v1226 = vpop.f32.mrb[0].mxu0
    %1227 = vdwg.mxu0
    %1228 = vmatprep.subr.bf16.mxu0 %v465
    %1229 = vmatpush1.bf16.msra.mxu0 %v464
    %1230 = vmatprep.subr.bf16.mxu0 %v481
    %1231 = vmatpush1.bf16.msra.mxu0 %v480
    %1232 = vmatprep.subr.bf16.mxu0 %v497
    %1233 = vmatpush1.bf16.msra.mxu0 %v496
    %1234 = vmatprep.subr.bf16.mxu0 %v513
    %1235 = vmatpush1.bf16.msra.mxu0 %v512
    %1236 = vmatprep.subr.bf16.mxu0 0
    %1237 = vmatpush1.bf16.msra.mxu0 0
    %1238 = vmatprep.subr.bf16.mxu0 0
    %1239 = vmatpush1.bf16.msra.mxu0 0
    %1240 = vmatprep.subr.bf16.mxu0 0
    %1241 = vmatpush1.bf16.msra.mxu0 0
    %1242 = vmatprep.subr.bf16.mxu0 0
    %1243 = vmatpush1.bf16.msra.mxu0 0
    %1244 = vmatprep.subr.bf16.mxu0 0
    %1245 = vmatpush1.bf16.msra.mxu0 0
    %1246 = vmatprep.subr.bf16.mxu0 0
    %1247 = vmatpush1.bf16.msra.mxu0 0
    %1248 = vmatprep.subr.bf16.mxu0 0
    %1249 = vmatpush1.bf16.msra.mxu0 0
    %1250 = vmatprep.subr.bf16.mxu0 0
    %1251 = vmatpush1.bf16.msra.mxu0 0
    %1252 = vmatprep.subr.bf16.mxu0 0
    %1253 = vmatpush1.bf16.msra.mxu0 0
    %1254 = vmatprep.subr.bf16.mxu0 0
    %1255 = vmatpush1.bf16.msra.mxu0 0
    %1256 = vmatprep.subr.bf16.mxu0 0
    %1257 = vmatpush1.bf16.msra.mxu0 0
    %1258 = vmatprep.subr.bf16.mxu0 0
    %1259 = vmatpush1.bf16.msra.mxu0 0
    %1260 = vmatprep.mubr.bf16.mxu0 0
    %1261 = vmatmul.mubr.bf16.gmra.mrb[0].mxu0 %v1062
    %v1262 = vpop.f32.mrb[0].mxu0
    %v1263 = vadd.f32 0.0, %v1262
    %v1264 = vpop.f32.mrb[0].mxu0
    %v1265 = vadd.f32 0.0, %v1264
    %v1266 = vpop.f32.mrb[0].mxu0
    %v1267 = vpop.f32.mrb[0].mxu0
    %1268 = vdwg.mxu0
    %1269 = vmatprep.subr.bf16.mxu0 %v467
    %1270 = vmatpush1.bf16.msra.mxu0 %v466
    %1271 = vmatprep.subr.bf16.mxu0 %v483
    %1272 = vmatpush1.bf16.msra.mxu0 %v482
    %1273 = vmatprep.subr.bf16.mxu0 %v499
    %1274 = vmatpush1.bf16.msra.mxu0 %v498
    %1275 = vmatprep.subr.bf16.mxu0 %v515
    %1276 = vmatpush1.bf16.msra.mxu0 %v514
    %1277 = vmatprep.subr.bf16.mxu0 0
    %1278 = vmatpush1.bf16.msra.mxu0 0
    %1279 = vmatprep.subr.bf16.mxu0 0
    %1280 = vmatpush1.bf16.msra.mxu0 0
    %1281 = vmatprep.subr.bf16.mxu0 0
    %1282 = vmatpush1.bf16.msra.mxu0 0
    %1283 = vmatprep.subr.bf16.mxu0 0
    %1284 = vmatpush1.bf16.msra.mxu0 0
    %1285 = vmatprep.subr.bf16.mxu0 0
    %1286 = vmatpush1.bf16.msra.mxu0 0
    %1287 = vmatprep.subr.bf16.mxu0 0
    %1288 = vmatpush1.bf16.msra.mxu0 0
    %1289 = vmatprep.subr.bf16.mxu0 0
    %1290 = vmatpush1.bf16.msra.mxu0 0
    %1291 = vmatprep.subr.bf16.mxu0 0
    %1292 = vmatpush1.bf16.msra.mxu0 0
    %1293 = vmatprep.subr.bf16.mxu0 0
    %1294 = vmatpush1.bf16.msra.mxu0 0
    %1295 = vmatprep.subr.bf16.mxu0 0
    %1296 = vmatpush1.bf16.msra.mxu0 0
    %1297 = vmatprep.subr.bf16.mxu0 0
    %1298 = vmatpush1.bf16.msra.mxu0 0
    %1299 = vmatprep.subr.bf16.mxu0 0
    %1300 = vmatpush1.bf16.msra.mxu0 0
    %1301 = vmatprep.mubr.bf16.mxu0 0
    %1302 = vmatmul.mubr.bf16.gmra.mrb[0].mxu0 %v1062
    %v1303 = vpop.f32.mrb[0].mxu0
    %v1304 = vadd.f32 0.0, %v1303
    %v1305 = vpop.f32.mrb[0].mxu0
    %v1306 = vadd.f32 0.0, %v1305
    %v1307 = vpop.f32.mrb[0].mxu0
    %v1308 = vpop.f32.mrb[0].mxu0
    %1309 = vdwg.mxu0
    %1310 = vmatprep.subr.bf16.mxu0 %v469
    %1311 = vmatpush1.bf16.msra.mxu0 %v468
    %1312 = vmatprep.subr.bf16.mxu0 %v485
    %1313 = vmatpush1.bf16.msra.mxu0 %v484
    %1314 = vmatprep.subr.bf16.mxu0 %v501
    %1315 = vmatpush1.bf16.msra.mxu0 %v500
    %1316 = vmatprep.subr.bf16.mxu0 %v517
    %1317 = vmatpush1.bf16.msra.mxu0 %v516
    %1318 = vmatprep.subr.bf16.mxu0 0
    %1319 = vmatpush1.bf16.msra.mxu0 0
    %1320 = vmatprep.subr.bf16.mxu0 0
    %1321 = vmatpush1.bf16.msra.mxu0 0
    %1322 = vmatprep.subr.bf16.mxu0 0
    %1323 = vmatpush1.bf16.msra.mxu0 0
    %1324 = vmatprep.subr.bf16.mxu0 0
    %1325 = vmatpush1.bf16.msra.mxu0 0
    %1326 = vmatprep.subr.bf16.mxu0 0
    %1327 = vmatpush1.bf16.msra.mxu0 0
    %1328 = vmatprep.subr.bf16.mxu0 0
    %1329 = vmatpush1.bf16.msra.mxu0 0
    %1330 = vmatprep.subr.bf16.mxu0 0
    %1331 = vmatpush1.bf16.msra.mxu0 0
    %1332 = vmatprep.subr.bf16.mxu0 0
    %1333 = vmatpush1.bf16.msra.mxu0 0
    %1334 = vmatprep.subr.bf16.mxu0 0
    %1335 = vmatpush1.bf16.msra.mxu0 0
    %1336 = vmatprep.subr.bf16.mxu0 0
    %1337 = vmatpush1.bf16.msra.mxu0 0
    %1338 = vmatprep.subr.bf16.mxu0 0
    %1339 = vmatpush1.bf16.msra.mxu0 0
    %1340 = vmatprep.subr.bf16.mxu0 0
    %1341 = vmatpush1.bf16.msra.mxu0 0
    %1342 = vmatprep.mubr.bf16.mxu0 0
    %1343 = vmatmul.mubr.bf16.gmra.mrb[0].mxu0 %v1062
    %v1344 = vpop.f32.mrb[0].mxu0
    %v1345 = vadd.f32 0.0, %v1344
    %v1346 = vpop.f32.mrb[0].mxu0
    %v1347 = vadd.f32 0.0, %v1346
    %v1348 = vpop.f32.mrb[0].mxu0
    %v1349 = vpop.f32.mrb[0].mxu0
    %1350 = vdwg.mxu0
    %1351 = vmatprep.subr.bf16.mxu0 %v471
    %1352 = vmatpush1.bf16.msra.mxu0 %v470
    %1353 = vmatprep.subr.bf16.mxu0 %v487
    %1354 = vmatpush1.bf16.msra.mxu0 %v486
    %1355 = vmatprep.subr.bf16.mxu0 %v503
    %1356 = vmatpush1.bf16.msra.mxu0 %v502
    %1357 = vmatprep.subr.bf16.mxu0 %v519
    %1358 = vmatpush1.bf16.msra.mxu0 %v518
    %1359 = vmatprep.subr.bf16.mxu0 0
    %1360 = vmatpush1.bf16.msra.mxu0 0
    %1361 = vmatprep.subr.bf16.mxu0 0
    %1362 = vmatpush1.bf16.msra.mxu0 0
    %1363 = vmatprep.subr.bf16.mxu0 0
    %1364 = vmatpush1.bf16.msra.mxu0 0
    %1365 = vmatprep.subr.bf16.mxu0 0
    %1366 = vmatpush1.bf16.msra.mxu0 0
    %1367 = vmatprep.subr.bf16.mxu0 0
    %1368 = vmatpush1.bf16.msra.mxu0 0
    %1369 = vmatprep.subr.bf16.mxu0 0
    %1370 = vmatpush1.bf16.msra.mxu0 0
    %1371 = vmatprep.subr.bf16.mxu0 0
    %1372 = vmatpush1.bf16.msra.mxu0 0
    %1373 = vmatprep.subr.bf16.mxu0 0
    %1374 = vmatpush1.bf16.msra.mxu0 0
    %1375 = vmatprep.subr.bf16.mxu0 0
    %1376 = vmatpush1.bf16.msra.mxu0 0
    %1377 = vmatprep.subr.bf16.mxu0 0
    %1378 = vmatpush1.bf16.msra.mxu0 0
    %1379 = vmatprep.subr.bf16.mxu0 0
    %1380 = vmatpush1.bf16.msra.mxu0 0
    %1381 = vmatprep.subr.bf16.mxu0 0
    %1382 = vmatpush1.bf16.msra.mxu0 0
    %1383 = vmatprep.mubr.bf16.mxu0 0
    %1384 = vmatmul.mubr.bf16.gmra.mrb[0].mxu0 %v1062
    %v1385 = vpop.f32.mrb[0].mxu0
    %v1386 = vadd.f32 0.0, %v1385
    %v1387 = vpop.f32.mrb[0].mxu0
    %v1388 = vadd.f32 0.0, %v1387
    %v1389 = vpop.f32.mrb[0].mxu0
    %v1390 = vpop.f32.mrb[0].mxu0
    %1391 = vdwg.mxu0
    %v1394 = vlaneseq
    %v1395 = vshrl.u32 %v1394, 7
    %v1396 = vsub.s32 0, %v1395
    %v1397 = vrot.slane %v524, %v1396
    %v1398 = vlaneseq
    %v1399 = vshrl.u32 %v1398, 7
    %v1400 = vsub.s32 1, %v1399
    %v1401 = vrot.slane %v524, %v1400
    %v1402 = vlaneseq
    %v1403 = vshrl.u32 %v1402, 7
    %v1404 = vsub.s32 2, %v1403
    %v1405 = vrot.slane %v524, %v1404
    %v1406 = vlaneseq
    %v1407 = vshrl.u32 %v1406, 7
    %v1408 = vsub.s32 3, %v1407
    %v1409 = vrot.slane %v524, %v1408
    %v1410 = vlaneseq
    %v1411 = vshrl.u32 %v1410, 7
    %v1412 = vsub.s32 4, %v1411
    %v1413 = vrot.slane %v524, %v1412
    %v1414 = vlaneseq
    %v1415 = vshrl.u32 %v1414, 7
    %v1416 = vsub.s32 5, %v1415
    %v1417 = vrot.slane %v524, %v1416
    %v1418 = vlaneseq
    %v1419 = vshrl.u32 %v1418, 7
    %v1420 = vsub.s32 6, %v1419
    %v1421 = vrot.slane %v524, %v1420
    %v1422 = vlaneseq
    %v1423 = vshrl.u32 %v1422, 7
    %v1424 = vsub.s32 7, %v1423
    %v1425 = vrot.slane %v524, %v1424
    %v1426 = vlaneseq
    %v1427 = vshrl.u32 %v1426, 7
    %v1428 = vsub.s32 0, %v1427
    %v1429 = vrot.slane %v526, %v1428
    %v1430 = vlaneseq
    %v1431 = vshrl.u32 %v1430, 7
    %v1432 = vsub.s32 1, %v1431
    %v1433 = vrot.slane %v526, %v1432
    %v1434 = vlaneseq
    %v1435 = vshrl.u32 %v1434, 7
    %v1436 = vsub.s32 2, %v1435
    %v1437 = vrot.slane %v526, %v1436
    %v1438 = vlaneseq
    %v1439 = vshrl.u32 %v1438, 7
    %v1440 = vsub.s32 3, %v1439
    %v1441 = vrot.slane %v526, %v1440
    %v1442 = vlaneseq
    %v1443 = vshrl.u32 %v1442, 7
    %v1444 = vsub.s32 4, %v1443
    %v1445 = vrot.slane %v526, %v1444
    %v1446 = vlaneseq
    %v1447 = vshrl.u32 %v1446, 7
    %v1448 = vsub.s32 5, %v1447
    %v1449 = vrot.slane %v526, %v1448
    %v1450 = vlaneseq
    %v1451 = vshrl.u32 %v1450, 7
    %v1452 = vsub.s32 6, %v1451
    %v1453 = vrot.slane %v526, %v1452
    %v1454 = vlaneseq
    %v1455 = vshrl.u32 %v1454, 7
    %v1456 = vsub.s32 7, %v1455
    %v1457 = vrot.slane %v526, %v1456
    %v1474 = vmul.f32 %v1099, %v1397
    %v1475 = vmul.f32 %v1101, %v1401
    %v1476 = vmul.f32 %v1140, %v1405
    %v1477 = vmul.f32 %v1142, %v1409
    %v1478 = vmul.f32 %v1181, %v1413
    %v1479 = vmul.f32 %v1183, %v1417
    %v1480 = vmul.f32 %v1222, %v1421
    %v1481 = vmul.f32 %v1224, %v1425
    %v1482 = vmul.f32 %v1263, %v1429
    %v1483 = vmul.f32 %v1265, %v1433
    %v1484 = vmul.f32 %v1304, %v1437
    %v1485 = vmul.f32 %v1306, %v1441
    %v1486 = vmul.f32 %v1345, %v1445
    %v1487 = vmul.f32 %v1347, %v1449
    %v1488 = vmul.f32 %v1386, %v1453
    %v1489 = vmul.f32 %v1388, %v1457
    %v1492 = vlaneseq
    %v1493 = vshrl.u32 %v1492, 7
    %v1494 = vsub.s32 0, %v1493
    %v1495 = vrot.slane %v520, %v1494
    %v1496 = vlaneseq
    %v1497 = vshrl.u32 %v1496, 7
    %v1498 = vsub.s32 1, %v1497
    %v1499 = vrot.slane %v520, %v1498
    %v1500 = vlaneseq
    %v1501 = vshrl.u32 %v1500, 7
    %v1502 = vsub.s32 2, %v1501
    %v1503 = vrot.slane %v520, %v1502
    %v1504 = vlaneseq
    %v1505 = vshrl.u32 %v1504, 7
    %v1506 = vsub.s32 3, %v1505
    %v1507 = vrot.slane %v520, %v1506
    %v1508 = vlaneseq
    %v1509 = vshrl.u32 %v1508, 7
    %v1510 = vsub.s32 4, %v1509
    %v1511 = vrot.slane %v520, %v1510
    %v1512 = vlaneseq
    %v1513 = vshrl.u32 %v1512, 7
    %v1514 = vsub.s32 5, %v1513
    %v1515 = vrot.slane %v520, %v1514
    %v1516 = vlaneseq
    %v1517 = vshrl.u32 %v1516, 7
    %v1518 = vsub.s32 6, %v1517
    %v1519 = vrot.slane %v520, %v1518
    %v1520 = vlaneseq
    %v1521 = vshrl.u32 %v1520, 7
    %v1522 = vsub.s32 7, %v1521
    %v1523 = vrot.slane %v520, %v1522
    %v1524 = vlaneseq
    %v1525 = vshrl.u32 %v1524, 7
    %v1526 = vsub.s32 0, %v1525
    %v1527 = vrot.slane %v522, %v1526
    %v1528 = vlaneseq
    %v1529 = vshrl.u32 %v1528, 7
    %v1530 = vsub.s32 1, %v1529
    %v1531 = vrot.slane %v522, %v1530
    %v1532 = vlaneseq
    %v1533 = vshrl.u32 %v1532, 7
    %v1534 = vsub.s32 2, %v1533
    %v1535 = vrot.slane %v522, %v1534
    %v1536 = vlaneseq
    %v1537 = vshrl.u32 %v1536, 7
    %v1538 = vsub.s32 3, %v1537
    %v1539 = vrot.slane %v522, %v1538
    %v1540 = vlaneseq
    %v1541 = vshrl.u32 %v1540, 7
    %v1542 = vsub.s32 4, %v1541
    %v1543 = vrot.slane %v522, %v1542
    %v1544 = vlaneseq
    %v1545 = vshrl.u32 %v1544, 7
    %v1546 = vsub.s32 5, %v1545
    %v1547 = vrot.slane %v522, %v1546
    %v1548 = vlaneseq
    %v1549 = vshrl.u32 %v1548, 7
    %v1550 = vsub.s32 6, %v1549
    %v1551 = vrot.slane %v522, %v1550
    %v1552 = vlaneseq
    %v1553 = vshrl.u32 %v1552, 7
    %v1554 = vsub.s32 7, %v1553
    %v1555 = vrot.slane %v522, %v1554
    %v1572 = vadd.f32 %v1474, %v1495
    %v1573 = vadd.f32 %v1475, %v1499
    %v1574 = vadd.f32 %v1476, %v1503
    %v1575 = vadd.f32 %v1477, %v1507
    %v1576 = vadd.f32 %v1478, %v1511
    %v1577 = vadd.f32 %v1479, %v1515
    %v1578 = vadd.f32 %v1480, %v1519
    %v1579 = vadd.f32 %v1481, %v1523
    %v1580 = vadd.f32 %v1482, %v1527
    %v1581 = vadd.f32 %v1483, %v1531
    %v1582 = vadd.f32 %v1484, %v1535
    %v1583 = vadd.f32 %v1485, %v1539
    %v1584 = vadd.f32 %v1486, %v1543
    %v1585 = vadd.f32 %v1487, %v1547
    %v1586 = vadd.f32 %v1488, %v1551
    %v1587 = vadd.f32 %v1489, %v1555
    %v1588 = vmax.f32 %v1572, 0.0
    %v1589 = vmax.f32 %v1573, 0.0
    %v1590 = vmax.f32 %v1574, 0.0
    %v1591 = vmax.f32 %v1575, 0.0
    %v1592 = vmax.f32 %v1576, 0.0
    %v1593 = vmax.f32 %v1577, 0.0
    %v1594 = vmax.f32 %v1578, 0.0
    %v1595 = vmax.f32 %v1579, 0.0
    %v1596 = vmax.f32 %v1580, 0.0
    %v1597 = vmax.f32 %v1581, 0.0
    %v1598 = vmax.f32 %v1582, 0.0
    %v1599 = vmax.f32 %v1583, 0.0
    %v1600 = vmax.f32 %v1584, 0.0
    %v1601 = vmax.f32 %v1585, 0.0
    %v1602 = vmax.f32 %v1586, 0.0
    %v1603 = vmax.f32 %v1587, 0.0
    %v1604 = vpack.c.bf16 %v1588, %v1588
    %v1605 = vpack.c.bf16 %v1589, %v1589
    %v1606 = vpack.c.bf16 %v1590, %v1590
    %v1607 = vpack.c.bf16 %v1591, %v1591
    %v1608 = vpack.c.bf16 %v1592, %v1592
    %v1609 = vpack.c.bf16 %v1593, %v1593
    %v1610 = vpack.c.bf16 %v1594, %v1594
    %v1611 = vpack.c.bf16 %v1595, %v1595
    %v1612 = vpack.c.bf16 %v1596, %v1596
    %v1613 = vpack.c.bf16 %v1597, %v1597
    %v1614 = vpack.c.bf16 %v1598, %v1598
    %v1615 = vpack.c.bf16 %v1599, %v1599
    %v1616 = vpack.c.bf16 %v1600, %v1600
    %v1617 = vpack.c.bf16 %v1601, %v1601
    %v1618 = vpack.c.bf16 %v1602, %v1602
    %v1619 = vpack.c.bf16 %v1603, %v1603
    %1620 = vmatprep.subr.bf16.mxu0 0
    %1621 = vmatpush1.bf16.msra.mxu0 %v279
    %1622 = vmatprep.subr.bf16.mxu0 0
    %1623 = vmatpush1.bf16.msra.mxu0 %v280
    %1624 = vmatprep.subr.bf16.mxu0 0
    %1625 = vmatpush1.bf16.msra.mxu0 %v281
    %1626 = vmatprep.subr.bf16.mxu0 0
    %1627 = vmatpush1.bf16.msra.mxu0 %v282
    %1628 = vmatprep.subr.bf16.mxu0 0
    %1629 = vmatpush1.bf16.msra.mxu0 %v283
    %1630 = vmatprep.subr.bf16.mxu0 0
    %1631 = vmatpush1.bf16.msra.mxu0 %v284
    %1632 = vmatprep.subr.bf16.mxu0 0
    %1633 = vmatpush1.bf16.msra.mxu0 %v285
    %1634 = vmatprep.subr.bf16.mxu0 0
    %1635 = vmatpush1.bf16.msra.mxu0 %v286
    %1636 = vmatprep.subr.bf16.mxu0 0
    %1637 = vmatpush1.bf16.msra.mxu0 %v287
    %1638 = vmatprep.subr.bf16.mxu0 0
    %1639 = vmatpush1.bf16.msra.mxu0 %v288
    %1640 = vmatprep.subr.bf16.mxu0 0
    %1641 = vmatpush1.bf16.msra.mxu0 %v289
    %1642 = vmatprep.subr.bf16.mxu0 0
    %1643 = vmatpush1.bf16.msra.mxu0 %v290
    %1644 = vmatprep.subr.bf16.mxu0 0
    %1645 = vmatpush1.bf16.msra.mxu0 %v291
    %1646 = vmatprep.subr.bf16.mxu0 0
    %1647 = vmatpush1.bf16.msra.mxu0 %v292
    %1648 = vmatprep.subr.bf16.mxu0 0
    %1649 = vmatpush1.bf16.msra.mxu0 %v293
    %1650 = vmatprep.subr.bf16.mxu0 0
    %1651 = vmatpush1.bf16.msra.mxu0 %v294
    %1652 = vmatprep.mubr.bf16.mxu0 %v1605
    %1653 = vmatmul.mubr.bf16.gmra.mrb[0].mxu0 %v1604
    %v1654 = vpop.f32.mrb[0].mxu0
    %v1655 = vadd.f32 0.0, %v1654
    %v1656 = vpop.f32.mrb[0].mxu0
    %v1657 = vpop.f32.mrb[0].mxu0
    %v1658 = vpop.f32.mrb[0].mxu0
    %1659 = vdwg.mxu0
    %1660 = vmatprep.subr.bf16.mxu0 0
    %1661 = vmatpush1.bf16.msra.mxu0 %v295
    %1662 = vmatprep.subr.bf16.mxu0 0
    %1663 = vmatpush1.bf16.msra.mxu0 %v296
    %1664 = vmatprep.subr.bf16.mxu0 0
    %1665 = vmatpush1.bf16.msra.mxu0 %v297
    %1666 = vmatprep.subr.bf16.mxu0 0
    %1667 = vmatpush1.bf16.msra.mxu0 %v298
    %1668 = vmatprep.subr.bf16.mxu0 0
    %1669 = vmatpush1.bf16.msra.mxu0 %v299
    %1670 = vmatprep.subr.bf16.mxu0 0
    %1671 = vmatpush1.bf16.msra.mxu0 %v300
    %1672 = vmatprep.subr.bf16.mxu0 0
    %1673 = vmatpush1.bf16.msra.mxu0 %v301
    %1674 = vmatprep.subr.bf16.mxu0 0
    %1675 = vmatpush1.bf16.msra.mxu0 %v302
    %1676 = vmatprep.subr.bf16.mxu0 0
    %1677 = vmatpush1.bf16.msra.mxu0 %v303
    %1678 = vmatprep.subr.bf16.mxu0 0
    %1679 = vmatpush1.bf16.msra.mxu0 %v304
    %1680 = vmatprep.subr.bf16.mxu0 0
    %1681 = vmatpush1.bf16.msra.mxu0 %v305
    %1682 = vmatprep.subr.bf16.mxu0 0
    %1683 = vmatpush1.bf16.msra.mxu0 %v306
    %1684 = vmatprep.subr.bf16.mxu0 0
    %1685 = vmatpush1.bf16.msra.mxu0 %v307
    %1686 = vmatprep.subr.bf16.mxu0 0
    %1687 = vmatpush1.bf16.msra.mxu0 %v308
    %1688 = vmatprep.subr.bf16.mxu0 0
    %1689 = vmatpush1.bf16.msra.mxu0 %v309
    %1690 = vmatprep.subr.bf16.mxu0 0
    %1691 = vmatpush1.bf16.msra.mxu0 %v310
    %1692 = vmatprep.mubr.bf16.mxu0 %v1607
    %1693 = vmatmul.mubr.bf16.gmra.mrb[0].mxu0 %v1606
    %v1694 = vpop.f32.mrb[0].mxu0
    %v1695 = vadd.f32 %v1655, %v1694
    %v1696 = vpop.f32.mrb[0].mxu0
    %v1697 = vpop.f32.mrb[0].mxu0
    %v1698 = vpop.f32.mrb[0].mxu0
    %1699 = vdwg.mxu0
    %1700 = vmatprep.subr.bf16.mxu0 0
    %1701 = vmatpush1.bf16.msra.mxu0 %v311
    %1702 = vmatprep.subr.bf16.mxu0 0
    %1703 = vmatpush1.bf16.msra.mxu0 %v312
    %1704 = vmatprep.subr.bf16.mxu0 0
    %1705 = vmatpush1.bf16.msra.mxu0 %v313
    %1706 = vmatprep.subr.bf16.mxu0 0
    %1707 = vmatpush1.bf16.msra.mxu0 %v314
    %1708 = vmatprep.subr.bf16.mxu0 0
    %1709 = vmatpush1.bf16.msra.mxu0 %v315
    %1710 = vmatprep.subr.bf16.mxu0 0
    %1711 = vmatpush1.bf16.msra.mxu0 %v316
    %1712 = vmatprep.subr.bf16.mxu0 0
    %1713 = vmatpush1.bf16.msra.mxu0 %v317
    %1714 = vmatprep.subr.bf16.mxu0 0
    %1715 = vmatpush1.bf16.msra.mxu0 %v318
    %1716 = vmatprep.subr.bf16.mxu0 0
    %1717 = vmatpush1.bf16.msra.mxu0 %v319
    %1718 = vmatprep.subr.bf16.mxu0 0
    %1719 = vmatpush1.bf16.msra.mxu0 %v320
    %1720 = vmatprep.subr.bf16.mxu0 0
    %1721 = vmatpush1.bf16.msra.mxu0 %v321
    %1722 = vmatprep.subr.bf16.mxu0 0
    %1723 = vmatpush1.bf16.msra.mxu0 %v322
    %1724 = vmatprep.subr.bf16.mxu0 0
    %1725 = vmatpush1.bf16.msra.mxu0 %v323
    %1726 = vmatprep.subr.bf16.mxu0 0
    %1727 = vmatpush1.bf16.msra.mxu0 %v324
    %1728 = vmatprep.subr.bf16.mxu0 0
    %1729 = vmatpush1.bf16.msra.mxu0 %v325
    %1730 = vmatprep.subr.bf16.mxu0 0
    %1731 = vmatpush1.bf16.msra.mxu0 %v326
    %1732 = vmatprep.mubr.bf16.mxu0 %v1609
    %1733 = vmatmul.mubr.bf16.gmra.mrb[0].mxu0 %v1608
    %v1734 = vpop.f32.mrb[0].mxu0
    %v1735 = vadd.f32 %v1695, %v1734
    %v1736 = vpop.f32.mrb[0].mxu0
    %v1737 = vpop.f32.mrb[0].mxu0
    %v1738 = vpop.f32.mrb[0].mxu0
    %1739 = vdwg.mxu0
    %1740 = vmatprep.subr.bf16.mxu0 0
    %1741 = vmatpush1.bf16.msra.mxu0 %v327
    %1742 = vmatprep.subr.bf16.mxu0 0
    %1743 = vmatpush1.bf16.msra.mxu0 %v328
    %1744 = vmatprep.subr.bf16.mxu0 0
    %1745 = vmatpush1.bf16.msra.mxu0 %v329
    %1746 = vmatprep.subr.bf16.mxu0 0
    %1747 = vmatpush1.bf16.msra.mxu0 %v330
    %1748 = vmatprep.subr.bf16.mxu0 0
    %1749 = vmatpush1.bf16.msra.mxu0 %v331
    %1750 = vmatprep.subr.bf16.mxu0 0
    %1751 = vmatpush1.bf16.msra.mxu0 %v332
    %1752 = vmatprep.subr.bf16.mxu0 0
    %1753 = vmatpush1.bf16.msra.mxu0 %v333
    %1754 = vmatprep.subr.bf16.mxu0 0
    %1755 = vmatpush1.bf16.msra.mxu0 %v334
    %1756 = vmatprep.subr.bf16.mxu0 0
    %1757 = vmatpush1.bf16.msra.mxu0 %v335
    %1758 = vmatprep.subr.bf16.mxu0 0
    %1759 = vmatpush1.bf16.msra.mxu0 %v336
    %1760 = vmatprep.subr.bf16.mxu0 0
    %1761 = vmatpush1.bf16.msra.mxu0 %v337
    %1762 = vmatprep.subr.bf16.mxu0 0
    %1763 = vmatpush1.bf16.msra.mxu0 %v338
    %1764 = vmatprep.subr.bf16.mxu0 0
    %1765 = vmatpush1.bf16.msra.mxu0 %v339
    %1766 = vmatprep.subr.bf16.mxu0 0
    %1767 = vmatpush1.bf16.msra.mxu0 %v340
    %1768 = vmatprep.subr.bf16.mxu0 0
    %1769 = vmatpush1.bf16.msra.mxu0 %v341
    %1770 = vmatprep.subr.bf16.mxu0 0
    %1771 = vmatpush1.bf16.msra.mxu0 %v342
    %1772 = vmatprep.mubr.bf16.mxu0 %v1611
    %1773 = vmatmul.mubr.bf16.gmra.mrb[0].mxu0 %v1610
    %v1774 = vpop.f32.mrb[0].mxu0
    %v1775 = vadd.f32 %v1735, %v1774
    %v1776 = vpop.f32.mrb[0].mxu0
    %v1777 = vpop.f32.mrb[0].mxu0
    %v1778 = vpop.f32.mrb[0].mxu0
    %1779 = vdwg.mxu0
    %1780 = vmatprep.subr.bf16.mxu0 0
    %1781 = vmatpush1.bf16.msra.mxu0 %v343
    %1782 = vmatprep.subr.bf16.mxu0 0
    %1783 = vmatpush1.bf16.msra.mxu0 %v344
    %1784 = vmatprep.subr.bf16.mxu0 0
    %1785 = vmatpush1.bf16.msra.mxu0 %v345
    %1786 = vmatprep.subr.bf16.mxu0 0
    %1787 = vmatpush1.bf16.msra.mxu0 %v346
    %1788 = vmatprep.subr.bf16.mxu0 0
    %1789 = vmatpush1.bf16.msra.mxu0 %v347
    %1790 = vmatprep.subr.bf16.mxu0 0
    %1791 = vmatpush1.bf16.msra.mxu0 %v348
    %1792 = vmatprep.subr.bf16.mxu0 0
    %1793 = vmatpush1.bf16.msra.mxu0 %v349
    %1794 = vmatprep.subr.bf16.mxu0 0
    %1795 = vmatpush1.bf16.msra.mxu0 %v350
    %1796 = vmatprep.subr.bf16.mxu0 0
    %1797 = vmatpush1.bf16.msra.mxu0 %v351
    %1798 = vmatprep.subr.bf16.mxu0 0
    %1799 = vmatpush1.bf16.msra.mxu0 %v352
    %1800 = vmatprep.subr.bf16.mxu0 0
    %1801 = vmatpush1.bf16.msra.mxu0 %v353
    %1802 = vmatprep.subr.bf16.mxu0 0
    %1803 = vmatpush1.bf16.msra.mxu0 %v354
    %1804 = vmatprep.subr.bf16.mxu0 0
    %1805 = vmatpush1.bf16.msra.mxu0 %v355
    %1806 = vmatprep.subr.bf16.mxu0 0
    %1807 = vmatpush1.bf16.msra.mxu0 %v356
    %1808 = vmatprep.subr.bf16.mxu0 0
    %1809 = vmatpush1.bf16.msra.mxu0 %v357
    %1810 = vmatprep.subr.bf16.mxu0 0
    %1811 = vmatpush1.bf16.msra.mxu0 %v358
    %1812 = vmatprep.mubr.bf16.mxu0 %v1613
    %1813 = vmatmul.mubr.bf16.gmra.mrb[0].mxu0 %v1612
    %v1814 = vpop.f32.mrb[0].mxu0
    %v1815 = vadd.f32 %v1775, %v1814
    %v1816 = vpop.f32.mrb[0].mxu0
    %v1817 = vpop.f32.mrb[0].mxu0
    %v1818 = vpop.f32.mrb[0].mxu0
    %1819 = vdwg.mxu0
    %1820 = vmatprep.subr.bf16.mxu0 0
    %1821 = vmatpush1.bf16.msra.mxu0 %v359
    %1822 = vmatprep.subr.bf16.mxu0 0
    %1823 = vmatpush1.bf16.msra.mxu0 %v360
    %1824 = vmatprep.subr.bf16.mxu0 0
    %1825 = vmatpush1.bf16.msra.mxu0 %v361
    %1826 = vmatprep.subr.bf16.mxu0 0
    %1827 = vmatpush1.bf16.msra.mxu0 %v362
    %1828 = vmatprep.subr.bf16.mxu0 0
    %1829 = vmatpush1.bf16.msra.mxu0 %v363
    %1830 = vmatprep.subr.bf16.mxu0 0
    %1831 = vmatpush1.bf16.msra.mxu0 %v364
    %1832 = vmatprep.subr.bf16.mxu0 0
    %1833 = vmatpush1.bf16.msra.mxu0 %v365
    %1834 = vmatprep.subr.bf16.mxu0 0
    %1835 = vmatpush1.bf16.msra.mxu0 %v366
    %1836 = vmatprep.subr.bf16.mxu0 0
    %1837 = vmatpush1.bf16.msra.mxu0 %v367
    %1838 = vmatprep.subr.bf16.mxu0 0
    %1839 = vmatpush1.bf16.msra.mxu0 %v368
    %1840 = vmatprep.subr.bf16.mxu0 0
    %1841 = vmatpush1.bf16.msra.mxu0 %v369
    %1842 = vmatprep.subr.bf16.mxu0 0
    %1843 = vmatpush1.bf16.msra.mxu0 %v370
    %1844 = vmatprep.subr.bf16.mxu0 0
    %1845 = vmatpush1.bf16.msra.mxu0 %v371
    %1846 = vmatprep.subr.bf16.mxu0 0
    %1847 = vmatpush1.bf16.msra.mxu0 %v372
    %1848 = vmatprep.subr.bf16.mxu0 0
    %1849 = vmatpush1.bf16.msra.mxu0 %v373
    %1850 = vmatprep.subr.bf16.mxu0 0
    %1851 = vmatpush1.bf16.msra.mxu0 %v374
    %1852 = vmatprep.mubr.bf16.mxu0 %v1615
    %1853 = vmatmul.mubr.bf16.gmra.mrb[0].mxu0 %v1614
    %v1854 = vpop.f32.mrb[0].mxu0
    %v1855 = vadd.f32 %v1815, %v1854
    %v1856 = vpop.f32.mrb[0].mxu0
    %v1857 = vpop.f32.mrb[0].mxu0
    %v1858 = vpop.f32.mrb[0].mxu0
    %1859 = vdwg.mxu0
    %1860 = vmatprep.subr.bf16.mxu0 0
    %1861 = vmatpush1.bf16.msra.mxu0 %v375
    %1862 = vmatprep.subr.bf16.mxu0 0
    %1863 = vmatpush1.bf16.msra.mxu0 %v376
    %1864 = vmatprep.subr.bf16.mxu0 0
    %1865 = vmatpush1.bf16.msra.mxu0 %v377
    %1866 = vmatprep.subr.bf16.mxu0 0
    %1867 = vmatpush1.bf16.msra.mxu0 %v378
    %1868 = vmatprep.subr.bf16.mxu0 0
    %1869 = vmatpush1.bf16.msra.mxu0 %v379
    %1870 = vmatprep.subr.bf16.mxu0 0
    %1871 = vmatpush1.bf16.msra.mxu0 %v380
    %1872 = vmatprep.subr.bf16.mxu0 0
    %1873 = vmatpush1.bf16.msra.mxu0 %v381
    %1874 = vmatprep.subr.bf16.mxu0 0
    %1875 = vmatpush1.bf16.msra.mxu0 %v382
    %1876 = vmatprep.subr.bf16.mxu0 0
    %1877 = vmatpush1.bf16.msra.mxu0 %v383
    %1878 = vmatprep.subr.bf16.mxu0 0
    %1879 = vmatpush1.bf16.msra.mxu0 %v384
    %1880 = vmatprep.subr.bf16.mxu0 0
    %1881 = vmatpush1.bf16.msra.mxu0 %v385
    %1882 = vmatprep.subr.bf16.mxu0 0
    %1883 = vmatpush1.bf16.msra.mxu0 %v386
    %1884 = vmatprep.subr.bf16.mxu0 0
    %1885 = vmatpush1.bf16.msra.mxu0 %v387
    %1886 = vmatprep.subr.bf16.mxu0 0
    %1887 = vmatpush1.bf16.msra.mxu0 %v388
    %1888 = vmatprep.subr.bf16.mxu0 0
    %1889 = vmatpush1.bf16.msra.mxu0 %v389
    %1890 = vmatprep.subr.bf16.mxu0 0
    %1891 = vmatpush1.bf16.msra.mxu0 %v390
    %1892 = vmatprep.mubr.bf16.mxu0 %v1617
    %1893 = vmatmul.mubr.bf16.gmra.mrb[0].mxu0 %v1616
    %v1894 = vpop.f32.mrb[0].mxu0
    %v1895 = vadd.f32 %v1855, %v1894
    %v1896 = vpop.f32.mrb[0].mxu0
    %v1897 = vpop.f32.mrb[0].mxu0
    %v1898 = vpop.f32.mrb[0].mxu0
    %1899 = vdwg.mxu0
    %1900 = vmatprep.subr.bf16.mxu0 0
    %1901 = vmatpush1.bf16.msra.mxu0 %v391
    %1902 = vmatprep.subr.bf16.mxu0 0
    %1903 = vmatpush1.bf16.msra.mxu0 %v392
    %1904 = vmatprep.subr.bf16.mxu0 0
    %1905 = vmatpush1.bf16.msra.mxu0 %v393
    %1906 = vmatprep.subr.bf16.mxu0 0
    %1907 = vmatpush1.bf16.msra.mxu0 %v394
    %1908 = vmatprep.subr.bf16.mxu0 0
    %1909 = vmatpush1.bf16.msra.mxu0 %v395
    %1910 = vmatprep.subr.bf16.mxu0 0
    %1911 = vmatpush1.bf16.msra.mxu0 %v396
    %1912 = vmatprep.subr.bf16.mxu0 0
    %1913 = vmatpush1.bf16.msra.mxu0 %v397
    %1914 = vmatprep.subr.bf16.mxu0 0
    %1915 = vmatpush1.bf16.msra.mxu0 %v398
    %1916 = vmatprep.subr.bf16.mxu0 0
    %1917 = vmatpush1.bf16.msra.mxu0 %v399
    %1918 = vmatprep.subr.bf16.mxu0 0
    %1919 = vmatpush1.bf16.msra.mxu0 %v400
    %1920 = vmatprep.subr.bf16.mxu0 0
    %1921 = vmatpush1.bf16.msra.mxu0 %v401
    %1922 = vmatprep.subr.bf16.mxu0 0
    %1923 = vmatpush1.bf16.msra.mxu0 %v402
    %1924 = vmatprep.subr.bf16.mxu0 0
    %1925 = vmatpush1.bf16.msra.mxu0 %v403
    %1926 = vmatprep.subr.bf16.mxu0 0
    %1927 = vmatpush1.bf16.msra.mxu0 %v404
    %1928 = vmatprep.subr.bf16.mxu0 0
    %1929 = vmatpush1.bf16.msra.mxu0 %v405
    %1930 = vmatprep.subr.bf16.mxu0 0
    %1931 = vmatpush1.bf16.msra.mxu0 %v406
    %1932 = vmatprep.mubr.bf16.mxu0 %v1619
    %1933 = vmatmul.mubr.bf16.gmra.mrb[0].mxu0 %v1618
    %v1934 = vpop.f32.mrb[0].mxu0
    %v1935 = vadd.f32 %v1895, %v1934
    %v1936 = vpop.f32.mrb[0].mxu0
    %v1937 = vpop.f32.mrb[0].mxu0
    %v1938 = vpop.f32.mrb[0].mxu0
    %1939 = vdwg.mxu0
    %v1940 = vlaneseq
    %v1941 = vshrl.u32 %v1940, 7
    %v1942 = vsub.s32 6, %v1941
    %v1943 = vrot.slane %v527, %v1942
    %v1944 = vmul.f32 %v1935, %v1943
    %v1945 = vlaneseq
    %v1946 = vshrl.u32 %v1945, 7
    %v1947 = vsub.s32 3, %v1946
    %v1948 = vrot.slane %v527, %v1947
    %v1949 = vadd.f32 %v1944, %v1948
    %v1950 = vadd.f32 %v1059, %v1949
    %v1951 = vsel %vm580, %v1950, 0.0
    %1952 = vadd.xlane.f32.xlu0 %v1951
    %v1953 = vpop.xlane.xlu0 %1952
    %v1954 = vmul.f32 %v1953, %v1036
    %v1955 = vmul.f32 %v1950, %v1950
    %v1956 = vsel %vm580, %v1955, 0.0
    %1957 = vadd.xlane.f32.xlu0 %v1956
    %v1958 = vpop.xlane.xlu0 %1957
    %v1959 = vmul.f32 %v1958, %v1036
    %v1960 = vmul.f32 %v1954, %v1954
    %v1961 = vsub.f32 %v1959, %v1960
    %v1962 = vmax.f32 %v1961, 0.0
    %v1963 = vsub.f32 %v1950, %v1954
    %v1964 = vadd.f32 %v1962, 1e-05
    %v1965 = vrsqrt.pop %v1964
    %v1966 = vmul.f32 %v1963, %v1965
    %v1967 = vlaneseq
    %v1968 = vshrl.u32 %v1967, 7
    %v1969 = vsub.s32 4, %v1968
    %v1970 = vrot.slane %v527, %v1969
    %v1971 = vmul.f32 %v1966, %v1970
    %v1972 = vlaneseq
    %v1973 = vshrl.u32 %v1972, 7
    %v1974 = vsub.s32 5, %v1973
    %v1975 = vrot.slane %v527, %v1974
    %v1976 = vadd.f32 %v1971, %v1975
    %s1977 = scalar_lea.vmem [#allocation7], 64
    %v1978 = vld [vmem:[%s1977] sm:$0xff]
    %v1979 = vld [vmem:[%s1977 + $0x8] sm:$0xff]
    %v1980 = vld [vmem:[%s1977 + $0x10] sm:$0xff]
    %v1981 = vld [vmem:[%s1977 + $0x18] sm:$0xff]
    %v1982 = vld [vmem:[%s1977 + $0x20] sm:$0xff]
    %v1983 = vld [vmem:[%s1977 + $0x28] sm:$0xff]
    %v1984 = vld [vmem:[%s1977 + $0x30] sm:$0xff]
    %v1985 = vld [vmem:[%s1977 + $0x38] sm:$0xff]
    %s1986 = scalar_lea.vmem [#allocation9], 1
    %v1987 = vld [vmem:[%s1986] ss:$2 sm:$0x3]
    %s1988 = scalar_lea.vmem [#allocation10], 256
    %v1989 = vld [vmem:[%s1988] sm:$0xff]
    %v1990 = vld [vmem:[%s1988 + $0x8] sm:$0xff]
    %v1991 = vld [vmem:[%s1988 + $0x10] sm:$0xff]
    %v1992 = vld [vmem:[%s1988 + $0x18] sm:$0xff]
    %v1993 = vld [vmem:[%s1988 + $0x20] sm:$0xff]
    %v1994 = vld [vmem:[%s1988 + $0x28] sm:$0xff]
    %v1995 = vld [vmem:[%s1988 + $0x30] sm:$0xff]
    %v1996 = vld [vmem:[%s1988 + $0x38] sm:$0xff]
    %v1997 = vld [vmem:[%s1988 + $0x40] sm:$0xff]
    %v1998 = vld [vmem:[%s1988 + $0x48] sm:$0xff]
    %v1999 = vld [vmem:[%s1988 + $0x50] sm:$0xff]
    %v2000 = vld [vmem:[%s1988 + $0x58] sm:$0xff]
    %v2001 = vld [vmem:[%s1988 + $0x60] sm:$0xff]
    %v2002 = vld [vmem:[%s1988 + $0x68] sm:$0xff]
    %v2003 = vld [vmem:[%s1988 + $0x70] sm:$0xff]
    %v2004 = vld [vmem:[%s1988 + $0x78] sm:$0xff]
    %v2005 = vld [vmem:[%s1988 + $0x80] sm:$0xff]
    %v2006 = vld [vmem:[%s1988 + $0x88] sm:$0xff]
    %v2007 = vld [vmem:[%s1988 + $0x90] sm:$0xff]
    %v2008 = vld [vmem:[%s1988 + $0x98] sm:$0xff]
    %v2009 = vld [vmem:[%s1988 + $0xa0] sm:$0xff]
    %v2010 = vld [vmem:[%s1988 + $0xa8] sm:$0xff]
    %v2011 = vld [vmem:[%s1988 + $0xb0] sm:$0xff]
    %v2012 = vld [vmem:[%s1988 + $0xb8] sm:$0xff]
    %v2013 = vld [vmem:[%s1988 + $0xc0] sm:$0xff]
    %v2014 = vld [vmem:[%s1988 + $0xc8] sm:$0xff]
    %v2015 = vld [vmem:[%s1988 + $0xd0] sm:$0xff]
    %v2016 = vld [vmem:[%s1988 + $0xd8] sm:$0xff]
    %v2017 = vld [vmem:[%s1988 + $0xe0] sm:$0xff]
    %v2018 = vld [vmem:[%s1988 + $0xe8] sm:$0xff]
    %v2019 = vld [vmem:[%s1988 + $0xf0] sm:$0xff]
    %v2020 = vld [vmem:[%s1988 + $0xf8] sm:$0xff]
    %v2021 = vunpack.c.l.s8.bf16 %v1989
    %v2022 = vunpack.c.l.s8.bf16 %v1990
    %v2023 = vunpack.c.l.s8.bf16 %v1991
    %v2024 = vunpack.c.l.s8.bf16 %v1992
    %v2025 = vunpack.c.l.s8.bf16 %v1993
    %v2026 = vunpack.c.l.s8.bf16 %v1994
    %v2027 = vunpack.c.l.s8.bf16 %v1995
    %v2028 = vunpack.c.l.s8.bf16 %v1996
    %v2029 = vunpack.c.l.s8.bf16 %v1997
    %v2030 = vunpack.c.l.s8.bf16 %v1998
    %v2031 = vunpack.c.l.s8.bf16 %v1999
    %v2032 = vunpack.c.l.s8.bf16 %v2000
    %v2033 = vunpack.c.l.s8.bf16 %v2001
    %v2034 = vunpack.c.l.s8.bf16 %v2002
    %v2035 = vunpack.c.l.s8.bf16 %v2003
    %v2036 = vunpack.c.l.s8.bf16 %v2004
    %v2037 = vunpack.c.h.s8.bf16 %v1989
    %v2038 = vunpack.c.h.s8.bf16 %v1990
    %v2039 = vunpack.c.h.s8.bf16 %v1991
    %v2040 = vunpack.c.h.s8.bf16 %v1992
    %v2041 = vunpack.c.h.s8.bf16 %v1993
    %v2042 = vunpack.c.h.s8.bf16 %v1994
    %v2043 = vunpack.c.h.s8.bf16 %v1995
    %v2044 = vunpack.c.h.s8.bf16 %v1996
    %v2045 = vunpack.c.h.s8.bf16 %v1997
    %v2046 = vunpack.c.h.s8.bf16 %v1998
    %v2047 = vunpack.c.h.s8.bf16 %v1999
    %v2048 = vunpack.c.h.s8.bf16 %v2000
    %v2049 = vunpack.c.h.s8.bf16 %v2001
    %v2050 = vunpack.c.h.s8.bf16 %v2002
    %v2051 = vunpack.c.h.s8.bf16 %v2003
    %v2052 = vunpack.c.h.s8.bf16 %v2004
    %v2053 = vunpack.c.l.s8.bf16 %v2005
    %v2054 = vunpack.c.l.s8.bf16 %v2006
    %v2055 = vunpack.c.l.s8.bf16 %v2007
    %v2056 = vunpack.c.l.s8.bf16 %v2008
    %v2057 = vunpack.c.l.s8.bf16 %v2009
    %v2058 = vunpack.c.l.s8.bf16 %v2010
    %v2059 = vunpack.c.l.s8.bf16 %v2011
    %v2060 = vunpack.c.l.s8.bf16 %v2012
    %v2061 = vunpack.c.l.s8.bf16 %v2013
    %v2062 = vunpack.c.l.s8.bf16 %v2014
    %v2063 = vunpack.c.l.s8.bf16 %v2015
    %v2064 = vunpack.c.l.s8.bf16 %v2016
    %v2065 = vunpack.c.l.s8.bf16 %v2017
    %v2066 = vunpack.c.l.s8.bf16 %v2018
    %v2067 = vunpack.c.l.s8.bf16 %v2019
    %v2068 = vunpack.c.l.s8.bf16 %v2020
    %v2069 = vunpack.c.h.s8.bf16 %v2005
    %v2070 = vunpack.c.h.s8.bf16 %v2006
    %v2071 = vunpack.c.h.s8.bf16 %v2007
    %v2072 = vunpack.c.h.s8.bf16 %v2008
    %v2073 = vunpack.c.h.s8.bf16 %v2009
    %v2074 = vunpack.c.h.s8.bf16 %v2010
    %v2075 = vunpack.c.h.s8.bf16 %v2011
    %v2076 = vunpack.c.h.s8.bf16 %v2012
    %v2077 = vunpack.c.h.s8.bf16 %v2013
    %v2078 = vunpack.c.h.s8.bf16 %v2014
    %v2079 = vunpack.c.h.s8.bf16 %v2015
    %v2080 = vunpack.c.h.s8.bf16 %v2016
    %v2081 = vunpack.c.h.s8.bf16 %v2017
    %v2082 = vunpack.c.h.s8.bf16 %v2018
    %v2083 = vunpack.c.h.s8.bf16 %v2019
    %v2084 = vunpack.c.h.s8.bf16 %v2020
    %s2085 = scalar_lea.vmem [#allocation13], 2
    %v2086 = vld [vmem:[%s2085] ss:$4 sm:$0xff]
    %s2087 = scalar_lea.vmem [#allocation13], 34
    %v2088 = vld [vmem:[%s2087] ss:$4 sm:$0xff]
    %s2089 = scalar_lea.vmem [#allocation13], 3
    %v2090 = vld [vmem:[%s2089] ss:$4 sm:$0xff]
    %s2091 = scalar_lea.vmem [#allocation13], 35
    %v2092 = vld [vmem:[%s2091] ss:$4 sm:$0xff]
    %s2093 = scalar_lea.vmem %s9, 8
    %v2094 = vld [vmem:[%s2093] sm:$0x7f]
    %v2095 = vpack.c.bf16 %v1976, %v1976
    %v2097 = vlaneseq
    %v2098 = vshrl.u32 %v2097, 7
    %v2099 = vsub.s32 0, %v2098
    %v2100 = vrot.slane %v1987, %v2099
    %v2101 = vlaneseq
    %v2102 = vshrl.u32 %v2101, 7
    %v2103 = vsub.s32 1, %v2102
    %v2104 = vrot.slane %v1987, %v2103
    %v2115 = vunpack.c.l.b16 %v1978
    %v2116 = vunpack.c.h.b16 %v1978
    %v2117 = vunpack.c.l.b16 %v1979
    %v2118 = vunpack.c.h.b16 %v1979
    %v2119 = vunpack.c.l.b16 %v1980
    %v2120 = vunpack.c.h.b16 %v1980
    %v2121 = vunpack.c.l.b16 %v1981
    %v2122 = vunpack.c.h.b16 %v1981
    %v2123 = vunpack.c.l.b16 %v1982
    %v2124 = vunpack.c.h.b16 %v1982
    %v2125 = vunpack.c.l.b16 %v1983
    %v2126 = vunpack.c.h.b16 %v1983
    %v2127 = vunpack.c.l.b16 %v1984
    %v2128 = vunpack.c.h.b16 %v1984
    %v2129 = vunpack.c.l.b16 %v1985
    %v2130 = vunpack.c.h.b16 %v1985
    %v2131 = vpack.c.b16 %v2117, %v2115
    %v2132 = vpack.c.b16 %v2118, %v2116
    %v2133 = vpack.c.b16 %v2121, %v2119
    %v2134 = vpack.c.b16 %v2122, %v2120
    %v2135 = vpack.c.b16 %v2125, %v2123
    %v2136 = vpack.c.b16 %v2126, %v2124
    %v2137 = vpack.c.b16 %v2129, %v2127
    %v2138 = vpack.c.b16 %v2130, %v2128
    %v2148 = vsel %vm580, %v2095, 0
    %2150 = vmatprep.subr.bf16.mxu0 %v2132
    %2151 = vmatpush1.bf16.msra.mxu0 %v2131
    %2152 = vmatprep.subr.bf16.mxu0 %v2134
    %2153 = vmatpush1.bf16.msra.mxu0 %v2133
    %2154 = vmatprep.subr.bf16.mxu0 %v2136
    %2155 = vmatpush1.bf16.msra.mxu0 %v2135
    %2156 = vmatprep.subr.bf16.mxu0 %v2138
    %2157 = vmatpush1.bf16.msra.mxu0 %v2137
    %2158 = vmatprep.subr.bf16.mxu0 0
    %2159 = vmatpush1.bf16.msra.mxu0 0
    %2160 = vmatprep.subr.bf16.mxu0 0
    %2161 = vmatpush1.bf16.msra.mxu0 0
    %2162 = vmatprep.subr.bf16.mxu0 0
    %2163 = vmatpush1.bf16.msra.mxu0 0
    %2164 = vmatprep.subr.bf16.mxu0 0
    %2165 = vmatpush1.bf16.msra.mxu0 0
    %2166 = vmatprep.subr.bf16.mxu0 0
    %2167 = vmatpush1.bf16.msra.mxu0 0
    %2168 = vmatprep.subr.bf16.mxu0 0
    %2169 = vmatpush1.bf16.msra.mxu0 0
    %2170 = vmatprep.subr.bf16.mxu0 0
    %2171 = vmatpush1.bf16.msra.mxu0 0
    %2172 = vmatprep.subr.bf16.mxu0 0
    %2173 = vmatpush1.bf16.msra.mxu0 0
    %2174 = vmatprep.subr.bf16.mxu0 0
    %2175 = vmatpush1.bf16.msra.mxu0 0
    %2176 = vmatprep.subr.bf16.mxu0 0
    %2177 = vmatpush1.bf16.msra.mxu0 0
    %2178 = vmatprep.subr.bf16.mxu0 0
    %2179 = vmatpush1.bf16.msra.mxu0 0
    %2180 = vmatprep.subr.bf16.mxu0 0
    %2181 = vmatpush1.bf16.msra.mxu0 0
    %2182 = vmatprep.mubr.bf16.mxu0 0
    %2183 = vmatmul.mubr.bf16.gmra.mrb[0].mxu0 %v2148
    %v2184 = vpop.f32.mrb[0].mxu0
    %v2185 = vadd.f32 %v2100, %v2184
    %v2186 = vpop.f32.mrb[0].mxu0
    %v2187 = vadd.f32 %v2104, %v2186
    %v2188 = vpop.f32.mrb[0].mxu0
    %v2189 = vpop.f32.mrb[0].mxu0
    %2190 = vdwg.mxu0
    %2192 = vrot.lane.b32.xlu0 %v2185, 64
    %v2193 = vpop.permute.xlu0 %2192
    %v2194 = vsel %vm628, %v2185, 0
    %v2196 = vsel %vm628, %v2193, 0
    %2198 = vmatprep.subr.mxu0 0.0
    %2199 = vmatpush1.xpose.msra.mxu0 %v2196
    %2200 = vmatprep.subr.mxu0 0.0
    %2201 = vmatpush1.xpose.msra.mxu0 0.0
    %2202 = vmatprep.subr.mxu0 0.0
    %2203 = vmatpush1.xpose.msra.mxu0 0.0
    %2204 = vmatprep.subr.mxu0 0.0
    %2205 = vmatpush1.xpose.msra.mxu0 0.0
    %2206 = vmatprep.subr.mxu0 0.0
    %2207 = vmatpush1.xpose.msra.mxu0 0.0
    %2208 = vmatprep.subr.mxu0 0.0
    %2209 = vmatpush1.xpose.msra.mxu0 0.0
    %2210 = vmatprep.subr.mxu0 0.0
    %2211 = vmatpush1.xpose.msra.mxu0 0.0
    %2212 = vmatprep.subr.mxu0 0.0
    %2213 = vmatpush1.xpose.msra.mxu0 0.0
    %2214 = vmatprep.subr.mxu0 0.0
    %2215 = vmatpush1.xpose.msra.mxu0 0.0
    %2216 = vmatprep.subr.mxu0 0.0
    %2217 = vmatpush1.xpose.msra.mxu0 0.0
    %2218 = vmatprep.subr.mxu0 0.0
    %2219 = vmatpush1.xpose.msra.mxu0 0.0
    %2220 = vmatprep.subr.mxu0 0.0
    %2221 = vmatpush1.xpose.msra.mxu0 0.0
    %2222 = vmatprep.subr.mxu0 0.0
    %2223 = vmatpush1.xpose.msra.mxu0 0.0
    %2224 = vmatprep.subr.mxu0 0.0
    %2225 = vmatpush1.xpose.msra.mxu0 0.0
    %2226 = vmatprep.subr.mxu0 0.0
    %2227 = vmatpush1.xpose.msra.mxu0 0.0
    %2228 = vmatprep.subr.mxu0 0.0
    %2229 = vmatpush1.xpose.msra.mxu0 0.0
    %2230 = vmatprep.subr.mxu0 0.0
    %2231 = vmatpush1.xpose.msra.mxu0 0.0
    %2232 = vmatprep.subr.mxu0 0.0
    %2233 = vmatpush1.xpose.msra.mxu0 0.0
    %2234 = vmatprep.subr.mxu0 0.0
    %2235 = vmatpush1.xpose.msra.mxu0 0.0
    %2236 = vmatprep.subr.mxu0 0.0
    %2237 = vmatpush1.xpose.msra.mxu0 0.0
    %2238 = vmatprep.subr.mxu0 0.0
    %2239 = vmatpush1.xpose.msra.mxu0 0.0
    %2240 = vmatprep.subr.mxu0 0.0
    %2241 = vmatpush1.xpose.msra.mxu0 0.0
    %2242 = vmatprep.subr.mxu0 0.0
    %2243 = vmatpush1.xpose.msra.mxu0 0.0
    %2244 = vmatprep.subr.mxu0 0.0
    %2245 = vmatpush1.xpose.msra.mxu0 0.0
    %2246 = vmatprep.subr.mxu0 0.0
    %2247 = vmatpush1.xpose.msra.mxu0 0.0
    %2248 = vmatprep.subr.mxu0 0.0
    %2249 = vmatpush1.xpose.msra.mxu0 0.0
    %2250 = vmatprep.subr.mxu0 0.0
    %2251 = vmatpush1.xpose.msra.mxu0 0.0
    %2252 = vmatprep.subr.mxu0 0.0
    %2253 = vmatpush1.xpose.msra.mxu0 0.0
    %2254 = vmatprep.subr.mxu0 0.0
    %2255 = vmatpush1.xpose.msra.mxu0 0.0
    %2256 = vmatprep.subr.mxu0 0.0
    %2257 = vmatpush1.xpose.msra.mxu0 0.0
    %2258 = vmatprep.subr.mxu0 0.0
    %2259 = vmatpush1.xpose.msra.mxu0 0.0
    %2260 = vmatprep.subr.mxu0 0.0
    %2261 = vmatpush1.xpose.msra.mxu0 0.0
    %2262 = vmatprep.mubr.f32.mxu0 0.0
    %2263 = vmatmul.mubr.f32.gmra.mrb[0].mxu0 %v2194
    %v2264 = vpop.f32.mrb[0].mxu0
    %v2265 = vadd.f32 0.0, %v2264
    %v2266 = vpop.f32.mrb[0].mxu0
    %2267 = vdwg.mxu0
    %v2268 = vsel %vm703, %v2265, -inf
    %2269 = vmax.xlane.f32.xlu0 %v2268
    %v2270 = vpop.xlane.xlu0 %2269
    %v2271 = vsub.f32 %v2265, %v2270
    %v2272 = vmul.f32 %v2271, 1.442695
    %v2273 = vpow.pop %v2272
    %v2274 = vsel %vm703, %v2273, 0.0
    %2275 = vadd.xlane.f32.xlu0 %v2274
    %v2276 = vpop.xlane.xlu0 %2275
    %v2277 = vrcp.pop %v2276
    %v2278 = vmul.f32 %v2273, %v2277
    %v2280 = vsel %vm703, %v2278, 0
    %2282 = vmatprep.subr.mxu0 0.0
    %2283 = vmatpush1.msra.mxu0 %v2187
    %2284 = vmatprep.subr.mxu0 0.0
    %2285 = vmatpush1.msra.mxu0 0.0
    %2286 = vmatprep.subr.mxu0 0.0
    %2287 = vmatpush1.msra.mxu0 0.0
    %2288 = vmatprep.subr.mxu0 0.0
    %2289 = vmatpush1.msra.mxu0 0.0
    %2290 = vmatprep.subr.mxu0 0.0
    %2291 = vmatpush1.msra.mxu0 0.0
    %2292 = vmatprep.subr.mxu0 0.0
    %2293 = vmatpush1.msra.mxu0 0.0
    %2294 = vmatprep.subr.mxu0 0.0
    %2295 = vmatpush1.msra.mxu0 0.0
    %2296 = vmatprep.subr.mxu0 0.0
    %2297 = vmatpush1.msra.mxu0 0.0
    %2298 = vmatprep.subr.mxu0 0.0
    %2299 = vmatpush1.msra.mxu0 0.0
    %2300 = vmatprep.subr.mxu0 0.0
    %2301 = vmatpush1.msra.mxu0 0.0
    %2302 = vmatprep.subr.mxu0 0.0
    %2303 = vmatpush1.msra.mxu0 0.0
    %2304 = vmatprep.subr.mxu0 0.0
    %2305 = vmatpush1.msra.mxu0 0.0
    %2306 = vmatprep.subr.mxu0 0.0
    %2307 = vmatpush1.msra.mxu0 0.0
    %2308 = vmatprep.subr.mxu0 0.0
    %2309 = vmatpush1.msra.mxu0 0.0
    %2310 = vmatprep.subr.mxu0 0.0
    %2311 = vmatpush1.msra.mxu0 0.0
    %2312 = vmatprep.subr.mxu0 0.0
    %2313 = vmatpush1.msra.mxu0 0.0
    %2314 = vmatprep.subr.mxu0 0.0
    %2315 = vmatpush1.msra.mxu0 0.0
    %2316 = vmatprep.subr.mxu0 0.0
    %2317 = vmatpush1.msra.mxu0 0.0
    %2318 = vmatprep.subr.mxu0 0.0
    %2319 = vmatpush1.msra.mxu0 0.0
    %2320 = vmatprep.subr.mxu0 0.0
    %2321 = vmatpush1.msra.mxu0 0.0
    %2322 = vmatprep.subr.mxu0 0.0
    %2323 = vmatpush1.msra.mxu0 0.0
    %2324 = vmatprep.subr.mxu0 0.0
    %2325 = vmatpush1.msra.mxu0 0.0
    %2326 = vmatprep.subr.mxu0 0.0
    %2327 = vmatpush1.msra.mxu0 0.0
    %2328 = vmatprep.subr.mxu0 0.0
    %2329 = vmatpush1.msra.mxu0 0.0
    %2330 = vmatprep.subr.mxu0 0.0
    %2331 = vmatpush1.msra.mxu0 0.0
    %2332 = vmatprep.subr.mxu0 0.0
    %2333 = vmatpush1.msra.mxu0 0.0
    %2334 = vmatprep.subr.mxu0 0.0
    %2335 = vmatpush1.msra.mxu0 0.0
    %2336 = vmatprep.subr.mxu0 0.0
    %2337 = vmatpush1.msra.mxu0 0.0
    %2338 = vmatprep.subr.mxu0 0.0
    %2339 = vmatpush1.msra.mxu0 0.0
    %2340 = vmatprep.subr.mxu0 0.0
    %2341 = vmatpush1.msra.mxu0 0.0
    %2342 = vmatprep.subr.mxu0 0.0
    %2343 = vmatpush1.msra.mxu0 0.0
    %2344 = vmatprep.subr.mxu0 0.0
    %2345 = vmatpush1.msra.mxu0 0.0
    %2346 = vmatprep.mubr.f32.mxu0 0.0
    %2347 = vmatmul.mubr.f32.gmra.mrb[0].mxu0 %v2280
    %v2348 = vpop.f32.mrb[0].mxu0
    %v2349 = vadd.f32 0.0, %v2348
    %v2350 = vpop.f32.mrb[0].mxu0
    %2351 = vdwg.mxu0
    %2352 = vrot.lane.b32.xlu0 %v2185, 96
    %v2353 = vpop.permute.xlu0 %2352
    %2354 = vrot.lane.b32.xlu0 %v2185, 32
    %v2355 = vpop.permute.xlu0 %2354
    %v2356 = vsel %vm628, %v2353, 0
    %v2358 = vsel %vm628, %v2355, 0
    %2360 = vmatprep.subr.mxu0 0.0
    %2361 = vmatpush1.xpose.msra.mxu0 %v2358
    %2362 = vmatprep.subr.mxu0 0.0
    %2363 = vmatpush1.xpose.msra.mxu0 0.0
    %2364 = vmatprep.subr.mxu0 0.0
    %2365 = vmatpush1.xpose.msra.mxu0 0.0
    %2366 = vmatprep.subr.mxu0 0.0
    %2367 = vmatpush1.xpose.msra.mxu0 0.0
    %2368 = vmatprep.subr.mxu0 0.0
    %2369 = vmatpush1.xpose.msra.mxu0 0.0
    %2370 = vmatprep.subr.mxu0 0.0
    %2371 = vmatpush1.xpose.msra.mxu0 0.0
    %2372 = vmatprep.subr.mxu0 0.0
    %2373 = vmatpush1.xpose.msra.mxu0 0.0
    %2374 = vmatprep.subr.mxu0 0.0
    %2375 = vmatpush1.xpose.msra.mxu0 0.0
    %2376 = vmatprep.subr.mxu0 0.0
    %2377 = vmatpush1.xpose.msra.mxu0 0.0
    %2378 = vmatprep.subr.mxu0 0.0
    %2379 = vmatpush1.xpose.msra.mxu0 0.0
    %2380 = vmatprep.subr.mxu0 0.0
    %2381 = vmatpush1.xpose.msra.mxu0 0.0
    %2382 = vmatprep.subr.mxu0 0.0
    %2383 = vmatpush1.xpose.msra.mxu0 0.0
    %2384 = vmatprep.subr.mxu0 0.0
    %2385 = vmatpush1.xpose.msra.mxu0 0.0
    %2386 = vmatprep.subr.mxu0 0.0
    %2387 = vmatpush1.xpose.msra.mxu0 0.0
    %2388 = vmatprep.subr.mxu0 0.0
    %2389 = vmatpush1.xpose.msra.mxu0 0.0
    %2390 = vmatprep.subr.mxu0 0.0
    %2391 = vmatpush1.xpose.msra.mxu0 0.0
    %2392 = vmatprep.subr.mxu0 0.0
    %2393 = vmatpush1.xpose.msra.mxu0 0.0
    %2394 = vmatprep.subr.mxu0 0.0
    %2395 = vmatpush1.xpose.msra.mxu0 0.0
    %2396 = vmatprep.subr.mxu0 0.0
    %2397 = vmatpush1.xpose.msra.mxu0 0.0
    %2398 = vmatprep.subr.mxu0 0.0
    %2399 = vmatpush1.xpose.msra.mxu0 0.0
    %2400 = vmatprep.subr.mxu0 0.0
    %2401 = vmatpush1.xpose.msra.mxu0 0.0
    %2402 = vmatprep.subr.mxu0 0.0
    %2403 = vmatpush1.xpose.msra.mxu0 0.0
    %2404 = vmatprep.subr.mxu0 0.0
    %2405 = vmatpush1.xpose.msra.mxu0 0.0
    %2406 = vmatprep.subr.mxu0 0.0
    %2407 = vmatpush1.xpose.msra.mxu0 0.0
    %2408 = vmatprep.subr.mxu0 0.0
    %2409 = vmatpush1.xpose.msra.mxu0 0.0
    %2410 = vmatprep.subr.mxu0 0.0
    %2411 = vmatpush1.xpose.msra.mxu0 0.0
    %2412 = vmatprep.subr.mxu0 0.0
    %2413 = vmatpush1.xpose.msra.mxu0 0.0
    %2414 = vmatprep.subr.mxu0 0.0
    %2415 = vmatpush1.xpose.msra.mxu0 0.0
    %2416 = vmatprep.subr.mxu0 0.0
    %2417 = vmatpush1.xpose.msra.mxu0 0.0
    %2418 = vmatprep.subr.mxu0 0.0
    %2419 = vmatpush1.xpose.msra.mxu0 0.0
    %2420 = vmatprep.subr.mxu0 0.0
    %2421 = vmatpush1.xpose.msra.mxu0 0.0
    %2422 = vmatprep.subr.mxu0 0.0
    %2423 = vmatpush1.xpose.msra.mxu0 0.0
    %2424 = vmatprep.mubr.f32.mxu0 0.0
    %2425 = vmatmul.mubr.f32.gmra.mrb[0].mxu0 %v2356
    %v2426 = vpop.f32.mrb[0].mxu0
    %v2427 = vadd.f32 0.0, %v2426
    %v2428 = vpop.f32.mrb[0].mxu0
    %2429 = vdwg.mxu0
    %v2430 = vsel %vm703, %v2427, -inf
    %2431 = vmax.xlane.f32.xlu0 %v2430
    %v2432 = vpop.xlane.xlu0 %2431
    %v2433 = vsub.f32 %v2427, %v2432
    %v2434 = vmul.f32 %v2433, 1.442695
    %v2435 = vpow.pop %v2434
    %v2436 = vsel %vm703, %v2435, 0.0
    %2437 = vadd.xlane.f32.xlu0 %v2436
    %v2438 = vpop.xlane.xlu0 %2437
    %v2439 = vrcp.pop %v2438
    %v2440 = vmul.f32 %v2435, %v2439
    %2442 = vrot.lane.b32.xlu0 %v2187, 96
    %v2443 = vpop.permute.xlu0 %2442
    %v2446 = vsel %vm703, %v2440, 0
    %2448 = vmatprep.subr.mxu0 0.0
    %2449 = vmatpush1.msra.mxu0 %v2443
    %2450 = vmatprep.subr.mxu0 0.0
    %2451 = vmatpush1.msra.mxu0 0.0
    %2452 = vmatprep.subr.mxu0 0.0
    %2453 = vmatpush1.msra.mxu0 0.0
    %2454 = vmatprep.subr.mxu0 0.0
    %2455 = vmatpush1.msra.mxu0 0.0
    %2456 = vmatprep.subr.mxu0 0.0
    %2457 = vmatpush1.msra.mxu0 0.0
    %2458 = vmatprep.subr.mxu0 0.0
    %2459 = vmatpush1.msra.mxu0 0.0
    %2460 = vmatprep.subr.mxu0 0.0
    %2461 = vmatpush1.msra.mxu0 0.0
    %2462 = vmatprep.subr.mxu0 0.0
    %2463 = vmatpush1.msra.mxu0 0.0
    %2464 = vmatprep.subr.mxu0 0.0
    %2465 = vmatpush1.msra.mxu0 0.0
    %2466 = vmatprep.subr.mxu0 0.0
    %2467 = vmatpush1.msra.mxu0 0.0
    %2468 = vmatprep.subr.mxu0 0.0
    %2469 = vmatpush1.msra.mxu0 0.0
    %2470 = vmatprep.subr.mxu0 0.0
    %2471 = vmatpush1.msra.mxu0 0.0
    %2472 = vmatprep.subr.mxu0 0.0
    %2473 = vmatpush1.msra.mxu0 0.0
    %2474 = vmatprep.subr.mxu0 0.0
    %2475 = vmatpush1.msra.mxu0 0.0
    %2476 = vmatprep.subr.mxu0 0.0
    %2477 = vmatpush1.msra.mxu0 0.0
    %2478 = vmatprep.subr.mxu0 0.0
    %2479 = vmatpush1.msra.mxu0 0.0
    %2480 = vmatprep.subr.mxu0 0.0
    %2481 = vmatpush1.msra.mxu0 0.0
    %2482 = vmatprep.subr.mxu0 0.0
    %2483 = vmatpush1.msra.mxu0 0.0
    %2484 = vmatprep.subr.mxu0 0.0
    %2485 = vmatpush1.msra.mxu0 0.0
    %2486 = vmatprep.subr.mxu0 0.0
    %2487 = vmatpush1.msra.mxu0 0.0
    %2488 = vmatprep.subr.mxu0 0.0
    %2489 = vmatpush1.msra.mxu0 0.0
    %2490 = vmatprep.subr.mxu0 0.0
    %2491 = vmatpush1.msra.mxu0 0.0
    %2492 = vmatprep.subr.mxu0 0.0
    %2493 = vmatpush1.msra.mxu0 0.0
    %2494 = vmatprep.subr.mxu0 0.0
    %2495 = vmatpush1.msra.mxu0 0.0
    %2496 = vmatprep.subr.mxu0 0.0
    %2497 = vmatpush1.msra.mxu0 0.0
    %2498 = vmatprep.subr.mxu0 0.0
    %2499 = vmatpush1.msra.mxu0 0.0
    %2500 = vmatprep.subr.mxu0 0.0
    %2501 = vmatpush1.msra.mxu0 0.0
    %2502 = vmatprep.subr.mxu0 0.0
    %2503 = vmatpush1.msra.mxu0 0.0
    %2504 = vmatprep.subr.mxu0 0.0
    %2505 = vmatpush1.msra.mxu0 0.0
    %2506 = vmatprep.subr.mxu0 0.0
    %2507 = vmatpush1.msra.mxu0 0.0
    %2508 = vmatprep.subr.mxu0 0.0
    %2509 = vmatpush1.msra.mxu0 0.0
    %2510 = vmatprep.subr.mxu0 0.0
    %2511 = vmatpush1.msra.mxu0 0.0
    %2512 = vmatprep.mubr.f32.mxu0 0.0
    %2513 = vmatmul.mubr.f32.gmra.mrb[0].mxu0 %v2446
    %v2514 = vpop.f32.mrb[0].mxu0
    %v2515 = vadd.f32 0.0, %v2514
    %v2516 = vpop.f32.mrb[0].mxu0
    %2517 = vdwg.mxu0
    %2519 = vrot.lane.b32.xlu0 %v2515, 32
    %v2520 = vpop.permute.xlu0 %2519
    %v2522 = vsel %vm628, %v2349, %v2520
    %v2523 = vpack.c.bf16 %v2522, %v2522
    %v2525 = vsel %vm580, %v2523, 0
    %2527 = vmatprep.subr.bf16.mxu0 0
    %2528 = vmatpush1.bf16.msra.mxu0 %v976
    %2529 = vmatprep.subr.bf16.mxu0 0
    %2530 = vmatpush1.bf16.msra.mxu0 %v977
    %2531 = vmatprep.subr.bf16.mxu0 0
    %2532 = vmatpush1.bf16.msra.mxu0 %v978
    %2533 = vmatprep.subr.bf16.mxu0 0
    %2534 = vmatpush1.bf16.msra.mxu0 %v979
    %2535 = vmatprep.subr.bf16.mxu0 0
    %2536 = vmatpush1.bf16.msra.mxu0 0
    %2537 = vmatprep.subr.bf16.mxu0 0
    %2538 = vmatpush1.bf16.msra.mxu0 0
    %2539 = vmatprep.subr.bf16.mxu0 0
    %2540 = vmatpush1.bf16.msra.mxu0 0
    %2541 = vmatprep.subr.bf16.mxu0 0
    %2542 = vmatpush1.bf16.msra.mxu0 0
    %2543 = vmatprep.subr.bf16.mxu0 0
    %2544 = vmatpush1.bf16.msra.mxu0 0
    %2545 = vmatprep.subr.bf16.mxu0 0
    %2546 = vmatpush1.bf16.msra.mxu0 0
    %2547 = vmatprep.subr.bf16.mxu0 0
    %2548 = vmatpush1.bf16.msra.mxu0 0
    %2549 = vmatprep.subr.bf16.mxu0 0
    %2550 = vmatpush1.bf16.msra.mxu0 0
    %2551 = vmatprep.subr.bf16.mxu0 0
    %2552 = vmatpush1.bf16.msra.mxu0 0
    %2553 = vmatprep.subr.bf16.mxu0 0
    %2554 = vmatpush1.bf16.msra.mxu0 0
    %2555 = vmatprep.subr.bf16.mxu0 0
    %2556 = vmatpush1.bf16.msra.mxu0 0
    %2557 = vmatprep.subr.bf16.mxu0 0
    %2558 = vmatpush1.bf16.msra.mxu0 0
    %2559 = vmatprep.mubr.bf16.mxu0 0
    %2560 = vmatmul.mubr.bf16.gmra.mrb[0].mxu0 %v2525
    %v2561 = vpop.f32.mrb[0].mxu0
    %v2562 = vadd.f32 0.0, %v2561
    %v2563 = vpop.f32.mrb[0].mxu0
    %v2564 = vpop.f32.mrb[0].mxu0
    %v2565 = vpop.f32.mrb[0].mxu0
    %2566 = vdwg.mxu0
    %v2567 = vlaneseq
    %v2568 = vshrl.u32 %v2567, 7
    %v2569 = vsub.s32 0, %v2568
    %v2570 = vrot.slane %v2094, %v2569
    %2572 = vrot.lane.b32.xlu0 %v2570, 64
    %v2573 = vpop.permute.xlu0 %2572
    %v2575 = vadd.f32 %v2562, %v2573
    %2577 = vrot.lane.b32.xlu0 %v2575, 64
    %v2578 = vpop.permute.xlu0 %2577
    %v2580 = vadd.f32 %v1976, %v2578
    %v2581 = vsel %vm580, %v2580, 0.0
    %2582 = vadd.xlane.f32.xlu0 %v2581
    %v2583 = vpop.xlane.xlu0 %2582
    %v2584 = vmul.f32 %v2583, %v1036
    %v2585 = vmul.f32 %v2580, %v2580
    %v2586 = vsel %vm580, %v2585, 0.0
    %2587 = vadd.xlane.f32.xlu0 %v2586
    %v2588 = vpop.xlane.xlu0 %2587
    %v2589 = vmul.f32 %v2588, %v1036
    %v2590 = vmul.f32 %v2584, %v2584
    %v2591 = vsub.f32 %v2589, %v2590
    %v2592 = vmax.f32 %v2591, 0.0
    %v2593 = vsub.f32 %v2580, %v2584
    %v2594 = vadd.f32 %v2592, 1e-05
    %v2595 = vrsqrt.pop %v2594
    %v2596 = vmul.f32 %v2593, %v2595
    %v2597 = vlaneseq
    %v2598 = vshrl.u32 %v2597, 7
    %v2599 = vsub.s32 1, %v2598
    %v2600 = vrot.slane %v2094, %v2599
    %v2601 = vmul.f32 %v2596, %v2600
    %v2602 = vlaneseq
    %v2603 = vshrl.u32 %v2602, 7
    %v2604 = vsub.s32 2, %v2603
    %v2605 = vrot.slane %v2094, %v2604
    %v2606 = vadd.f32 %v2601, %v2605
    %v2607 = vpack.c.bf16 %v2606, %v2606
    %v2609 = vsel %vm580, %v2607, 0
    %2611 = vmatprep.subr.bf16.mxu0 %v2022
    %2612 = vmatpush1.bf16.msra.mxu0 %v2021
    %2613 = vmatprep.subr.bf16.mxu0 %v2038
    %2614 = vmatpush1.bf16.msra.mxu0 %v2037
    %2615 = vmatprep.subr.bf16.mxu0 %v2054
    %2616 = vmatpush1.bf16.msra.mxu0 %v2053
    %2617 = vmatprep.subr.bf16.mxu0 %v2070
    %2618 = vmatpush1.bf16.msra.mxu0 %v2069
    %2619 = vmatprep.subr.bf16.mxu0 0
    %2620 = vmatpush1.bf16.msra.mxu0 0
    %2621 = vmatprep.subr.bf16.mxu0 0
    %2622 = vmatpush1.bf16.msra.mxu0 0
    %2623 = vmatprep.subr.bf16.mxu0 0
    %2624 = vmatpush1.bf16.msra.mxu0 0
    %2625 = vmatprep.subr.bf16.mxu0 0
    %2626 = vmatpush1.bf16.msra.mxu0 0
    %2627 = vmatprep.subr.bf16.mxu0 0
    %2628 = vmatpush1.bf16.msra.mxu0 0
    %2629 = vmatprep.subr.bf16.mxu0 0
    %2630 = vmatpush1.bf16.msra.mxu0 0
    %2631 = vmatprep.subr.bf16.mxu0 0
    %2632 = vmatpush1.bf16.msra.mxu0 0
    %2633 = vmatprep.subr.bf16.mxu0 0
    %2634 = vmatpush1.bf16.msra.mxu0 0
    %2635 = vmatprep.subr.bf16.mxu0 0
    %2636 = vmatpush1.bf16.msra.mxu0 0
    %2637 = vmatprep.subr.bf16.mxu0 0
    %2638 = vmatpush1.bf16.msra.mxu0 0
    %2639 = vmatprep.subr.bf16.mxu0 0
    %2640 = vmatpush1.bf16.msra.mxu0 0
    %2641 = vmatprep.subr.bf16.mxu0 0
    %2642 = vmatpush1.bf16.msra.mxu0 0
    %2643 = vmatprep.mubr.bf16.mxu0 0
    %2644 = vmatmul.mubr.bf16.gmra.mrb[0].mxu0 %v2609
    %v2645 = vpop.f32.mrb[0].mxu0
    %v2646 = vadd.f32 0.0, %v2645
    %v2647 = vpop.f32.mrb[0].mxu0
    %v2648 = vadd.f32 0.0, %v2647
    %v2649 = vpop.f32.mrb[0].mxu0
    %v2650 = vpop.f32.mrb[0].mxu0
    %2651 = vdwg.mxu0
    %2652 = vmatprep.subr.bf16.mxu0 %v2024
    %2653 = vmatpush1.bf16.msra.mxu0 %v2023
    %2654 = vmatprep.subr.bf16.mxu0 %v2040
    %2655 = vmatpush1.bf16.msra.mxu0 %v2039
    %2656 = vmatprep.subr.bf16.mxu0 %v2056
    %2657 = vmatpush1.bf16.msra.mxu0 %v2055
    %2658 = vmatprep.subr.bf16.mxu0 %v2072
    %2659 = vmatpush1.bf16.msra.mxu0 %v2071
    %2660 = vmatprep.subr.bf16.mxu0 0
    %2661 = vmatpush1.bf16.msra.mxu0 0
    %2662 = vmatprep.subr.bf16.mxu0 0
    %2663 = vmatpush1.bf16.msra.mxu0 0
    %2664 = vmatprep.subr.bf16.mxu0 0
    %2665 = vmatpush1.bf16.msra.mxu0 0
    %2666 = vmatprep.subr.bf16.mxu0 0
    %2667 = vmatpush1.bf16.msra.mxu0 0
    %2668 = vmatprep.subr.bf16.mxu0 0
    %2669 = vmatpush1.bf16.msra.mxu0 0
    %2670 = vmatprep.subr.bf16.mxu0 0
    %2671 = vmatpush1.bf16.msra.mxu0 0
    %2672 = vmatprep.subr.bf16.mxu0 0
    %2673 = vmatpush1.bf16.msra.mxu0 0
    %2674 = vmatprep.subr.bf16.mxu0 0
    %2675 = vmatpush1.bf16.msra.mxu0 0
    %2676 = vmatprep.subr.bf16.mxu0 0
    %2677 = vmatpush1.bf16.msra.mxu0 0
    %2678 = vmatprep.subr.bf16.mxu0 0
    %2679 = vmatpush1.bf16.msra.mxu0 0
    %2680 = vmatprep.subr.bf16.mxu0 0
    %2681 = vmatpush1.bf16.msra.mxu0 0
    %2682 = vmatprep.subr.bf16.mxu0 0
    %2683 = vmatpush1.bf16.msra.mxu0 0
    %2684 = vmatprep.mubr.bf16.mxu0 0
    %2685 = vmatmul.mubr.bf16.gmra.mrb[0].mxu0 %v2609
    %v2686 = vpop.f32.mrb[0].mxu0
    %v2687 = vadd.f32 0.0, %v2686
    %v2688 = vpop.f32.mrb[0].mxu0
    %v2689 = vadd.f32 0.0, %v2688
    %v2690 = vpop.f32.mrb[0].mxu0
    %v2691 = vpop.f32.mrb[0].mxu0
    %2692 = vdwg.mxu0
    %2693 = vmatprep.subr.bf16.mxu0 %v2026
    %2694 = vmatpush1.bf16.msra.mxu0 %v2025
    %2695 = vmatprep.subr.bf16.mxu0 %v2042
    %2696 = vmatpush1.bf16.msra.mxu0 %v2041
    %2697 = vmatprep.subr.bf16.mxu0 %v2058
    %2698 = vmatpush1.bf16.msra.mxu0 %v2057
    %2699 = vmatprep.subr.bf16.mxu0 %v2074
    %2700 = vmatpush1.bf16.msra.mxu0 %v2073
    %2701 = vmatprep.subr.bf16.mxu0 0
    %2702 = vmatpush1.bf16.msra.mxu0 0
    %2703 = vmatprep.subr.bf16.mxu0 0
    %2704 = vmatpush1.bf16.msra.mxu0 0
    %2705 = vmatprep.subr.bf16.mxu0 0
    %2706 = vmatpush1.bf16.msra.mxu0 0
    %2707 = vmatprep.subr.bf16.mxu0 0
    %2708 = vmatpush1.bf16.msra.mxu0 0
    %2709 = vmatprep.subr.bf16.mxu0 0
    %2710 = vmatpush1.bf16.msra.mxu0 0
    %2711 = vmatprep.subr.bf16.mxu0 0
    %2712 = vmatpush1.bf16.msra.mxu0 0
    %2713 = vmatprep.subr.bf16.mxu0 0
    %2714 = vmatpush1.bf16.msra.mxu0 0
    %2715 = vmatprep.subr.bf16.mxu0 0
    %2716 = vmatpush1.bf16.msra.mxu0 0
    %2717 = vmatprep.subr.bf16.mxu0 0
    %2718 = vmatpush1.bf16.msra.mxu0 0
    %2719 = vmatprep.subr.bf16.mxu0 0
    %2720 = vmatpush1.bf16.msra.mxu0 0
    %2721 = vmatprep.subr.bf16.mxu0 0
    %2722 = vmatpush1.bf16.msra.mxu0 0
    %2723 = vmatprep.subr.bf16.mxu0 0
    %2724 = vmatpush1.bf16.msra.mxu0 0
    %2725 = vmatprep.mubr.bf16.mxu0 0
    %2726 = vmatmul.mubr.bf16.gmra.mrb[0].mxu0 %v2609
    %v2727 = vpop.f32.mrb[0].mxu0
    %v2728 = vadd.f32 0.0, %v2727
    %v2729 = vpop.f32.mrb[0].mxu0
    %v2730 = vadd.f32 0.0, %v2729
    %v2731 = vpop.f32.mrb[0].mxu0
    %v2732 = vpop.f32.mrb[0].mxu0
    %2733 = vdwg.mxu0
    %2734 = vmatprep.subr.bf16.mxu0 %v2028
    %2735 = vmatpush1.bf16.msra.mxu0 %v2027
    %2736 = vmatprep.subr.bf16.mxu0 %v2044
    %2737 = vmatpush1.bf16.msra.mxu0 %v2043
    %2738 = vmatprep.subr.bf16.mxu0 %v2060
    %2739 = vmatpush1.bf16.msra.mxu0 %v2059
    %2740 = vmatprep.subr.bf16.mxu0 %v2076
    %2741 = vmatpush1.bf16.msra.mxu0 %v2075
    %2742 = vmatprep.subr.bf16.mxu0 0
    %2743 = vmatpush1.bf16.msra.mxu0 0
    %2744 = vmatprep.subr.bf16.mxu0 0
    %2745 = vmatpush1.bf16.msra.mxu0 0
    %2746 = vmatprep.subr.bf16.mxu0 0
    %2747 = vmatpush1.bf16.msra.mxu0 0
    %2748 = vmatprep.subr.bf16.mxu0 0
    %2749 = vmatpush1.bf16.msra.mxu0 0
    %2750 = vmatprep.subr.bf16.mxu0 0
    %2751 = vmatpush1.bf16.msra.mxu0 0
    %2752 = vmatprep.subr.bf16.mxu0 0
    %2753 = vmatpush1.bf16.msra.mxu0 0
    %2754 = vmatprep.subr.bf16.mxu0 0
    %2755 = vmatpush1.bf16.msra.mxu0 0
    %2756 = vmatprep.subr.bf16.mxu0 0
    %2757 = vmatpush1.bf16.msra.mxu0 0
    %2758 = vmatprep.subr.bf16.mxu0 0
    %2759 = vmatpush1.bf16.msra.mxu0 0
    %2760 = vmatprep.subr.bf16.mxu0 0
    %2761 = vmatpush1.bf16.msra.mxu0 0
    %2762 = vmatprep.subr.bf16.mxu0 0
    %2763 = vmatpush1.bf16.msra.mxu0 0
    %2764 = vmatprep.subr.bf16.mxu0 0
    %2765 = vmatpush1.bf16.msra.mxu0 0
    %2766 = vmatprep.mubr.bf16.mxu0 0
    %2767 = vmatmul.mubr.bf16.gmra.mrb[0].mxu0 %v2609
    %v2768 = vpop.f32.mrb[0].mxu0
    %v2769 = vadd.f32 0.0, %v2768
    %v2770 = vpop.f32.mrb[0].mxu0
    %v2771 = vadd.f32 0.0, %v2770
    %v2772 = vpop.f32.mrb[0].mxu0
    %v2773 = vpop.f32.mrb[0].mxu0
    %2774 = vdwg.mxu0
    %2775 = vmatprep.subr.bf16.mxu0 %v2030
    %2776 = vmatpush1.bf16.msra.mxu0 %v2029
    %2777 = vmatprep.subr.bf16.mxu0 %v2046
    %2778 = vmatpush1.bf16.msra.mxu0 %v2045
    %2779 = vmatprep.subr.bf16.mxu0 %v2062
    %2780 = vmatpush1.bf16.msra.mxu0 %v2061
    %2781 = vmatprep.subr.bf16.mxu0 %v2078
    %2782 = vmatpush1.bf16.msra.mxu0 %v2077
    %2783 = vmatprep.subr.bf16.mxu0 0
    %2784 = vmatpush1.bf16.msra.mxu0 0
    %2785 = vmatprep.subr.bf16.mxu0 0
    %2786 = vmatpush1.bf16.msra.mxu0 0
    %2787 = vmatprep.subr.bf16.mxu0 0
    %2788 = vmatpush1.bf16.msra.mxu0 0
    %2789 = vmatprep.subr.bf16.mxu0 0
    %2790 = vmatpush1.bf16.msra.mxu0 0
    %2791 = vmatprep.subr.bf16.mxu0 0
    %2792 = vmatpush1.bf16.msra.mxu0 0
    %2793 = vmatprep.subr.bf16.mxu0 0
    %2794 = vmatpush1.bf16.msra.mxu0 0
    %2795 = vmatprep.subr.bf16.mxu0 0
    %2796 = vmatpush1.bf16.msra.mxu0 0
    %2797 = vmatprep.subr.bf16.mxu0 0
    %2798 = vmatpush1.bf16.msra.mxu0 0
    %2799 = vmatprep.subr.bf16.mxu0 0
    %2800 = vmatpush1.bf16.msra.mxu0 0
    %2801 = vmatprep.subr.bf16.mxu0 0
    %2802 = vmatpush1.bf16.msra.mxu0 0
    %2803 = vmatprep.subr.bf16.mxu0 0
    %2804 = vmatpush1.bf16.msra.mxu0 0
    %2805 = vmatprep.subr.bf16.mxu0 0
    %2806 = vmatpush1.bf16.msra.mxu0 0
    %2807 = vmatprep.mubr.bf16.mxu0 0
    %2808 = vmatmul.mubr.bf16.gmra.mrb[0].mxu0 %v2609
    %v2809 = vpop.f32.mrb[0].mxu0
    %v2810 = vadd.f32 0.0, %v2809
    %v2811 = vpop.f32.mrb[0].mxu0
    %v2812 = vadd.f32 0.0, %v2811
    %v2813 = vpop.f32.mrb[0].mxu0
    %v2814 = vpop.f32.mrb[0].mxu0
    %2815 = vdwg.mxu0
    %2816 = vmatprep.subr.bf16.mxu0 %v2032
    %2817 = vmatpush1.bf16.msra.mxu0 %v2031
    %2818 = vmatprep.subr.bf16.mxu0 %v2048
    %2819 = vmatpush1.bf16.msra.mxu0 %v2047
    %2820 = vmatprep.subr.bf16.mxu0 %v2064
    %2821 = vmatpush1.bf16.msra.mxu0 %v2063
    %2822 = vmatprep.subr.bf16.mxu0 %v2080
    %2823 = vmatpush1.bf16.msra.mxu0 %v2079
    %2824 = vmatprep.subr.bf16.mxu0 0
    %2825 = vmatpush1.bf16.msra.mxu0 0
    %2826 = vmatprep.subr.bf16.mxu0 0
    %2827 = vmatpush1.bf16.msra.mxu0 0
    %2828 = vmatprep.subr.bf16.mxu0 0
    %2829 = vmatpush1.bf16.msra.mxu0 0
    %2830 = vmatprep.subr.bf16.mxu0 0
    %2831 = vmatpush1.bf16.msra.mxu0 0
    %2832 = vmatprep.subr.bf16.mxu0 0
    %2833 = vmatpush1.bf16.msra.mxu0 0
    %2834 = vmatprep.subr.bf16.mxu0 0
    %2835 = vmatpush1.bf16.msra.mxu0 0
    %2836 = vmatprep.subr.bf16.mxu0 0
    %2837 = vmatpush1.bf16.msra.mxu0 0
    %2838 = vmatprep.subr.bf16.mxu0 0
    %2839 = vmatpush1.bf16.msra.mxu0 0
    %2840 = vmatprep.subr.bf16.mxu0 0
    %2841 = vmatpush1.bf16.msra.mxu0 0
    %2842 = vmatprep.subr.bf16.mxu0 0
    %2843 = vmatpush1.bf16.msra.mxu0 0
    %2844 = vmatprep.subr.bf16.mxu0 0
    %2845 = vmatpush1.bf16.msra.mxu0 0
    %2846 = vmatprep.subr.bf16.mxu0 0
    %2847 = vmatpush1.bf16.msra.mxu0 0
    %2848 = vmatprep.mubr.bf16.mxu0 0
    %2849 = vmatmul.mubr.bf16.gmra.mrb[0].mxu0 %v2609
    %v2850 = vpop.f32.mrb[0].mxu0
    %v2851 = vadd.f32 0.0, %v2850
    %v2852 = vpop.f32.mrb[0].mxu0
    %v2853 = vadd.f32 0.0, %v2852
    %v2854 = vpop.f32.mrb[0].mxu0
    %v2855 = vpop.f32.mrb[0].mxu0
    %2856 = vdwg.mxu0
    %2857 = vmatprep.subr.bf16.mxu0 %v2034
    %2858 = vmatpush1.bf16.msra.mxu0 %v2033
    %2859 = vmatprep.subr.bf16.mxu0 %v2050
    %2860 = vmatpush1.bf16.msra.mxu0 %v2049
    %2861 = vmatprep.subr.bf16.mxu0 %v2066
    %2862 = vmatpush1.bf16.msra.mxu0 %v2065
    %2863 = vmatprep.subr.bf16.mxu0 %v2082
    %2864 = vmatpush1.bf16.msra.mxu0 %v2081
    %2865 = vmatprep.subr.bf16.mxu0 0
    %2866 = vmatpush1.bf16.msra.mxu0 0
    %2867 = vmatprep.subr.bf16.mxu0 0
    %2868 = vmatpush1.bf16.msra.mxu0 0
    %2869 = vmatprep.subr.bf16.mxu0 0
    %2870 = vmatpush1.bf16.msra.mxu0 0
    %2871 = vmatprep.subr.bf16.mxu0 0
    %2872 = vmatpush1.bf16.msra.mxu0 0
    %2873 = vmatprep.subr.bf16.mxu0 0
    %2874 = vmatpush1.bf16.msra.mxu0 0
    %2875 = vmatprep.subr.bf16.mxu0 0
    %2876 = vmatpush1.bf16.msra.mxu0 0
    %2877 = vmatprep.subr.bf16.mxu0 0
    %2878 = vmatpush1.bf16.msra.mxu0 0
    %2879 = vmatprep.subr.bf16.mxu0 0
    %2880 = vmatpush1.bf16.msra.mxu0 0
    %2881 = vmatprep.subr.bf16.mxu0 0
    %2882 = vmatpush1.bf16.msra.mxu0 0
    %2883 = vmatprep.subr.bf16.mxu0 0
    %2884 = vmatpush1.bf16.msra.mxu0 0
    %2885 = vmatprep.subr.bf16.mxu0 0
    %2886 = vmatpush1.bf16.msra.mxu0 0
    %2887 = vmatprep.subr.bf16.mxu0 0
    %2888 = vmatpush1.bf16.msra.mxu0 0
    %2889 = vmatprep.mubr.bf16.mxu0 0
    %2890 = vmatmul.mubr.bf16.gmra.mrb[0].mxu0 %v2609
    %v2891 = vpop.f32.mrb[0].mxu0
    %v2892 = vadd.f32 0.0, %v2891
    %v2893 = vpop.f32.mrb[0].mxu0
    %v2894 = vadd.f32 0.0, %v2893
    %v2895 = vpop.f32.mrb[0].mxu0
    %v2896 = vpop.f32.mrb[0].mxu0
    %2897 = vdwg.mxu0
    %2898 = vmatprep.subr.bf16.mxu0 %v2036
    %2899 = vmatpush1.bf16.msra.mxu0 %v2035
    %2900 = vmatprep.subr.bf16.mxu0 %v2052
    %2901 = vmatpush1.bf16.msra.mxu0 %v2051
    %2902 = vmatprep.subr.bf16.mxu0 %v2068
    %2903 = vmatpush1.bf16.msra.mxu0 %v2067
    %2904 = vmatprep.subr.bf16.mxu0 %v2084
    %2905 = vmatpush1.bf16.msra.mxu0 %v2083
    %2906 = vmatprep.subr.bf16.mxu0 0
    %2907 = vmatpush1.bf16.msra.mxu0 0
    %2908 = vmatprep.subr.bf16.mxu0 0
    %2909 = vmatpush1.bf16.msra.mxu0 0
    %2910 = vmatprep.subr.bf16.mxu0 0
    %2911 = vmatpush1.bf16.msra.mxu0 0
    %2912 = vmatprep.subr.bf16.mxu0 0
    %2913 = vmatpush1.bf16.msra.mxu0 0
    %2914 = vmatprep.subr.bf16.mxu0 0
    %2915 = vmatpush1.bf16.msra.mxu0 0
    %2916 = vmatprep.subr.bf16.mxu0 0
    %2917 = vmatpush1.bf16.msra.mxu0 0
    %2918 = vmatprep.subr.bf16.mxu0 0
    %2919 = vmatpush1.bf16.msra.mxu0 0
    %2920 = vmatprep.subr.bf16.mxu0 0
    %2921 = vmatpush1.bf16.msra.mxu0 0
    %2922 = vmatprep.subr.bf16.mxu0 0
    %2923 = vmatpush1.bf16.msra.mxu0 0
    %2924 = vmatprep.subr.bf16.mxu0 0
    %2925 = vmatpush1.bf16.msra.mxu0 0
    %2926 = vmatprep.subr.bf16.mxu0 0
    %2927 = vmatpush1.bf16.msra.mxu0 0
    %2928 = vmatprep.subr.bf16.mxu0 0
    %2929 = vmatpush1.bf16.msra.mxu0 0
    %2930 = vmatprep.mubr.bf16.mxu0 0
    %2931 = vmatmul.mubr.bf16.gmra.mrb[0].mxu0 %v2609
    %v2932 = vpop.f32.mrb[0].mxu0
    %v2933 = vadd.f32 0.0, %v2932
    %v2934 = vpop.f32.mrb[0].mxu0
    %v2935 = vadd.f32 0.0, %v2934
    %v2936 = vpop.f32.mrb[0].mxu0
    %v2937 = vpop.f32.mrb[0].mxu0
    %2938 = vdwg.mxu0
    %v2941 = vlaneseq
    %v2942 = vshrl.u32 %v2941, 7
    %v2943 = vsub.s32 0, %v2942
    %v2944 = vrot.slane %v2090, %v2943
    %v2945 = vlaneseq
    %v2946 = vshrl.u32 %v2945, 7
    %v2947 = vsub.s32 1, %v2946
    %v2948 = vrot.slane %v2090, %v2947
    %v2949 = vlaneseq
    %v2950 = vshrl.u32 %v2949, 7
    %v2951 = vsub.s32 2, %v2950
    %v2952 = vrot.slane %v2090, %v2951
    %v2953 = vlaneseq
    %v2954 = vshrl.u32 %v2953, 7
    %v2955 = vsub.s32 3, %v2954
    %v2956 = vrot.slane %v2090, %v2955
    %v2957 = vlaneseq
    %v2958 = vshrl.u32 %v2957, 7
    %v2959 = vsub.s32 4, %v2958
    %v2960 = vrot.slane %v2090, %v2959
    %v2961 = vlaneseq
    %v2962 = vshrl.u32 %v2961, 7
    %v2963 = vsub.s32 5, %v2962
    %v2964 = vrot.slane %v2090, %v2963
    %v2965 = vlaneseq
    %v2966 = vshrl.u32 %v2965, 7
    %v2967 = vsub.s32 6, %v2966
    %v2968 = vrot.slane %v2090, %v2967
    %v2969 = vlaneseq
    %v2970 = vshrl.u32 %v2969, 7
    %v2971 = vsub.s32 7, %v2970
    %v2972 = vrot.slane %v2090, %v2971
    %v2973 = vlaneseq
    %v2974 = vshrl.u32 %v2973, 7
    %v2975 = vsub.s32 0, %v2974
    %v2976 = vrot.slane %v2092, %v2975
    %v2977 = vlaneseq
    %v2978 = vshrl.u32 %v2977, 7
    %v2979 = vsub.s32 1, %v2978
    %v2980 = vrot.slane %v2092, %v2979
    %v2981 = vlaneseq
    %v2982 = vshrl.u32 %v2981, 7
    %v2983 = vsub.s32 2, %v2982
    %v2984 = vrot.slane %v2092, %v2983
    %v2985 = vlaneseq
    %v2986 = vshrl.u32 %v2985, 7
    %v2987 = vsub.s32 3, %v2986
    %v2988 = vrot.slane %v2092, %v2987
    %v2989 = vlaneseq
    %v2990 = vshrl.u32 %v2989, 7
    %v2991 = vsub.s32 4, %v2990
    %v2992 = vrot.slane %v2092, %v2991
    %v2993 = vlaneseq
    %v2994 = vshrl.u32 %v2993, 7
    %v2995 = vsub.s32 5, %v2994
    %v2996 = vrot.slane %v2092, %v2995
    %v2997 = vlaneseq
    %v2998 = vshrl.u32 %v2997, 7
    %v2999 = vsub.s32 6, %v2998
    %v3000 = vrot.slane %v2092, %v2999
    %v3001 = vlaneseq
    %v3002 = vshrl.u32 %v3001, 7
    %v3003 = vsub.s32 7, %v3002
    %v3004 = vrot.slane %v2092, %v3003
    %v3021 = vmul.f32 %v2646, %v2944
    %v3022 = vmul.f32 %v2648, %v2948
    %v3023 = vmul.f32 %v2687, %v2952
    %v3024 = vmul.f32 %v2689, %v2956
    %v3025 = vmul.f32 %v2728, %v2960
    %v3026 = vmul.f32 %v2730, %v2964
    %v3027 = vmul.f32 %v2769, %v2968
    %v3028 = vmul.f32 %v2771, %v2972
    %v3029 = vmul.f32 %v2810, %v2976
    %v3030 = vmul.f32 %v2812, %v2980
    %v3031 = vmul.f32 %v2851, %v2984
    %v3032 = vmul.f32 %v2853, %v2988
    %v3033 = vmul.f32 %v2892, %v2992
    %v3034 = vmul.f32 %v2894, %v2996
    %v3035 = vmul.f32 %v2933, %v3000
    %v3036 = vmul.f32 %v2935, %v3004
    %v3039 = vlaneseq
    %v3040 = vshrl.u32 %v3039, 7
    %v3041 = vsub.s32 0, %v3040
    %v3042 = vrot.slane %v2086, %v3041
    %v3043 = vlaneseq
    %v3044 = vshrl.u32 %v3043, 7
    %v3045 = vsub.s32 1, %v3044
    %v3046 = vrot.slane %v2086, %v3045
    %v3047 = vlaneseq
    %v3048 = vshrl.u32 %v3047, 7
    %v3049 = vsub.s32 2, %v3048
    %v3050 = vrot.slane %v2086, %v3049
    %v3051 = vlaneseq
    %v3052 = vshrl.u32 %v3051, 7
    %v3053 = vsub.s32 3, %v3052
    %v3054 = vrot.slane %v2086, %v3053
    %v3055 = vlaneseq
    %v3056 = vshrl.u32 %v3055, 7
    %v3057 = vsub.s32 4, %v3056
    %v3058 = vrot.slane %v2086, %v3057
    %v3059 = vlaneseq
    %v3060 = vshrl.u32 %v3059, 7
    %v3061 = vsub.s32 5, %v3060
    %v3062 = vrot.slane %v2086, %v3061
    %v3063 = vlaneseq
    %v3064 = vshrl.u32 %v3063, 7
    %v3065 = vsub.s32 6, %v3064
    %v3066 = vrot.slane %v2086, %v3065
    %v3067 = vlaneseq
    %v3068 = vshrl.u32 %v3067, 7
    %v3069 = vsub.s32 7, %v3068
    %v3070 = vrot.slane %v2086, %v3069
    %v3071 = vlaneseq
    %v3072 = vshrl.u32 %v3071, 7
    %v3073 = vsub.s32 0, %v3072
    %v3074 = vrot.slane %v2088, %v3073
    %v3075 = vlaneseq
    %v3076 = vshrl.u32 %v3075, 7
    %v3077 = vsub.s32 1, %v3076
    %v3078 = vrot.slane %v2088, %v3077
    %v3079 = vlaneseq
    %v3080 = vshrl.u32 %v3079, 7
    %v3081 = vsub.s32 2, %v3080
    %v3082 = vrot.slane %v2088, %v3081
    %v3083 = vlaneseq
    %v3084 = vshrl.u32 %v3083, 7
    %v3085 = vsub.s32 3, %v3084
    %v3086 = vrot.slane %v2088, %v3085
    %v3087 = vlaneseq
    %v3088 = vshrl.u32 %v3087, 7
    %v3089 = vsub.s32 4, %v3088
    %v3090 = vrot.slane %v2088, %v3089
    %v3091 = vlaneseq
    %v3092 = vshrl.u32 %v3091, 7
    %v3093 = vsub.s32 5, %v3092
    %v3094 = vrot.slane %v2088, %v3093
    %v3095 = vlaneseq
    %v3096 = vshrl.u32 %v3095, 7
    %v3097 = vsub.s32 6, %v3096
    %v3098 = vrot.slane %v2088, %v3097
    %v3099 = vlaneseq
    %v3100 = vshrl.u32 %v3099, 7
    %v3101 = vsub.s32 7, %v3100
    %v3102 = vrot.slane %v2088, %v3101
    %v3119 = vadd.f32 %v3021, %v3042
    %v3120 = vadd.f32 %v3022, %v3046
    %v3121 = vadd.f32 %v3023, %v3050
    %v3122 = vadd.f32 %v3024, %v3054
    %v3123 = vadd.f32 %v3025, %v3058
    %v3124 = vadd.f32 %v3026, %v3062
    %v3125 = vadd.f32 %v3027, %v3066
    %v3126 = vadd.f32 %v3028, %v3070
    %v3127 = vadd.f32 %v3029, %v3074
    %v3128 = vadd.f32 %v3030, %v3078
    %v3129 = vadd.f32 %v3031, %v3082
    %v3130 = vadd.f32 %v3032, %v3086
    %v3131 = vadd.f32 %v3033, %v3090
    %v3132 = vadd.f32 %v3034, %v3094
    %v3133 = vadd.f32 %v3035, %v3098
    %v3134 = vadd.f32 %v3036, %v3102
    %v3135 = vmax.f32 %v3119, 0.0
    %v3136 = vmax.f32 %v3120, 0.0
    %v3137 = vmax.f32 %v3121, 0.0
    %v3138 = vmax.f32 %v3122, 0.0
    %v3139 = vmax.f32 %v3123, 0.0
    %v3140 = vmax.f32 %v3124, 0.0
    %v3141 = vmax.f32 %v3125, 0.0
    %v3142 = vmax.f32 %v3126, 0.0
    %v3143 = vmax.f32 %v3127, 0.0
    %v3144 = vmax.f32 %v3128, 0.0
    %v3145 = vmax.f32 %v3129, 0.0
    %v3146 = vmax.f32 %v3130, 0.0
    %v3147 = vmax.f32 %v3131, 0.0
    %v3148 = vmax.f32 %v3132, 0.0
    %v3149 = vmax.f32 %v3133, 0.0
    %v3150 = vmax.f32 %v3134, 0.0
    %v3151 = vpack.c.bf16 %v3135, %v3135
    %v3152 = vpack.c.bf16 %v3136, %v3136
    %v3153 = vpack.c.bf16 %v3137, %v3137
    %v3154 = vpack.c.bf16 %v3138, %v3138
    %v3155 = vpack.c.bf16 %v3139, %v3139
    %v3156 = vpack.c.bf16 %v3140, %v3140
    %v3157 = vpack.c.bf16 %v3141, %v3141
    %v3158 = vpack.c.bf16 %v3142, %v3142
    %v3159 = vpack.c.bf16 %v3143, %v3143
    %v3160 = vpack.c.bf16 %v3144, %v3144
    %v3161 = vpack.c.bf16 %v3145, %v3145
    %v3162 = vpack.c.bf16 %v3146, %v3146
    %v3163 = vpack.c.bf16 %v3147, %v3147
    %v3164 = vpack.c.bf16 %v3148, %v3148
    %v3165 = vpack.c.bf16 %v3149, %v3149
    %v3166 = vpack.c.bf16 %v3150, %v3150
    %3167 = vmatprep.subr.bf16.mxu0 0
    %3168 = vmatpush1.bf16.msra.mxu0 %v279
    %3169 = vmatprep.subr.bf16.mxu0 0
    %3170 = vmatpush1.bf16.msra.mxu0 %v280
    %3171 = vmatprep.subr.bf16.mxu0 0
    %3172 = vmatpush1.bf16.msra.mxu0 %v281
    %3173 = vmatprep.subr.bf16.mxu0 0
    %3174 = vmatpush1.bf16.msra.mxu0 %v282
    %3175 = vmatprep.subr.bf16.mxu0 0
    %3176 = vmatpush1.bf16.msra.mxu0 %v283
    %3177 = vmatprep.subr.bf16.mxu0 0
    %3178 = vmatpush1.bf16.msra.mxu0 %v284
    %3179 = vmatprep.subr.bf16.mxu0 0
    %3180 = vmatpush1.bf16.msra.mxu0 %v285
    %3181 = vmatprep.subr.bf16.mxu0 0
    %3182 = vmatpush1.bf16.msra.mxu0 %v286
    %3183 = vmatprep.subr.bf16.mxu0 0
    %3184 = vmatpush1.bf16.msra.mxu0 %v287
    %3185 = vmatprep.subr.bf16.mxu0 0
    %3186 = vmatpush1.bf16.msra.mxu0 %v288
    %3187 = vmatprep.subr.bf16.mxu0 0
    %3188 = vmatpush1.bf16.msra.mxu0 %v289
    %3189 = vmatprep.subr.bf16.mxu0 0
    %3190 = vmatpush1.bf16.msra.mxu0 %v290
    %3191 = vmatprep.subr.bf16.mxu0 0
    %3192 = vmatpush1.bf16.msra.mxu0 %v291
    %3193 = vmatprep.subr.bf16.mxu0 0
    %3194 = vmatpush1.bf16.msra.mxu0 %v292
    %3195 = vmatprep.subr.bf16.mxu0 0
    %3196 = vmatpush1.bf16.msra.mxu0 %v293
    %3197 = vmatprep.subr.bf16.mxu0 0
    %3198 = vmatpush1.bf16.msra.mxu0 %v294
    %3199 = vmatprep.mubr.bf16.mxu0 %v3152
    %3200 = vmatmul.mubr.bf16.gmra.mrb[0].mxu0 %v3151
    %v3201 = vpop.f32.mrb[0].mxu0
    %v3202 = vadd.f32 0.0, %v3201
    %v3203 = vpop.f32.mrb[0].mxu0
    %v3204 = vpop.f32.mrb[0].mxu0
    %v3205 = vpop.f32.mrb[0].mxu0
    %3206 = vdwg.mxu0
    %3207 = vmatprep.subr.bf16.mxu0 0
    %3208 = vmatpush1.bf16.msra.mxu0 %v295
    %3209 = vmatprep.subr.bf16.mxu0 0
    %3210 = vmatpush1.bf16.msra.mxu0 %v296
    %3211 = vmatprep.subr.bf16.mxu0 0
    %3212 = vmatpush1.bf16.msra.mxu0 %v297
    %3213 = vmatprep.subr.bf16.mxu0 0
    %3214 = vmatpush1.bf16.msra.mxu0 %v298
    %3215 = vmatprep.subr.bf16.mxu0 0
    %3216 = vmatpush1.bf16.msra.mxu0 %v299
    %3217 = vmatprep.subr.bf16.mxu0 0
    %3218 = vmatpush1.bf16.msra.mxu0 %v300
    %3219 = vmatprep.subr.bf16.mxu0 0
    %3220 = vmatpush1.bf16.msra.mxu0 %v301
    %3221 = vmatprep.subr.bf16.mxu0 0
    %3222 = vmatpush1.bf16.msra.mxu0 %v302
    %3223 = vmatprep.subr.bf16.mxu0 0
    %3224 = vmatpush1.bf16.msra.mxu0 %v303
    %3225 = vmatprep.subr.bf16.mxu0 0
    %3226 = vmatpush1.bf16.msra.mxu0 %v304
    %3227 = vmatprep.subr.bf16.mxu0 0
    %3228 = vmatpush1.bf16.msra.mxu0 %v305
    %3229 = vmatprep.subr.bf16.mxu0 0
    %3230 = vmatpush1.bf16.msra.mxu0 %v306
    %3231 = vmatprep.subr.bf16.mxu0 0
    %3232 = vmatpush1.bf16.msra.mxu0 %v307
    %3233 = vmatprep.subr.bf16.mxu0 0
    %3234 = vmatpush1.bf16.msra.mxu0 %v308
    %3235 = vmatprep.subr.bf16.mxu0 0
    %3236 = vmatpush1.bf16.msra.mxu0 %v309
    %3237 = vmatprep.subr.bf16.mxu0 0
    %3238 = vmatpush1.bf16.msra.mxu0 %v310
    %3239 = vmatprep.mubr.bf16.mxu0 %v3154
    %3240 = vmatmul.mubr.bf16.gmra.mrb[0].mxu0 %v3153
    %v3241 = vpop.f32.mrb[0].mxu0
    %v3242 = vadd.f32 %v3202, %v3241
    %v3243 = vpop.f32.mrb[0].mxu0
    %v3244 = vpop.f32.mrb[0].mxu0
    %v3245 = vpop.f32.mrb[0].mxu0
    %3246 = vdwg.mxu0
    %3247 = vmatprep.subr.bf16.mxu0 0
    %3248 = vmatpush1.bf16.msra.mxu0 %v311
    %3249 = vmatprep.subr.bf16.mxu0 0
    %3250 = vmatpush1.bf16.msra.mxu0 %v312
    %3251 = vmatprep.subr.bf16.mxu0 0
    %3252 = vmatpush1.bf16.msra.mxu0 %v313
    %3253 = vmatprep.subr.bf16.mxu0 0
    %3254 = vmatpush1.bf16.msra.mxu0 %v314
    %3255 = vmatprep.subr.bf16.mxu0 0
    %3256 = vmatpush1.bf16.msra.mxu0 %v315
    %3257 = vmatprep.subr.bf16.mxu0 0
    %3258 = vmatpush1.bf16.msra.mxu0 %v316
    %3259 = vmatprep.subr.bf16.mxu0 0
    %3260 = vmatpush1.bf16.msra.mxu0 %v317
    %3261 = vmatprep.subr.bf16.mxu0 0
    %3262 = vmatpush1.bf16.msra.mxu0 %v318
    %3263 = vmatprep.subr.bf16.mxu0 0
    %3264 = vmatpush1.bf16.msra.mxu0 %v319
    %3265 = vmatprep.subr.bf16.mxu0 0
    %3266 = vmatpush1.bf16.msra.mxu0 %v320
    %3267 = vmatprep.subr.bf16.mxu0 0
    %3268 = vmatpush1.bf16.msra.mxu0 %v321
    %3269 = vmatprep.subr.bf16.mxu0 0
    %3270 = vmatpush1.bf16.msra.mxu0 %v322
    %3271 = vmatprep.subr.bf16.mxu0 0
    %3272 = vmatpush1.bf16.msra.mxu0 %v323
    %3273 = vmatprep.subr.bf16.mxu0 0
    %3274 = vmatpush1.bf16.msra.mxu0 %v324
    %3275 = vmatprep.subr.bf16.mxu0 0
    %3276 = vmatpush1.bf16.msra.mxu0 %v325
    %3277 = vmatprep.subr.bf16.mxu0 0
    %3278 = vmatpush1.bf16.msra.mxu0 %v326
    %3279 = vmatprep.mubr.bf16.mxu0 %v3156
    %3280 = vmatmul.mubr.bf16.gmra.mrb[0].mxu0 %v3155
    %v3281 = vpop.f32.mrb[0].mxu0
    %v3282 = vadd.f32 %v3242, %v3281
    %v3283 = vpop.f32.mrb[0].mxu0
    %v3284 = vpop.f32.mrb[0].mxu0
    %v3285 = vpop.f32.mrb[0].mxu0
    %3286 = vdwg.mxu0
    %3287 = vmatprep.subr.bf16.mxu0 0
    %3288 = vmatpush1.bf16.msra.mxu0 %v327
    %3289 = vmatprep.subr.bf16.mxu0 0
    %3290 = vmatpush1.bf16.msra.mxu0 %v328
    %3291 = vmatprep.subr.bf16.mxu0 0
    %3292 = vmatpush1.bf16.msra.mxu0 %v329
    %3293 = vmatprep.subr.bf16.mxu0 0
    %3294 = vmatpush1.bf16.msra.mxu0 %v330
    %3295 = vmatprep.subr.bf16.mxu0 0
    %3296 = vmatpush1.bf16.msra.mxu0 %v331
    %3297 = vmatprep.subr.bf16.mxu0 0
    %3298 = vmatpush1.bf16.msra.mxu0 %v332
    %3299 = vmatprep.subr.bf16.mxu0 0
    %3300 = vmatpush1.bf16.msra.mxu0 %v333
    %3301 = vmatprep.subr.bf16.mxu0 0
    %3302 = vmatpush1.bf16.msra.mxu0 %v334
    %3303 = vmatprep.subr.bf16.mxu0 0
    %3304 = vmatpush1.bf16.msra.mxu0 %v335
    %3305 = vmatprep.subr.bf16.mxu0 0
    %3306 = vmatpush1.bf16.msra.mxu0 %v336
    %3307 = vmatprep.subr.bf16.mxu0 0
    %3308 = vmatpush1.bf16.msra.mxu0 %v337
    %3309 = vmatprep.subr.bf16.mxu0 0
    %3310 = vmatpush1.bf16.msra.mxu0 %v338
    %3311 = vmatprep.subr.bf16.mxu0 0
    %3312 = vmatpush1.bf16.msra.mxu0 %v339
    %3313 = vmatprep.subr.bf16.mxu0 0
    %3314 = vmatpush1.bf16.msra.mxu0 %v340
    %3315 = vmatprep.subr.bf16.mxu0 0
    %3316 = vmatpush1.bf16.msra.mxu0 %v341
    %3317 = vmatprep.subr.bf16.mxu0 0
    %3318 = vmatpush1.bf16.msra.mxu0 %v342
    %3319 = vmatprep.mubr.bf16.mxu0 %v3158
    %3320 = vmatmul.mubr.bf16.gmra.mrb[0].mxu0 %v3157
    %v3321 = vpop.f32.mrb[0].mxu0
    %v3322 = vadd.f32 %v3282, %v3321
    %v3323 = vpop.f32.mrb[0].mxu0
    %v3324 = vpop.f32.mrb[0].mxu0
    %v3325 = vpop.f32.mrb[0].mxu0
    %3326 = vdwg.mxu0
    %3327 = vmatprep.subr.bf16.mxu0 0
    %3328 = vmatpush1.bf16.msra.mxu0 %v343
    %3329 = vmatprep.subr.bf16.mxu0 0
    %3330 = vmatpush1.bf16.msra.mxu0 %v344
    %3331 = vmatprep.subr.bf16.mxu0 0
    %3332 = vmatpush1.bf16.msra.mxu0 %v345
    %3333 = vmatprep.subr.bf16.mxu0 0
    %3334 = vmatpush1.bf16.msra.mxu0 %v346
    %3335 = vmatprep.subr.bf16.mxu0 0
    %3336 = vmatpush1.bf16.msra.mxu0 %v347
    %3337 = vmatprep.subr.bf16.mxu0 0
    %3338 = vmatpush1.bf16.msra.mxu0 %v348
    %3339 = vmatprep.subr.bf16.mxu0 0
    %3340 = vmatpush1.bf16.msra.mxu0 %v349
    %3341 = vmatprep.subr.bf16.mxu0 0
    %3342 = vmatpush1.bf16.msra.mxu0 %v350
    %3343 = vmatprep.subr.bf16.mxu0 0
    %3344 = vmatpush1.bf16.msra.mxu0 %v351
    %3345 = vmatprep.subr.bf16.mxu0 0
    %3346 = vmatpush1.bf16.msra.mxu0 %v352
    %3347 = vmatprep.subr.bf16.mxu0 0
    %3348 = vmatpush1.bf16.msra.mxu0 %v353
    %3349 = vmatprep.subr.bf16.mxu0 0
    %3350 = vmatpush1.bf16.msra.mxu0 %v354
    %3351 = vmatprep.subr.bf16.mxu0 0
    %3352 = vmatpush1.bf16.msra.mxu0 %v355
    %3353 = vmatprep.subr.bf16.mxu0 0
    %3354 = vmatpush1.bf16.msra.mxu0 %v356
    %3355 = vmatprep.subr.bf16.mxu0 0
    %3356 = vmatpush1.bf16.msra.mxu0 %v357
    %3357 = vmatprep.subr.bf16.mxu0 0
    %3358 = vmatpush1.bf16.msra.mxu0 %v358
    %3359 = vmatprep.mubr.bf16.mxu0 %v3160
    %3360 = vmatmul.mubr.bf16.gmra.mrb[0].mxu0 %v3159
    %v3361 = vpop.f32.mrb[0].mxu0
    %v3362 = vadd.f32 %v3322, %v3361
    %v3363 = vpop.f32.mrb[0].mxu0
    %v3364 = vpop.f32.mrb[0].mxu0
    %v3365 = vpop.f32.mrb[0].mxu0
    %3366 = vdwg.mxu0
    %3367 = vmatprep.subr.bf16.mxu0 0
    %3368 = vmatpush1.bf16.msra.mxu0 %v359
    %3369 = vmatprep.subr.bf16.mxu0 0
    %3370 = vmatpush1.bf16.msra.mxu0 %v360
    %3371 = vmatprep.subr.bf16.mxu0 0
    %3372 = vmatpush1.bf16.msra.mxu0 %v361
    %3373 = vmatprep.subr.bf16.mxu0 0
    %3374 = vmatpush1.bf16.msra.mxu0 %v362
    %3375 = vmatprep.subr.bf16.mxu0 0
    %3376 = vmatpush1.bf16.msra.mxu0 %v363
    %3377 = vmatprep.subr.bf16.mxu0 0
    %3378 = vmatpush1.bf16.msra.mxu0 %v364
    %3379 = vmatprep.subr.bf16.mxu0 0
    %3380 = vmatpush1.bf16.msra.mxu0 %v365
    %3381 = vmatprep.subr.bf16.mxu0 0
    %3382 = vmatpush1.bf16.msra.mxu0 %v366
    %3383 = vmatprep.subr.bf16.mxu0 0
    %3384 = vmatpush1.bf16.msra.mxu0 %v367
    %3385 = vmatprep.subr.bf16.mxu0 0
    %3386 = vmatpush1.bf16.msra.mxu0 %v368
    %3387 = vmatprep.subr.bf16.mxu0 0
    %3388 = vmatpush1.bf16.msra.mxu0 %v369
    %3389 = vmatprep.subr.bf16.mxu0 0
    %3390 = vmatpush1.bf16.msra.mxu0 %v370
    %3391 = vmatprep.subr.bf16.mxu0 0
    %3392 = vmatpush1.bf16.msra.mxu0 %v371
    %3393 = vmatprep.subr.bf16.mxu0 0
    %3394 = vmatpush1.bf16.msra.mxu0 %v372
    %3395 = vmatprep.subr.bf16.mxu0 0
    %3396 = vmatpush1.bf16.msra.mxu0 %v373
    %3397 = vmatprep.subr.bf16.mxu0 0
    %3398 = vmatpush1.bf16.msra.mxu0 %v374
    %3399 = vmatprep.mubr.bf16.mxu0 %v3162
    %3400 = vmatmul.mubr.bf16.gmra.mrb[0].mxu0 %v3161
    %v3401 = vpop.f32.mrb[0].mxu0
    %v3402 = vadd.f32 %v3362, %v3401
    %v3403 = vpop.f32.mrb[0].mxu0
    %v3404 = vpop.f32.mrb[0].mxu0
    %v3405 = vpop.f32.mrb[0].mxu0
    %3406 = vdwg.mxu0
    %3407 = vmatprep.subr.bf16.mxu0 0
    %3408 = vmatpush1.bf16.msra.mxu0 %v375
    %3409 = vmatprep.subr.bf16.mxu0 0
    %3410 = vmatpush1.bf16.msra.mxu0 %v376
    %3411 = vmatprep.subr.bf16.mxu0 0
    %3412 = vmatpush1.bf16.msra.mxu0 %v377
    %3413 = vmatprep.subr.bf16.mxu0 0
    %3414 = vmatpush1.bf16.msra.mxu0 %v378
    %3415 = vmatprep.subr.bf16.mxu0 0
    %3416 = vmatpush1.bf16.msra.mxu0 %v379
    %3417 = vmatprep.subr.bf16.mxu0 0
    %3418 = vmatpush1.bf16.msra.mxu0 %v380
    %3419 = vmatprep.subr.bf16.mxu0 0
    %3420 = vmatpush1.bf16.msra.mxu0 %v381
    %3421 = vmatprep.subr.bf16.mxu0 0
    %3422 = vmatpush1.bf16.msra.mxu0 %v382
    %3423 = vmatprep.subr.bf16.mxu0 0
    %3424 = vmatpush1.bf16.msra.mxu0 %v383
    %3425 = vmatprep.subr.bf16.mxu0 0
    %3426 = vmatpush1.bf16.msra.mxu0 %v384
    %3427 = vmatprep.subr.bf16.mxu0 0
    %3428 = vmatpush1.bf16.msra.mxu0 %v385
    %3429 = vmatprep.subr.bf16.mxu0 0
    %3430 = vmatpush1.bf16.msra.mxu0 %v386
    %3431 = vmatprep.subr.bf16.mxu0 0
    %3432 = vmatpush1.bf16.msra.mxu0 %v387
    %3433 = vmatprep.subr.bf16.mxu0 0
    %3434 = vmatpush1.bf16.msra.mxu0 %v388
    %3435 = vmatprep.subr.bf16.mxu0 0
    %3436 = vmatpush1.bf16.msra.mxu0 %v389
    %3437 = vmatprep.subr.bf16.mxu0 0
    %3438 = vmatpush1.bf16.msra.mxu0 %v390
    %3439 = vmatprep.mubr.bf16.mxu0 %v3164
    %3440 = vmatmul.mubr.bf16.gmra.mrb[0].mxu0 %v3163
    %v3441 = vpop.f32.mrb[0].mxu0
    %v3442 = vadd.f32 %v3402, %v3441
    %v3443 = vpop.f32.mrb[0].mxu0
    %v3444 = vpop.f32.mrb[0].mxu0
    %v3445 = vpop.f32.mrb[0].mxu0
    %3446 = vdwg.mxu0
    %3447 = vmatprep.subr.bf16.mxu0 0
    %3448 = vmatpush1.bf16.msra.mxu0 %v391
    %3449 = vmatprep.subr.bf16.mxu0 0
    %3450 = vmatpush1.bf16.msra.mxu0 %v392
    %3451 = vmatprep.subr.bf16.mxu0 0
    %3452 = vmatpush1.bf16.msra.mxu0 %v393
    %3453 = vmatprep.subr.bf16.mxu0 0
    %3454 = vmatpush1.bf16.msra.mxu0 %v394
    %3455 = vmatprep.subr.bf16.mxu0 0
    %3456 = vmatpush1.bf16.msra.mxu0 %v395
    %3457 = vmatprep.subr.bf16.mxu0 0
    %3458 = vmatpush1.bf16.msra.mxu0 %v396
    %3459 = vmatprep.subr.bf16.mxu0 0
    %3460 = vmatpush1.bf16.msra.mxu0 %v397
    %3461 = vmatprep.subr.bf16.mxu0 0
    %3462 = vmatpush1.bf16.msra.mxu0 %v398
    %3463 = vmatprep.subr.bf16.mxu0 0
    %3464 = vmatpush1.bf16.msra.mxu0 %v399
    %3465 = vmatprep.subr.bf16.mxu0 0
    %3466 = vmatpush1.bf16.msra.mxu0 %v400
    %3467 = vmatprep.subr.bf16.mxu0 0
    %3468 = vmatpush1.bf16.msra.mxu0 %v401
    %3469 = vmatprep.subr.bf16.mxu0 0
    %3470 = vmatpush1.bf16.msra.mxu0 %v402
    %3471 = vmatprep.subr.bf16.mxu0 0
    %3472 = vmatpush1.bf16.msra.mxu0 %v403
    %3473 = vmatprep.subr.bf16.mxu0 0
    %3474 = vmatpush1.bf16.msra.mxu0 %v404
    %3475 = vmatprep.subr.bf16.mxu0 0
    %3476 = vmatpush1.bf16.msra.mxu0 %v405
    %3477 = vmatprep.subr.bf16.mxu0 0
    %3478 = vmatpush1.bf16.msra.mxu0 %v406
    %3479 = vmatprep.mubr.bf16.mxu0 %v3166
    %3480 = vmatmul.mubr.bf16.gmra.mrb[0].mxu0 %v3165
    %v3481 = vpop.f32.mrb[0].mxu0
    %v3482 = vadd.f32 %v3442, %v3481
    %v3483 = vpop.f32.mrb[0].mxu0
    %v3484 = vpop.f32.mrb[0].mxu0
    %v3485 = vpop.f32.mrb[0].mxu0
    %3486 = vdwg.mxu0
    %v3487 = vlaneseq
    %v3488 = vshrl.u32 %v3487, 7
    %v3489 = vsub.s32 6, %v3488
    %v3490 = vrot.slane %v2094, %v3489
    %3492 = vrot.lane.b32.xlu0 %v3490, 64
    %v3493 = vpop.permute.xlu0 %3492
    %v3495 = vmul.f32 %v3482, %v3493
    %v3496 = vlaneseq
    %v3497 = vshrl.u32 %v3496, 7
    %v3498 = vsub.s32 3, %v3497
    %v3499 = vrot.slane %v2094, %v3498
    %3501 = vrot.lane.b32.xlu0 %v3499, 64
    %v3502 = vpop.permute.xlu0 %3501
    %v3504 = vadd.f32 %v3495, %v3502
    %3506 = vrot.lane.b32.xlu0 %v3504, 64
    %v3507 = vpop.permute.xlu0 %3506
    %v3509 = vadd.f32 %v2606, %v3507
    %v3510 = vsel %vm580, %v3509, 0.0
    %3511 = vadd.xlane.f32.xlu0 %v3510
    %v3512 = vpop.xlane.xlu0 %3511
    %v3513 = vmul.f32 %v3512, %v1036
    %v3514 = vmul.f32 %v3509, %v3509
    %v3515 = vsel %vm580, %v3514, 0.0
    %3516 = vadd.xlane.f32.xlu0 %v3515
    %v3517 = vpop.xlane.xlu0 %3516
    %v3518 = vmul.f32 %v3517, %v1036
    %v3519 = vmul.f32 %v3513, %v3513
    %v3520 = vsub.f32 %v3518, %v3519
    %v3521 = vmax.f32 %v3520, 0.0
    %v3522 = vsub.f32 %v3509, %v3513
    %v3523 = vadd.f32 %v3521, 1e-05
    %v3524 = vrsqrt.pop %v3523
    %v3525 = vmul.f32 %v3522, %v3524
    %v3526 = vlaneseq
    %v3527 = vshrl.u32 %v3526, 7
    %v3528 = vsub.s32 4, %v3527
    %v3529 = vrot.slane %v2094, %v3528
    %v3530 = vmul.f32 %v3525, %v3529
    %v3531 = vlaneseq
    %v3532 = vshrl.u32 %v3531, 7
    %v3533 = vsub.s32 5, %v3532
    %v3534 = vrot.slane %v2094, %v3533
    %v3535 = vadd.f32 %v3530, %v3534
    %v3536 = vld [vmem:[%s10] sm:$0xf]
    %v3537 = vld [vmem:[%s10 + $0x4] sm:$0xf]
    %v3538 = vld [vmem:[%s10 + $0x8] sm:$0xf]
    %v3539 = vld [vmem:[%s10 + $0xc] sm:$0xf]
    %v3540 = vld [vmem:[%s10 + $0x10] sm:$0xf]
    %v3541 = vld [vmem:[%s10 + $0x14] sm:$0xf]
    %v3542 = vld [vmem:[%s10 + $0x18] sm:$0xf]
    %v3543 = vld [vmem:[%s10 + $0x1c] sm:$0xf]
    %v3544 = vpack.c.bf16 %v3535, %v3535
    %v3545 = vld [vmem:[#allocation15] sm:$0x1]
    %v3547 = vlaneseq
    %v3548 = vshrl.u32 %v3547, 7
    %v3549 = vsub.s32 0, %v3548
    %v3550 = vrot.slane %v3545, %v3549
    %v3560 = vunpack.c.l.b16 %v3536
    %v3561 = vunpack.c.l.b16 %v3537
    %v3562 = vunpack.c.l.b16 %v3538
    %v3563 = vunpack.c.l.b16 %v3539
    %v3564 = vunpack.c.l.b16 %v3540
    %v3565 = vunpack.c.l.b16 %v3541
    %v3566 = vunpack.c.l.b16 %v3542
    %v3567 = vunpack.c.l.b16 %v3543
    %v3568 = vpack.c.b16 %v3561, %v3560
    %v3569 = vpack.c.b16 %v3563, %v3562
    %v3570 = vpack.c.b16 %v3565, %v3564
    %v3571 = vpack.c.b16 %v3567, %v3566
    %v3577 = vsel %vm580, %v3544, 0
    %3579 = vmatprep.subr.bf16.mxu0 0
    %3580 = vmatpush1.bf16.msra.mxu0 %v3568
    %3581 = vmatprep.subr.bf16.mxu0 0
    %3582 = vmatpush1.bf16.msra.mxu0 %v3569
    %3583 = vmatprep.subr.bf16.mxu0 0
    %3584 = vmatpush1.bf16.msra.mxu0 %v3570
    %3585 = vmatprep.subr.bf16.mxu0 0
    %3586 = vmatpush1.bf16.msra.mxu0 %v3571
    %3587 = vmatprep.subr.bf16.mxu0 0
    %3588 = vmatpush1.bf16.msra.mxu0 0
    %3589 = vmatprep.subr.bf16.mxu0 0
    %3590 = vmatpush1.bf16.msra.mxu0 0
    %3591 = vmatprep.subr.bf16.mxu0 0
    %3592 = vmatpush1.bf16.msra.mxu0 0
    %3593 = vmatprep.subr.bf16.mxu0 0
    %3594 = vmatpush1.bf16.msra.mxu0 0
    %3595 = vmatprep.subr.bf16.mxu0 0
    %3596 = vmatpush1.bf16.msra.mxu0 0
    %3597 = vmatprep.subr.bf16.mxu0 0
    %3598 = vmatpush1.bf16.msra.mxu0 0
    %3599 = vmatprep.subr.bf16.mxu0 0
    %3600 = vmatpush1.bf16.msra.mxu0 0
    %3601 = vmatprep.subr.bf16.mxu0 0
    %3602 = vmatpush1.bf16.msra.mxu0 0
    %3603 = vmatprep.subr.bf16.mxu0 0
    %3604 = vmatpush1.bf16.msra.mxu0 0
    %3605 = vmatprep.subr.bf16.mxu0 0
    %3606 = vmatpush1.bf16.msra.mxu0 0
    %3607 = vmatprep.subr.bf16.mxu0 0
    %3608 = vmatpush1.bf16.msra.mxu0 0
    %3609 = vmatprep.subr.bf16.mxu0 0
    %3610 = vmatpush1.bf16.msra.mxu0 0
    %3611 = vmatprep.mubr.bf16.mxu0 0
    %3612 = vmatmul.mubr.bf16.gmra.mrb[0].mxu0 %v3577
    %v3613 = vpop.f32.mrb[0].mxu0
    %v3614 = vadd.f32 %v3550, %v3613
    %v3615 = vpop.f32.mrb[0].mxu0
    %v3616 = vpop.f32.mrb[0].mxu0
    %v3617 = vpop.f32.mrb[0].mxu0
    %3618 = vdwg.mxu0
    %3619 = vst [vmem:[%s12] sm:$0xff] %v3614
    // Predicated region
    $region86: #{forward.1} parent=1 // pred_check
      _
    $region87: #{forward.1} parent=1 // pred_check_branch
      %3621 = sbr.rel (0) target = $region89
    $region88: #{forward.1} parent=1 // pred_region
      _
    $region89: #{forward.1} parent=1 // pred_fallthru
      _
    // Predicated region
    $region90: #{forward.1} parent=1 // pred_check
      _
    $region91: #{forward.1} parent=1 // pred_check_branch
      %3623 = sbr.rel (0) target = $region93
    $region92: #{forward.1} parent=1 // pred_region
      _
    $region93: #{forward.1} parent=1 // pred_fallthru
      _
    %3624 = vsyncpa [#allocation3], 1
    %3625 = vsyncpa [#allocation5], 1
    %3626 = vsyncpa [#allocation8], 1
    %3627 = vsyncpa [#allocation11], 1
    %3628 = vsyncpa [#allocation14], 1

</llo_original>
